<compile_context>
chip_gen: v7x
topology: tpu7x:2x2x1
jax: 0.10.0
libtpu: 0.0.40
codegen_flags: <defaults>
</compile_context>

<pallas_src>
import jax
import jax.numpy as jnp
from jax.experimental import pallas as pl
from jax.experimental.pallas import tpu as pltpu


# ----------------------------------------------------------------------------
# Fused Pallas kernel (conv1+bn1+relu -> conv2+bn2+add+relu), one image / step
# ----------------------------------------------------------------------------
def _make_fused_kernel(H, W, Cin, Cout, row_chunk):
    def kernel(x_ref, w1_ref, w2_ref, b1_ref, b2_ref, o_ref, xp_ref, hp_ref):
        # x_ref : (1, H, W, Cin)        f32   one input image (NHWC)
        # w1_ref: (9*Cin, Cout)         cdt   conv1 weights, BN1 scale folded in
        # w2_ref: (9*Cout, Cout)        cdt   conv2 weights, BN2 scale folded in
        # b1_ref, b2_ref: (1, Cout)     f32   folded BN biases
        # o_ref : (1, H*W, Cout)        f32   output image (row-major pixels)
        # xp_ref: (H+2, W+2, Cin)       f32   padded input scratch (VMEM)
        # hp_ref: (H+2, W+2, Cout)      f32   padded intermediate scratch (VMEM)
        cdt = w1_ref.dtype  # matmul compute dtype (bf16 or f32)

        # Zero only the 1-wide halo ring of both padded scratches. Done every
        # grid step (NOT under pl.when(program_id==0)) so it remains correct
        # when the "parallel" batch axis is partitioned across TensorCores.
        def zero_halo(ref):
            Hp, Wp, Cc = ref.shape
            ref[0:1, :, :] = jnp.zeros((1, Wp, Cc), ref.dtype)
            ref[Hp - 1:Hp, :, :] = jnp.zeros((1, Wp, Cc), ref.dtype)
            ref[:, 0:1, :] = jnp.zeros((Hp, 1, Cc), ref.dtype)
            ref[:, Wp - 1:Wp, :] = jnp.zeros((Hp, 1, Cc), ref.dtype)

        zero_halo(xp_ref)
        zero_halo(hp_ref)

        x = x_ref[0]                                   # (H, W, Cin) f32
        xp_ref[1:H + 1, 1:W + 1, :] = x                # interior of padded input

        w1 = w1_ref[...]
        w2 = w2_ref[...]
        b1 = b1_ref[...]
        b2 = b2_ref[...]

        def im2col(src_ref, r0, rc, Cc):
            # conv-output rows [r0, r0+rc) need padded rows [r0, r0+rc+2)
            xs = src_ref[r0:r0 + rc + 2, :, :]         # (rc+2, W+2, Cc)
            taps = [xs[dh:dh + rc, dw:dw + W, :]       # each (rc, W, Cc)
                    for dh in range(3) for dw in range(3)]
            patch = jnp.concatenate(taps, axis=-1)     # (rc, W, 9*Cc)
            return patch.reshape(rc * W, 9 * Cc)

        # ---- conv1 + bn1 + relu : result stays in VMEM (never hits HBM) ----
        for r0 in range(0, H, row_chunk):
            rc = min(row_chunk, H - r0)
            patch = im2col(xp_ref, r0, rc, Cin).astype(cdt)
            acc = jnp.dot(patch, w1, preferred_element_type=jnp.float32)
            h = jnp.maximum(acc + b1, 0.0)             # (rc*W, Cout) f32
            hp_ref[1 + r0:1 + r0 + rc, 1:W + 1, :] = h.reshape(rc, W, Cout)

        # ---- conv2 + bn2 + residual + relu ----------------------------------
        for r0 in range(0, H, row_chunk):
            rc = min(row_chunk, H - r0)
            patch = im2col(hp_ref, r0, rc, Cout).astype(cdt)
            acc = jnp.dot(patch, w2, preferred_element_type=jnp.float32)
            res = x[r0:r0 + rc, :, :].reshape(rc * W, Cin)   # identity (f32)
            y = jnp.maximum(acc + b2 + res, 0.0)             # (rc*W, Cout)
            o_ref[:, r0 * W:(r0 + rc) * W, :] = (
                y.reshape(1, rc * W, Cout).astype(o_ref.dtype))

    return kernel


# ----------------------------------------------------------------------------
# Wrappers (BN folding, weight reshaping, pallas_call plumbing)
# ----------------------------------------------------------------------------
def _fold_bn(gamma, beta, mean, var, eps=1e-5):
    scale = gamma / jnp.sqrt(var + eps)
    bias = beta - mean * scale
    return scale, bias


def basic_block_forward_nhwc(x_nhwc, params, *, compute_dtype=jnp.bfloat16,
                             row_chunk=None, eps=1e-5):
    """Fused BasicBlock forward in NHWC. Returns (N, H, W, Cout) float32."""
    N, H, W, Cin = x_nhwc.shape
    Cout = params["w1"].shape[-1]
    assert params["w1"].shape == (3, 3, Cin, Cout)
    assert Cin == Cout, "downsample=None requires in_channel == out_channel"

    # Fold the BN scale into the conv weights (tiny, one-time, done by XLA).
    s1, b1 = _fold_bn(params["bn1_gamma"], params["bn1_beta"],
                      params["bn1_mean"], params["bn1_var"], eps)
    s2, b2 = _fold_bn(params["bn2_gamma"], params["bn2_beta"],
                      params["bn2_mean"], params["bn2_var"], eps)
    w1f = (params["w1"] * s1[None, None, None, :]).reshape(9 * Cin, Cout)
    w2f = (params["w2"] * s2[None, None, None, :]).reshape(9 * Cout, Cout)
    w1f = w1f.astype(compute_dtype)
    w2f = w2f.astype(compute_dtype)
    b1 = b1.reshape(1, Cout).astype(jnp.float32)
    b2 = b2.reshape(1, Cout).astype(jnp.float32)

    if row_chunk is None:
        # Keep each 9x-expanded im2col patch around <= 2 MiB of VMEM so the
        # fused kernel fits the scoped-VMEM budget at realistic ResNet shapes.
        bpe = jnp.dtype(compute_dtype).itemsize
        row_chunk = max(1, min(H, (2 * 1024 * 1024) // max(1, W * 9 * Cout * bpe)))
    row_chunk = int(row_chunk)

    kernel = _make_fused_kernel(H, W, Cin, Cout, row_chunk)

    out = pl.pallas_call(
        kernel,
        out_shape=jax.ShapeDtypeStruct((N, H * W, Cout), jnp.float32),
        grid_spec=pltpu.PrefetchScalarGridSpec(
            num_scalar_prefetch=0,
            grid=(N,),
            in_specs=[
                pl.BlockSpec((1, H, W, Cin), lambda n: (n, 0, 0, 0)),  # one image
                pl.BlockSpec((9 * Cin, Cout), lambda n: (0, 0)),       # resident weights
                pl.BlockSpec((9 * Cout, Cout), lambda n: (0, 0)),
                pl.BlockSpec((1, Cout), lambda n: (0, 0)),
                pl.BlockSpec((1, Cout), lambda n: (0, 0)),
            ],
            out_specs=pl.BlockSpec((1, H * W, Cout), lambda n: (n, 0, 0)),
            scratch_shapes=[
                pltpu.VMEM((H + 2, W + 2, Cin), jnp.float32),   # padded x
                pltpu.VMEM((H + 2, W + 2, Cout), jnp.float32),  # padded h (fused intermediate)
            ],
        ),
        compiler_params=pltpu.CompilerParams(
            dimension_semantics=("parallel",),        # megacore sharding on v7x
            vmem_limit_bytes=32 * 1024 * 1024,        # fits v7x 64 MiB physical VMEM
        ),
    )(x_nhwc.astype(jnp.float32), w1f, w2f, b1, b2)

    return out.reshape(N, H, W, Cout)


def basic_block_forward(x_nchw, params, *, compute_dtype=jnp.bfloat16,
                        row_chunk=None):
    """PyTorch-parity entry point: NCHW in / NCHW out (downsample=None, stride=1)."""
    x = jnp.transpose(x_nchw, (0, 2, 3, 1))            # NCHW -> NHWC
    y = basic_block_forward_nhwc(x, params, compute_dtype=compute_dtype,
                                 row_chunk=row_chunk)
    return jnp.transpose(y, (0, 3, 1, 2))               # NHWC -> NCHW


# ----------------------------------------------------------------------------
# Pure-JAX reference (for correctness check)
# ----------------------------------------------------------------------------
def _reference(x_nchw, params):
    def conv(x, w_hwio):
        return jax.lax.conv_general_dilated(
            x, w_hwio, window_strides=(1, 1), padding=((1, 1), (1, 1)),
            dimension_numbers=("NCHW", "HWIO", "NCHW"))

    def bn(x, g, b, m, v, eps=1e-5):
        scale = (g / jnp.sqrt(v + eps))[None, :, None, None]
        bias = (b - m * g / jnp.sqrt(v + eps))[None, :, None, None]
        return x * scale + bias

    h = jax.nn.relu(bn(conv(x_nchw, params["w1"]), params["bn1_gamma"],
                       params["bn1_beta"], params["bn1_mean"], params["bn1_var"]))
    y = bn(conv(h, params["w2"]), params["bn2_gamma"],
           params["bn2_beta"], params["bn2_mean"], params["bn2_var"]) + x_nchw
    return jax.nn.relu(y)


# ----------------------------------------------------------------------------
# Main
# ----------------------------------------------------------------------------
if __name__ == "__main__":
    key = jax.random.PRNGKey(0)
    N, C, H, W = 2, 4, 16, 16        # in_channel == out_channel (downsample=None)
    Cout = C

    k = jax.random.split(key, 10)
    x = jax.random.normal(k[0], (N, C, H, W), jnp.float32)

    # Conv weights in HWIO layout (3, 3, Cin, Cout); equivalent to PyTorch OIHW transposed.
    params = {
        "w1": jax.random.normal(k[1], (3, 3, C, Cout), jnp.float32) * 0.1,
        "w2": jax.random.normal(k[2], (3, 3, Cout, Cout), jnp.float32) * 0.1,
        # BatchNorm (inference / running-stats form)
        "bn1_gamma": 1.0 + 0.1 * jax.random.normal(k[3], (Cout,), jnp.float32),
        "bn1_beta": 0.1 * jax.random.normal(k[4], (Cout,), jnp.float32),
        "bn1_mean": 0.05 * jax.random.normal(k[5], (Cout,), jnp.float32),
        "bn1_var": jnp.abs(1.0 + 0.1 * jax.random.normal(k[6], (Cout,), jnp.float32)),
        "bn2_gamma": 1.0 + 0.1 * jax.random.normal(k[7], (Cout,), jnp.float32),
        "bn2_beta": 0.1 * jax.random.normal(k[8], (Cout,), jnp.float32),
        "bn2_mean": 0.05 * jax.random.normal(k[9], (Cout,), jnp.float32),
        "bn2_var": jnp.ones((Cout,), jnp.float32),
    }

    ref = jax.block_until_ready(_reference(x, params))

    # 1) Exact path: f32 matmul operands, row-chunked (exercises the chunk loop).
    out_f32 = jax.block_until_ready(
        basic_block_forward(x, params, compute_dtype=jnp.float32, row_chunk=8))
    assert out_f32.shape == (N, Cout, H, W), out_f32.shape
    assert jnp.allclose(out_f32, ref, atol=1e-4, rtol=1e-4), \
        float(jnp.max(jnp.abs(out_f32 - ref)))

    # 2) Fast path: bf16 matmul operands (f32 accumulation + f32 epilogue).
    out_bf16 = jax.block_until_ready(
        basic_block_forward(x, params, compute_dtype=jnp.bfloat16))
    assert out_bf16.shape == (N, Cout, H, W), out_bf16.shape
    assert jnp.allclose(out_bf16, ref, atol=5e-2, rtol=5e-2), \
        float(jnp.max(jnp.abs(out_bf16 - ref)))

    print("KERNEL_OK")
</pallas_src>

<mosaic_0001>
module attributes {stable_mosaic.version = 11 : i64} {
  func.func @kernel(%arg0: i32, %arg1: memref<1x16x16x4xf32, #tpu.memory_space<vmem>>, %arg2: memref<36x4xf32, #tpu.memory_space<vmem>>, %arg3: memref<36x4xf32, #tpu.memory_space<vmem>>, %arg4: memref<1x4xf32, #tpu.memory_space<vmem>>, %arg5: memref<1x4xf32, #tpu.memory_space<vmem>>, %arg6: memref<1x256x4xf32, #tpu.memory_space<vmem>>, %arg7: memref<18x18x4xf32, #tpu.memory_space<vmem>>, %arg8: memref<18x18x4xf32, #tpu.memory_space<vmem>>) attributes {dimension_semantics = [#tpu.dimension_semantics<parallel>], iteration_bounds = array<i64: 2>, scalar_prefetch = 0 : i64, scratch_operands = 2 : i64, tpu.core_type = #tpu.core_type<tc>, window_params = [{transform_indices = @transform_0, window_bounds = array<i64: 1, 16, 16, 4>}, {pipeline_mode = #tpu.pipeline_mode<synchronous>, transform_indices = @transform_1, window_bounds = array<i64: 36, 4>}, {pipeline_mode = #tpu.pipeline_mode<synchronous>, transform_indices = @transform_2, window_bounds = array<i64: 36, 4>}, {pipeline_mode = #tpu.pipeline_mode<synchronous>, transform_indices = @transform_3, window_bounds = array<i64: 1, 4>}, {pipeline_mode = #tpu.pipeline_mode<synchronous>, transform_indices = @transform_4, window_bounds = array<i64: 1, 4>}, {transform_indices = @transform_5, window_bounds = array<i64: 1, 256, 4>}]} {
    %cst = arith.constant 0.000000e+00 : f32
    %0 = vector.broadcast %cst : f32 to vector<1x18x4xf32>
    %c0 = arith.constant 0 : index
    %c0_0 = arith.constant 0 : index
    %c0_1 = arith.constant 0 : index
    %1 = vector.load %arg7[%c0, %c0_0, %c0_1] : memref<18x18x4xf32, #tpu.memory_space<vmem>>, vector<1x18x4xf32>
    tpu.vector_store %arg7[%c0, %c0_0, %c0_1], %0 {strides = array<i32>} : memref<18x18x4xf32, #tpu.memory_space<vmem>>, vector<1x18x4xf32>,
    %cst_2 = arith.constant 0.000000e+00 : f32
    %2 = vector.broadcast %cst_2 : f32 to vector<1x18x4xf32>
    %c17 = arith.constant 17 : index
    %c0_3 = arith.constant 0 : index
    %c0_4 = arith.constant 0 : index
    %3 = vector.load %arg7[%c17, %c0_3, %c0_4] : memref<18x18x4xf32, #tpu.memory_space<vmem>>, vector<1x18x4xf32>
    tpu.vector_store %arg7[%c17, %c0_3, %c0_4], %2 {strides = array<i32>} : memref<18x18x4xf32, #tpu.memory_space<vmem>>, vector<1x18x4xf32>,
    %cst_5 = arith.constant 0.000000e+00 : f32
    %4 = vector.broadcast %cst_5 : f32 to vector<18x1x4xf32>
    %c0_6 = arith.constant 0 : index
    %c0_7 = arith.constant 0 : index
    %c0_8 = arith.constant 0 : index
    %5 = vector.load %arg7[%c0_6, %c0_7, %c0_8] : memref<18x18x4xf32, #tpu.memory_space<vmem>>, vector<18x1x4xf32>
    tpu.vector_store %arg7[%c0_6, %c0_7, %c0_8], %4 {strides = array<i32>} : memref<18x18x4xf32, #tpu.memory_space<vmem>>, vector<18x1x4xf32>,
    %cst_9 = arith.constant 0.000000e+00 : f32
    %6 = vector.broadcast %cst_9 : f32 to vector<18x1x4xf32>
    %c0_10 = arith.constant 0 : index
    %c17_11 = arith.constant 17 : index
    %c0_12 = arith.constant 0 : index
    %7 = vector.load %arg7[%c0_10, %c17_11, %c0_12] : memref<18x18x4xf32, #tpu.memory_space<vmem>>, vector<18x1x4xf32>
    tpu.vector_store %arg7[%c0_10, %c17_11, %c0_12], %6 {strides = array<i32>} : memref<18x18x4xf32, #tpu.memory_space<vmem>>, vector<18x1x4xf32>,
    %cst_13 = arith.constant 0.000000e+00 : f32
    %8 = vector.broadcast %cst_13 : f32 to vector<1x18x4xf32>
    %c0_14 = arith.constant 0 : index
    %c0_15 = arith.constant 0 : index
    %c0_16 = arith.constant 0 : index
    %9 = vector.load %arg8[%c0_14, %c0_15, %c0_16] : memref<18x18x4xf32, #tpu.memory_space<vmem>>, vector<1x18x4xf32>
    tpu.vector_store %arg8[%c0_14, %c0_15, %c0_16], %8 {strides = array<i32>} : memref<18x18x4xf32, #tpu.memory_space<vmem>>, vector<1x18x4xf32>,
    %cst_17 = arith.constant 0.000000e+00 : f32
    %10 = vector.broadcast %cst_17 : f32 to vector<1x18x4xf32>
    %c17_18 = arith.constant 17 : index
    %c0_19 = arith.constant 0 : index
    %c0_20 = arith.constant 0 : index
    %11 = vector.load %arg8[%c17_18, %c0_19, %c0_20] : memref<18x18x4xf32, #tpu.memory_space<vmem>>, vector<1x18x4xf32>
    tpu.vector_store %arg8[%c17_18, %c0_19, %c0_20], %10 {strides = array<i32>} : memref<18x18x4xf32, #tpu.memory_space<vmem>>, vector<1x18x4xf32>,
    %cst_21 = arith.constant 0.000000e+00 : f32
    %12 = vector.broadcast %cst_21 : f32 to vector<18x1x4xf32>
    %c0_22 = arith.constant 0 : index
    %c0_23 = arith.constant 0 : index
    %c0_24 = arith.constant 0 : index
    %13 = vector.load %arg8[%c0_22, %c0_23, %c0_24] : memref<18x18x4xf32, #tpu.memory_space<vmem>>, vector<18x1x4xf32>
    tpu.vector_store %arg8[%c0_22, %c0_23, %c0_24], %12 {strides = array<i32>} : memref<18x18x4xf32, #tpu.memory_space<vmem>>, vector<18x1x4xf32>,
    %cst_25 = arith.constant 0.000000e+00 : f32
    %14 = vector.broadcast %cst_25 : f32 to vector<18x1x4xf32>
    %c0_26 = arith.constant 0 : index
    %c17_27 = arith.constant 17 : index
    %c0_28 = arith.constant 0 : index
    %15 = vector.load %arg8[%c0_26, %c17_27, %c0_28] : memref<18x18x4xf32, #tpu.memory_space<vmem>>, vector<18x1x4xf32>
    tpu.vector_store %arg8[%c0_26, %c17_27, %c0_28], %14 {strides = array<i32>} : memref<18x18x4xf32, #tpu.memory_space<vmem>>, vector<18x1x4xf32>,
    %c0_29 = arith.constant 0 : index
    %c0_30 = arith.constant 0 : index
    %c0_31 = arith.constant 0 : index
    %c0_32 = arith.constant 0 : index
    %16 = vector.load %arg1[%c0_29, %c0_30, %c0_31, %c0_32] : memref<1x16x16x4xf32, #tpu.memory_space<vmem>>, vector<1x16x16x4xf32>
    %17 = vector.shape_cast %16 : vector<1x16x16x4xf32> to vector<16x16x4xf32>
    %c1 = arith.constant 1 : index
    %c1_33 = arith.constant 1 : index
    %c0_34 = arith.constant 0 : index
    %18 = vector.load %arg7[%c1, %c1_33, %c0_34] : memref<18x18x4xf32, #tpu.memory_space<vmem>>, vector<16x16x4xf32>
    tpu.vector_store %arg7[%c1, %c1_33, %c0_34], %17 {strides = array<i32>} : memref<18x18x4xf32, #tpu.memory_space<vmem>>, vector<16x16x4xf32>,
    %c0_35 = arith.constant 0 : index
    %c0_36 = arith.constant 0 : index
    %19 = vector.load %arg2[%c0_35, %c0_36] : memref<36x4xf32, #tpu.memory_space<vmem>>, vector<36x4xf32>
    %c0_37 = arith.constant 0 : index
    %c0_38 = arith.constant 0 : index
    %20 = vector.load %arg3[%c0_37, %c0_38] : memref<36x4xf32, #tpu.memory_space<vmem>>, vector<36x4xf32>
    %c0_39 = arith.constant 0 : index
    %c0_40 = arith.constant 0 : index
    %21 = vector.load %arg4[%c0_39, %c0_40] : memref<1x4xf32, #tpu.memory_space<vmem>>, vector<1x4xf32>
    %c0_41 = arith.constant 0 : index
    %c0_42 = arith.constant 0 : index
    %22 = vector.load %arg5[%c0_41, %c0_42] : memref<1x4xf32, #tpu.memory_space<vmem>>, vector<1x4xf32>
    %c0_43 = arith.constant 0 : index
    %c0_44 = arith.constant 0 : index
    %c0_45 = arith.constant 0 : index
    %23 = vector.load %arg7[%c0_43, %c0_44, %c0_45] : memref<18x18x4xf32, #tpu.memory_space<vmem>>, vector<10x18x4xf32>
    %24 = vector.extract_strided_slice %23 {offsets = [0, 0, 0], sizes = [8, 16, 4], strides = [1, 1, 1]} : vector<10x18x4xf32> to vector<8x16x4xf32>
    %25 = vector.extract_strided_slice %23 {offsets = [0, 1, 0], sizes = [8, 16, 4], strides = [1, 1, 1]} : vector<10x18x4xf32> to vector<8x16x4xf32>
    %26 = vector.extract_strided_slice %23 {offsets = [0, 2, 0], sizes = [8, 16, 4], strides = [1, 1, 1]} : vector<10x18x4xf32> to vector<8x16x4xf32>
    %27 = vector.extract_strided_slice %23 {offsets = [1, 0, 0], sizes = [8, 16, 4], strides = [1, 1, 1]} : vector<10x18x4xf32> to vector<8x16x4xf32>
    %28 = vector.extract_strided_slice %23 {offsets = [1, 1, 0], sizes = [8, 16, 4], strides = [1, 1, 1]} : vector<10x18x4xf32> to vector<8x16x4xf32>
    %29 = vector.extract_strided_slice %23 {offsets = [1, 2, 0], sizes = [8, 16, 4], strides = [1, 1, 1]} : vector<10x18x4xf32> to vector<8x16x4xf32>
    %30 = vector.extract_strided_slice %23 {offsets = [2, 0, 0], sizes = [8, 16, 4], strides = [1, 1, 1]} : vector<10x18x4xf32> to vector<8x16x4xf32>
    %31 = vector.extract_strided_slice %23 {offsets = [2, 1, 0], sizes = [8, 16, 4], strides = [1, 1, 1]} : vector<10x18x4xf32> to vector<8x16x4xf32>
    %32 = vector.extract_strided_slice %23 {offsets = [2, 2, 0], sizes = [8, 16, 4], strides = [1, 1, 1]} : vector<10x18x4xf32> to vector<8x16x4xf32>
    %33 = tpu.concatenate %24, %25, %26, %27, %28, %29, %30, %31, %32 in 2 : vector<8x16x4xf32>, vector<8x16x4xf32>, vector<8x16x4xf32>, vector<8x16x4xf32>, vector<8x16x4xf32>, vector<8x16x4xf32>, vector<8x16x4xf32>, vector<8x16x4xf32>, vector<8x16x4xf32> -> vector<8x16x36xf32>
    %34 = vector.shape_cast %33 : vector<8x16x36xf32> to vector<128x36xf32>
    %cst_46 = arith.constant dense<0.000000e+00> : vector<128x4xf32>
    %35 = tpu.matmul %34, %19, %cst_46 {dimension_numbers = #tpu.dot_dimension_numbers<[1], [0], [0], [1], [0, 0, 1, 1], [], []>} : vector<128x36xf32>, vector<36x4xf32>, vector<128x4xf32> -> vector<128x4xf32>
    %36 = vector.broadcast %21 : vector<1x4xf32> to vector<128x4xf32>
    %37 = arith.addf %35, %36 : vector<128x4xf32>
    %cst_47 = arith.constant 0.000000e+00 : f32
    %38 = vector.broadcast %cst_47 : f32 to vector<128x4xf32>
    %39 = arith.maximumf %37, %38 : vector<128x4xf32>
    %40 = vector.shape_cast %39 : vector<128x4xf32> to vector<8x16x4xf32>
    %c1_48 = arith.constant 1 : index
    %c1_49 = arith.constant 1 : index
    %c0_50 = arith.constant 0 : index
    %41 = vector.load %arg8[%c1_48, %c1_49, %c0_50] : memref<18x18x4xf32, #tpu.memory_space<vmem>>, vector<8x16x4xf32>
    tpu.vector_store %arg8[%c1_48, %c1_49, %c0_50], %40 {strides = array<i32>} : memref<18x18x4xf32, #tpu.memory_space<vmem>>, vector<8x16x4xf32>,
    %c8 = arith.constant 8 : index
    %c0_51 = arith.constant 0 : index
    %c0_52 = arith.constant 0 : index
    %42 = vector.load %arg7[%c8, %c0_51, %c0_52] : memref<18x18x4xf32, #tpu.memory_space<vmem>>, vector<10x18x4xf32>
    %43 = vector.extract_strided_slice %42 {offsets = [0, 0, 0], sizes = [8, 16, 4], strides = [1, 1, 1]} : vector<10x18x4xf32> to vector<8x16x4xf32>
    %44 = vector.extract_strided_slice %42 {offsets = [0, 1, 0], sizes = [8, 16, 4], strides = [1, 1, 1]} : vector<10x18x4xf32> to vector<8x16x4xf32>
    %45 = vector.extract_strided_slice %42 {offsets = [0, 2, 0], sizes = [8, 16, 4], strides = [1, 1, 1]} : vector<10x18x4xf32> to vector<8x16x4xf32>
    %46 = vector.extract_strided_slice %42 {offsets = [1, 0, 0], sizes = [8, 16, 4], strides = [1, 1, 1]} : vector<10x18x4xf32> to vector<8x16x4xf32>
    %47 = vector.extract_strided_slice %42 {offsets = [1, 1, 0], sizes = [8, 16, 4], strides = [1, 1, 1]} : vector<10x18x4xf32> to vector<8x16x4xf32>
    %48 = vector.extract_strided_slice %42 {offsets = [1, 2, 0], sizes = [8, 16, 4], strides = [1, 1, 1]} : vector<10x18x4xf32> to vector<8x16x4xf32>
    %49 = vector.extract_strided_slice %42 {offsets = [2, 0, 0], sizes = [8, 16, 4], strides = [1, 1, 1]} : vector<10x18x4xf32> to vector<8x16x4xf32>
    %50 = vector.extract_strided_slice %42 {offsets = [2, 1, 0], sizes = [8, 16, 4], strides = [1, 1, 1]} : vector<10x18x4xf32> to vector<8x16x4xf32>
    %51 = vector.extract_strided_slice %42 {offsets = [2, 2, 0], sizes = [8, 16, 4], strides = [1, 1, 1]} : vector<10x18x4xf32> to vector<8x16x4xf32>
    %52 = tpu.concatenate %43, %44, %45, %46, %47, %48, %49, %50, %51 in 2 : vector<8x16x4xf32>, vector<8x16x4xf32>, vector<8x16x4xf32>, vector<8x16x4xf32>, vector<8x16x4xf32>, vector<8x16x4xf32>, vector<8x16x4xf32>, vector<8x16x4xf32>, vector<8x16x4xf32> -> vector<8x16x36xf32>
    %53 = vector.shape_cast %52 : vector<8x16x36xf32> to vector<128x36xf32>
    %cst_53 = arith.constant dense<0.000000e+00> : vector<128x4xf32>
    %54 = tpu.matmul %53, %19, %cst_53 {dimension_numbers = #tpu.dot_dimension_numbers<[1], [0], [0], [1], [0, 0, 1, 1], [], []>} : vector<128x36xf32>, vector<36x4xf32>, vector<128x4xf32> -> vector<128x4xf32>
    %55 = vector.broadcast %21 : vector<1x4xf32> to vector<128x4xf32>
    %56 = arith.addf %54, %55 : vector<128x4xf32>
    %cst_54 = arith.constant 0.000000e+00 : f32
    %57 = vector.broadcast %cst_54 : f32 to vector<128x4xf32>
    %58 = arith.maximumf %56, %57 : vector<128x4xf32>
    %59 = vector.shape_cast %58 : vector<128x4xf32> to vector<8x16x4xf32>
    %c9 = arith.constant 9 : index
    %c1_55 = arith.constant 1 : index
    %c0_56 = arith.constant 0 : index
    %60 = vector.load %arg8[%c9, %c1_55, %c0_56] : memref<18x18x4xf32, #tpu.memory_space<vmem>>, vector<8x16x4xf32>
    tpu.vector_store %arg8[%c9, %c1_55, %c0_56], %59 {strides = array<i32>} : memref<18x18x4xf32, #tpu.memory_space<vmem>>, vector<8x16x4xf32>,
    %c0_57 = arith.constant 0 : index
    %c0_58 = arith.constant 0 : index
    %c0_59 = arith.constant 0 : index
    %61 = vector.load %arg8[%c0_57, %c0_58, %c0_59] : memref<18x18x4xf32, #tpu.memory_space<vmem>>, vector<10x18x4xf32>
    %62 = vector.extract_strided_slice %61 {offsets = [0, 0, 0], sizes = [8, 16, 4], strides = [1, 1, 1]} : vector<10x18x4xf32> to vector<8x16x4xf32>
    %63 = vector.extract_strided_slice %61 {offsets = [0, 1, 0], sizes = [8, 16, 4], strides = [1, 1, 1]} : vector<10x18x4xf32> to vector<8x16x4xf32>
    %64 = vector.extract_strided_slice %61 {offsets = [0, 2, 0], sizes = [8, 16, 4], strides = [1, 1, 1]} : vector<10x18x4xf32> to vector<8x16x4xf32>
    %65 = vector.extract_strided_slice %61 {offsets = [1, 0, 0], sizes = [8, 16, 4], strides = [1, 1, 1]} : vector<10x18x4xf32> to vector<8x16x4xf32>
    %66 = vector.extract_strided_slice %61 {offsets = [1, 1, 0], sizes = [8, 16, 4], strides = [1, 1, 1]} : vector<10x18x4xf32> to vector<8x16x4xf32>
    %67 = vector.extract_strided_slice %61 {offsets = [1, 2, 0], sizes = [8, 16, 4], strides = [1, 1, 1]} : vector<10x18x4xf32> to vector<8x16x4xf32>
    %68 = vector.extract_strided_slice %61 {offsets = [2, 0, 0], sizes = [8, 16, 4], strides = [1, 1, 1]} : vector<10x18x4xf32> to vector<8x16x4xf32>
    %69 = vector.extract_strided_slice %61 {offsets = [2, 1, 0], sizes = [8, 16, 4], strides = [1, 1, 1]} : vector<10x18x4xf32> to vector<8x16x4xf32>
    %70 = vector.extract_strided_slice %61 {offsets = [2, 2, 0], sizes = [8, 16, 4], strides = [1, 1, 1]} : vector<10x18x4xf32> to vector<8x16x4xf32>
    %71 = tpu.concatenate %62, %63, %64, %65, %66, %67, %68, %69, %70 in 2 : vector<8x16x4xf32>, vector<8x16x4xf32>, vector<8x16x4xf32>, vector<8x16x4xf32>, vector<8x16x4xf32>, vector<8x16x4xf32>, vector<8x16x4xf32>, vector<8x16x4xf32>, vector<8x16x4xf32> -> vector<8x16x36xf32>
    %72 = vector.shape_cast %71 : vector<8x16x36xf32> to vector<128x36xf32>
    %cst_60 = arith.constant dense<0.000000e+00> : vector<128x4xf32>
    %73 = tpu.matmul %72, %20, %cst_60 {dimension_numbers = #tpu.dot_dimension_numbers<[1], [0], [0], [1], [0, 0, 1, 1], [], []>} : vector<128x36xf32>, vector<36x4xf32>, vector<128x4xf32> -> vector<128x4xf32>
    %74 = vector.extract_strided_slice %17 {offsets = [0, 0, 0], sizes = [8, 16, 4], strides = [1, 1, 1]} : vector<16x16x4xf32> to vector<8x16x4xf32>
    %75 = vector.shape_cast %74 : vector<8x16x4xf32> to vector<128x4xf32>
    %76 = vector.broadcast %22 : vector<1x4xf32> to vector<128x4xf32>
    %77 = arith.addf %73, %76 : vector<128x4xf32>
    %78 = arith.addf %77, %75 : vector<128x4xf32>
    %cst_61 = arith.constant 0.000000e+00 : f32
    %79 = vector.broadcast %cst_61 : f32 to vector<128x4xf32>
    %80 = arith.maximumf %78, %79 : vector<128x4xf32>
    %81 = vector.shape_cast %80 : vector<128x4xf32> to vector<1x128x4xf32>
    %c0_62 = arith.constant 0 : index
    %c0_63 = arith.constant 0 : index
    %c0_64 = arith.constant 0 : index
    %82 = vector.load %arg6[%c0_62, %c0_63, %c0_64] : memref<1x256x4xf32, #tpu.memory_space<vmem>>, vector<1x128x4xf32>
    tpu.vector_store %arg6[%c0_62, %c0_63, %c0_64], %81 {strides = array<i32>} : memref<1x256x4xf32, #tpu.memory_space<vmem>>, vector<1x128x4xf32>,
    %c8_65 = arith.constant 8 : index
    %c0_66 = arith.constant 0 : index
    %c0_67 = arith.constant 0 : index
    %83 = vector.load %arg8[%c8_65, %c0_66, %c0_67] : memref<18x18x4xf32, #tpu.memory_space<vmem>>, vector<10x18x4xf32>
    %84 = vector.extract_strided_slice %83 {offsets = [0, 0, 0], sizes = [8, 16, 4], strides = [1, 1, 1]} : vector<10x18x4xf32> to vector<8x16x4xf32>
    %85 = vector.extract_strided_slice %83 {offsets = [0, 1, 0], sizes = [8, 16, 4], strides = [1, 1, 1]} : vector<10x18x4xf32> to vector<8x16x4xf32>
    %86 = vector.extract_strided_slice %83 {offsets = [0, 2, 0], sizes = [8, 16, 4], strides = [1, 1, 1]} : vector<10x18x4xf32> to vector<8x16x4xf32>
    %87 = vector.extract_strided_slice %83 {offsets = [1, 0, 0], sizes = [8, 16, 4], strides = [1, 1, 1]} : vector<10x18x4xf32> to vector<8x16x4xf32>
    %88 = vector.extract_strided_slice %83 {offsets = [1, 1, 0], sizes = [8, 16, 4], strides = [1, 1, 1]} : vector<10x18x4xf32> to vector<8x16x4xf32>
    %89 = vector.extract_strided_slice %83 {offsets = [1, 2, 0], sizes = [8, 16, 4], strides = [1, 1, 1]} : vector<10x18x4xf32> to vector<8x16x4xf32>
    %90 = vector.extract_strided_slice %83 {offsets = [2, 0, 0], sizes = [8, 16, 4], strides = [1, 1, 1]} : vector<10x18x4xf32> to vector<8x16x4xf32>
    %91 = vector.extract_strided_slice %83 {offsets = [2, 1, 0], sizes = [8, 16, 4], strides = [1, 1, 1]} : vector<10x18x4xf32> to vector<8x16x4xf32>
    %92 = vector.extract_strided_slice %83 {offsets = [2, 2, 0], sizes = [8, 16, 4], strides = [1, 1, 1]} : vector<10x18x4xf32> to vector<8x16x4xf32>
    %93 = tpu.concatenate %84, %85, %86, %87, %88, %89, %90, %91, %92 in 2 : vector<8x16x4xf32>, vector<8x16x4xf32>, vector<8x16x4xf32>, vector<8x16x4xf32>, vector<8x16x4xf32>, vector<8x16x4xf32>, vector<8x16x4xf32>, vector<8x16x4xf32>, vector<8x16x4xf32> -> vector<8x16x36xf32>
    %94 = vector.shape_cast %93 : vector<8x16x36xf32> to vector<128x36xf32>
    %cst_68 = arith.constant dense<0.000000e+00> : vector<128x4xf32>
    %95 = tpu.matmul %94, %20, %cst_68 {dimension_numbers = #tpu.dot_dimension_numbers<[1], [0], [0], [1], [0, 0, 1, 1], [], []>} : vector<128x36xf32>, vector<36x4xf32>, vector<128x4xf32> -> vector<128x4xf32>
    %96 = vector.extract_strided_slice %17 {offsets = [8, 0, 0], sizes = [8, 16, 4], strides = [1, 1, 1]} : vector<16x16x4xf32> to vector<8x16x4xf32>
    %97 = vector.shape_cast %96 : vector<8x16x4xf32> to vector<128x4xf32>
    %98 = vector.broadcast %22 : vector<1x4xf32> to vector<128x4xf32>
    %99 = arith.addf %95, %98 : vector<128x4xf32>
    %100 = arith.addf %99, %97 : vector<128x4xf32>
    %cst_69 = arith.constant 0.000000e+00 : f32
    %101 = vector.broadcast %cst_69 : f32 to vector<128x4xf32>
    %102 = arith.maximumf %100, %101 : vector<128x4xf32>
    %103 = vector.shape_cast %102 : vector<128x4xf32> to vector<1x128x4xf32>
    %c0_70 = arith.constant 0 : index
    %c128 = arith.constant 128 : index
    %c0_71 = arith.constant 0 : index
    %104 = vector.load %arg6[%c0_70, %c128, %c0_71] : memref<1x256x4xf32, #tpu.memory_space<vmem>>, vector<1x128x4xf32>
    tpu.vector_store %arg6[%c0_70, %c128, %c0_71], %103 {strides = array<i32>} : memref<1x256x4xf32, #tpu.memory_space<vmem>>, vector<1x128x4xf32>,
    return
  }
  func.func @transform_0(%arg0: i32) -> (i32, i32, i32, i32) {
    %c0_i32 = arith.constant 0 : i32
    %c0_i32_0 = arith.constant 0 : i32
    %c0_i32_1 = arith.constant 0 : i32
    %c0_i32_2 = arith.constant 0 : i32
    return %arg0, %c0_i32, %c0_i32_0, %c0_i32_1 : i32, i32, i32, i32
  }
  func.func @transform_1(%arg0: i32) -> (i32, i32) {
    %c0_i32 = arith.constant 0 : i32
    %c0_i32_0 = arith.constant 0 : i32
    %c0_i32_1 = arith.constant 0 : i32
    return %c0_i32, %c0_i32_0 : i32, i32
  }
  func.func @transform_2(%arg0: i32) -> (i32, i32) {
    %c0_i32 = arith.constant 0 : i32
    %c0_i32_0 = arith.constant 0 : i32
    %c0_i32_1 = arith.constant 0 : i32
    return %c0_i32, %c0_i32_0 : i32, i32
  }
  func.func @transform_3(%arg0: i32) -> (i32, i32) {
    %c0_i32 = arith.constant 0 : i32
    %c0_i32_0 = arith.constant 0 : i32
    %c0_i32_1 = arith.constant 0 : i32
    return %c0_i32, %c0_i32_0 : i32, i32
  }
  func.func @transform_4(%arg0: i32) -> (i32, i32) {
    %c0_i32 = arith.constant 0 : i32
    %c0_i32_0 = arith.constant 0 : i32
    %c0_i32_1 = arith.constant 0 : i32
    return %c0_i32, %c0_i32_0 : i32, i32
  }
  func.func @transform_5(%arg0: i32) -> (i32, i32, i32) {
    %c0_i32 = arith.constant 0 : i32
    %c0_i32_0 = arith.constant 0 : i32
    %c0_i32_1 = arith.constant 0 : i32
    return %arg0, %c0_i32, %c0_i32_0 : i32, i32, i32
  }
}

</mosaic_0001>

<llo_original>
// kernel: tpu_custom_call.1
$region0: #{tpu_custom_call.1}
  #allocation0 [shape = 'u32[]', space=smem, size = 0x4, offset = 0x4, fixed_abs, tag = 'smem constant byte address 0x4 - core index']
  #allocation1 [shape = 'u32[144,128]{1,0:T(1,128)}', space=vmem, size = 0x12000, scoped, tag = 'internal scratch']
  #allocation2 [shape = 'f32[18,18,4]{2,1,0:T(8,128)}', space=vmem, size = 0x36000, scoped, tag = 'scratch operand']
  #allocation3 [shape = 'f32[18,18,4]{2,1,0:T(8,128)}', space=vmem, size = 0x36000, scoped, tag = 'scratch operand']
  %s0 = inlined_call_operand.vmem [shape: f32[2,16,16,4], index: 0, kind: input, shape index: {}]
  %s1 = inlined_call_operand.vmem [shape: f32[36,4], index: 1, kind: input, shape index: {}]
  %s2 = inlined_call_operand.vmem [shape: f32[36,4], index: 2, kind: input, shape index: {}]
  %s3 = inlined_call_operand.vmem [shape: f32[1,4], index: 3, kind: input, shape index: {}]
  %s4 = inlined_call_operand.vmem [shape: f32[1,4], index: 4, kind: input, shape index: {}]
  %s5 = inlined_call_operand.vmem [shape: f32[2,256,4], index: 5, kind: output, shape index: {}]
  %s6 = sld [smem:[#allocation0]]
  $region53: #{tpu_custom_call.1} parent=0
    _
  %s8 = ssub.s32 1, %s6
  %s9 = scalar_select 0, %s8, %s6
  loop: start=0, step=1, limit=4
  $region2: #{tpu_custom_call.1} parent=0 // loop_pre_header
    _
  $region3: #{tpu_custom_call.1} parent=0 // loop_header
    %s11 = sphi 0, %s15
    %p12 = scmp.ge.s32.totalorder %s11, 4
    %s21 = sphi 0, %s23
    %s24 = sphi 0, %s21
    %s25 = sphi 0, %s24
    %s41 = sphi 0, %s25
    %s45 = sphi 0, %s45
    %s47 = sphi 0, %s45
    %s48 = sphi 0, %s47
    %s62 = sphi 0, %s48
    %s66 = sphi 0, %s66
    %s68 = sphi 0, %s66
    %s69 = sphi 0, %s68
    %s83 = sphi 0, %s69
    %s87 = sphi 0, %s87
    %s89 = sphi 0, %s87
    %s90 = sphi 0, %s89
    %s104 = sphi 0, %s90
    %s108 = sphi 0, %s108
    %s110 = sphi 0, %s108
    %s111 = sphi 0, %s110
    %s125 = sphi 0, %s111
    %s131 = sphi 0, %s133
    %s134 = sphi 0, %s131
    %s135 = sphi 0, %s134
    %s151 = sphi 0, %s135
  $region4: #{tpu_custom_call.1} parent=0 // loop_header_branch
    %14 = sbr.rel (%p12) target = $region8
  $region5: #{tpu_custom_call.1} parent=0 // loop_body
    %s16 = ssub.s32 %s11, 1
    %s17 = ssub.s32 %s11, 2
    %s18 = sadd.s32 %s11, 1
    %s19 = ssub.s32 %s11, %s18
    %p20 = scmp.eq.s32.totalorder %s19, 0
    %s22 = sadd.s32 %s21, 1
    %s23 = scalar_select %p20, %s21, %s22
    %p26 = pneg %p20
    %p27 = scmp.eq.s32.totalorder %s11, 1
    %p28 = por %p26, %p27
    %p29 = scmp.ne.s32.totalorder %s21, %s24
    %p30 = scmp.eq.s32.totalorder %s11, 0
    %p31 = por %p29, %p30
    %p32 = scmp.ne.s32.totalorder %s21, %s24
    %p33 = scmp.eq.s32.totalorder %s16, 1
    %p34 = por %p32, %p33
    %p35 = scmp.ne.s32.totalorder %s24, %s25
    %p36 = scmp.eq.s32.totalorder %s16, 0
    %p37 = por %p35, %p36
    %p38 = scmp.ne.s32.totalorder %s24, %s25
    %p39 = scmp.eq.s32.totalorder %s17, 1
    %p40 = por %p38, %p39
    %p42 = scmp.ne.s32.totalorder %s25, %s41
    %p43 = scmp.eq.s32.totalorder %s17, 0
    %p44 = por %p42, %p43
    %s46 = sadd.s32 %s45, 1
    %p49 = scmp.eq.s32.totalorder %s11, 1
    %p50 = scmp.ne.s32.totalorder %s45, %s47
    %p51 = scmp.eq.s32.totalorder %s11, 0
    %p52 = por %p50, %p51
    %p53 = scmp.ne.s32.totalorder %s45, %s47
    %p54 = scmp.eq.s32.totalorder %s16, 1
    %p55 = por %p53, %p54
    %p56 = scmp.ne.s32.totalorder %s47, %s48
    %p57 = scmp.eq.s32.totalorder %s16, 0
    %p58 = por %p56, %p57
    %p59 = scmp.ne.s32.totalorder %s47, %s48
    %p60 = scmp.eq.s32.totalorder %s17, 1
    %p61 = por %p59, %p60
    %p63 = scmp.ne.s32.totalorder %s48, %s62
    %p64 = scmp.eq.s32.totalorder %s17, 0
    %p65 = por %p63, %p64
    %s67 = sadd.s32 %s66, 1
    %p70 = scmp.eq.s32.totalorder %s11, 1
    %p71 = scmp.ne.s32.totalorder %s66, %s68
    %p72 = scmp.eq.s32.totalorder %s11, 0
    %p73 = por %p71, %p72
    %p74 = scmp.ne.s32.totalorder %s66, %s68
    %p75 = scmp.eq.s32.totalorder %s16, 1
    %p76 = por %p74, %p75
    %p77 = scmp.ne.s32.totalorder %s68, %s69
    %p78 = scmp.eq.s32.totalorder %s16, 0
    %p79 = por %p77, %p78
    %p80 = scmp.ne.s32.totalorder %s68, %s69
    %p81 = scmp.eq.s32.totalorder %s17, 1
    %p82 = por %p80, %p81
    %p84 = scmp.ne.s32.totalorder %s69, %s83
    %p85 = scmp.eq.s32.totalorder %s17, 0
    %p86 = por %p84, %p85
    %s88 = sadd.s32 %s87, 1
    %p91 = scmp.eq.s32.totalorder %s11, 1
    %p92 = scmp.ne.s32.totalorder %s87, %s89
    %p93 = scmp.eq.s32.totalorder %s11, 0
    %p94 = por %p92, %p93
    %p95 = scmp.ne.s32.totalorder %s87, %s89
    %p96 = scmp.eq.s32.totalorder %s16, 1
    %p97 = por %p95, %p96
    %p98 = scmp.ne.s32.totalorder %s89, %s90
    %p99 = scmp.eq.s32.totalorder %s16, 0
    %p100 = por %p98, %p99
    %p101 = scmp.ne.s32.totalorder %s89, %s90
    %p102 = scmp.eq.s32.totalorder %s17, 1
    %p103 = por %p101, %p102
    %p105 = scmp.ne.s32.totalorder %s90, %s104
    %p106 = scmp.eq.s32.totalorder %s17, 0
    %p107 = por %p105, %p106
    %s109 = sadd.s32 %s108, 1
    %p112 = scmp.eq.s32.totalorder %s11, 1
    %p113 = scmp.ne.s32.totalorder %s108, %s110
    %p114 = scmp.eq.s32.totalorder %s11, 0
    %p115 = por %p113, %p114
    %p116 = scmp.ne.s32.totalorder %s108, %s110
    %p117 = scmp.eq.s32.totalorder %s16, 1
    %p118 = por %p116, %p117
    %p119 = scmp.ne.s32.totalorder %s110, %s111
    %p120 = scmp.eq.s32.totalorder %s16, 0
    %p121 = por %p119, %p120
    %p122 = scmp.ne.s32.totalorder %s110, %s111
    %p123 = scmp.eq.s32.totalorder %s17, 1
    %p124 = por %p122, %p123
    %p126 = scmp.ne.s32.totalorder %s111, %s125
    %p127 = scmp.eq.s32.totalorder %s17, 0
    %p128 = por %p126, %p127
    %s129 = ssub.s32 %s11, %s18
    %p130 = scmp.eq.s32.totalorder %s129, 0
    %s132 = sadd.s32 %s131, 1
    %s133 = scalar_select %p130, %s131, %s132
    %p136 = pneg %p130
    %p137 = scmp.eq.s32.totalorder %s11, 1
    %p138 = por %p136, %p137
    %p139 = scmp.ne.s32.totalorder %s131, %s134
    %p140 = scmp.eq.s32.totalorder %s11, 0
    %p141 = por %p139, %p140
    %p142 = scmp.ne.s32.totalorder %s131, %s134
    %p143 = scmp.eq.s32.totalorder %s16, 1
    %p144 = por %p142, %p143
    %p145 = scmp.ne.s32.totalorder %s134, %s135
    %p146 = scmp.eq.s32.totalorder %s16, 0
    %p147 = por %p145, %p146
    %p148 = scmp.ne.s32.totalorder %s134, %s135
    %p149 = scmp.eq.s32.totalorder %s17, 1
    %p150 = por %p148, %p149
    %p152 = scmp.ne.s32.totalorder %s135, %s151
    %p153 = scmp.eq.s32.totalorder %s17, 0
    %p154 = por %p152, %p153
    %p155 = scmp.le.s32.totalorder 1, %s11
    %p156 = scmp.lt.s32.totalorder %s11, 3
    %p157 = pnand %p155, %p156
    %p158 = pneg %p157
    // Predicated region
    $region9: #{tpu_custom_call.1} parent=5 // pred_check
      _
    $region10: #{tpu_custom_call.1} parent=5 // pred_check_branch
      %160 = sbr.rel (%p157) target = $region12
    $region11: #{tpu_custom_call.1} parent=5 // pred_region
      %s161 = ssub.s32 %s11, 1
      // Predicated region
      $region13: #{tpu_custom_call.1} parent=11 // pred_check
        %p162 = pneg %p58
      $region14: #{tpu_custom_call.1} parent=11 // pred_check_branch
        %164 = sbr.rel (%p162) target = $region16
      $region15: #{tpu_custom_call.1} parent=11 // pred_region
        _
      $region16: #{tpu_custom_call.1} parent=11 // pred_fallthru
        _
      // Predicated region
      $region17: #{tpu_custom_call.1} parent=11 // pred_check
        %p165 = pneg %p79
      $region18: #{tpu_custom_call.1} parent=11 // pred_check_branch
        %167 = sbr.rel (%p165) target = $region20
      $region19: #{tpu_custom_call.1} parent=11 // pred_region
        _
      $region20: #{tpu_custom_call.1} parent=11 // pred_fallthru
        _
      // Predicated region
      $region21: #{tpu_custom_call.1} parent=11 // pred_check
        %p168 = pneg %p100
      $region22: #{tpu_custom_call.1} parent=11 // pred_check_branch
        %170 = sbr.rel (%p168) target = $region24
      $region23: #{tpu_custom_call.1} parent=11 // pred_region
        _
      $region24: #{tpu_custom_call.1} parent=11 // pred_fallthru
        _
      // Predicated region
      $region25: #{tpu_custom_call.1} parent=11 // pred_check
        %p171 = pneg %p121
      $region26: #{tpu_custom_call.1} parent=11 // pred_check_branch
        %173 = sbr.rel (%p171) target = $region28
      $region27: #{tpu_custom_call.1} parent=11 // pred_region
        _
      $region28: #{tpu_custom_call.1} parent=11 // pred_fallthru
        _
    $region12: #{tpu_custom_call.1} parent=5 // pred_fallthru
      _
    %p174 = scmp.lt.s32.totalorder %s11, 2
    // Predicated region
    $region29: #{tpu_custom_call.1} parent=5 // pred_check
      %p175 = pneg %p174
    $region30: #{tpu_custom_call.1} parent=5 // pred_check_branch
      %177 = sbr.rel (%p175) target = $region32
    $region31: #{tpu_custom_call.1} parent=5 // pred_region
      // Predicated region
      $region33: #{tpu_custom_call.1} parent=31 // pred_check
        %p178 = pneg %p31
      $region34: #{tpu_custom_call.1} parent=31 // pred_check_branch
        %180 = sbr.rel (%p178) target = $region36
      $region35: #{tpu_custom_call.1} parent=31 // pred_region
        %p181 = scmp.lt.s32.totalorder %s11, 1
        %s182 = scalar_select %p181, %s11, 1
        %s183 = smul.addr %s182, 32
        %s184 = smul.addr %s183, 8
        %s185 = scalar_lea.vmem %s0, %s184
      $region36: #{tpu_custom_call.1} parent=31 // pred_fallthru
        _
    $region32: #{tpu_custom_call.1} parent=5 // pred_fallthru
      _
    %p186 = scmp.le.s32.totalorder 1, %s11
    %p187 = scmp.lt.s32.totalorder %s11, 3
    %p188 = pnand %p186, %p187
    %p189 = pneg %p188
    // Predicated region
    $region37: #{tpu_custom_call.1} parent=5 // pred_check
      _
    $region38: #{tpu_custom_call.1} parent=5 // pred_check_branch
      %191 = sbr.rel (%p188) target = $region40
    $region39: #{tpu_custom_call.1} parent=5 // pred_region
      %s192 = ssub.s32 %s11, 1
      %p193 = scmp.lt.s32.totalorder %s16, 1
      %s194 = scalar_select %p193, %s16, 1
      %s195 = smul.addr %s194, 32
      %s196 = smul.addr %s195, 8
      %s197 = scalar_lea.vmem %s0, %s196
      %p198 = pneg %p37
      %p199 = pneg %p34
      %p200 = pneg %p58
      %p201 = pneg %p55
      %p202 = pneg %p79
      %p203 = pneg %p76
      %p204 = pneg %p100
      %p205 = pneg %p97
      %p206 = pneg %p121
      %p207 = pneg %p118
      %p208 = pneg %p147
      %p209 = pneg %p144
      %p210 = scmp.lt.s32.totalorder %s16, 1
      %s211 = scalar_select %p210, %s16, 1
      %s212 = smul.addr %s211, 32
      %s213 = smul.addr %s212, 8
      %s214 = scalar_lea.vmem %s5, %s213
      %p215 = scmp.lt.s32.totalorder %s16, 1
      %s216 = scalar_select %p215, %s16, 1
      %s217 = smul.addr %s216, 32
      %s218 = smul.addr %s217, 8
      %s219 = scalar_lea.vmem %s0, %s218
      %p220 = scmp.lt.s32.totalorder %s16, 1
      %s221 = scalar_select %p220, %s16, 1
      %s222 = smul.addr %s221, 32
      %s223 = smul.addr %s222, 8
      %s224 = scalar_lea.vmem %s5, %s223
      %vm225 = vcmask 31744
      %226 = vst.msk [vmem:[#allocation2] sm:$0xff] %vm225, 0.0
      %227 = vst.msk [vmem:[#allocation2 + $0x8] sm:$0xff] %vm225, 0.0
      %vm228 = vcmask 25600
      %229 = vst.msk [vmem:[#allocation2 + $0x10] sm:$0x3] %vm228, 0.0
      %s230 = scalar_lea.vmem [#allocation2], 408
      %231 = vst.msk [vmem:[%s230] sm:$0xff] %vm225, 0.0
      %232 = vst.msk [vmem:[%s230 + $0x8] sm:$0xff] %vm225, 0.0
      %233 = vst.msk [vmem:[%s230 + $0x10] sm:$0x3] %vm228, 0.0
      %vm234 = vcmask 24576
      %235 = vst.msk [vmem:[#allocation2] sm:$0x1] %vm234, 0.0
      %236 = vst.msk [vmem:[#allocation2 + $0x18] sm:$0x1] %vm234, 0.0
      %237 = vst.msk [vmem:[#allocation2 + $0x30] sm:$0x1] %vm234, 0.0
      %238 = vst.msk [vmem:[#allocation2 + $0x48] sm:$0x1] %vm234, 0.0
      %239 = vst.msk [vmem:[#allocation2 + $0x60] sm:$0x1] %vm234, 0.0
      %240 = vst.msk [vmem:[#allocation2 + $0x78] sm:$0x1] %vm234, 0.0
      %241 = vst.msk [vmem:[#allocation2 + $0x90] sm:$0x1] %vm234, 0.0
      %242 = vst.msk [vmem:[#allocation2 + $0xa8] sm:$0x1] %vm234, 0.0
      %243 = vst.msk [vmem:[#allocation2 + $0xc0] sm:$0x1] %vm234, 0.0
      %244 = vst.msk [vmem:[#allocation2 + $0xd8] sm:$0x1] %vm234, 0.0
      %245 = vst.msk [vmem:[#allocation2 + $0xf0] sm:$0x1] %vm234, 0.0
      %246 = vst.msk [vmem:[#allocation2 + $0x108] sm:$0x1] %vm234, 0.0
      %247 = vst.msk [vmem:[#allocation2 + $0x120] sm:$0x1] %vm234, 0.0
      %248 = vst.msk [vmem:[#allocation2 + $0x138] sm:$0x1] %vm234, 0.0
      %249 = vst.msk [vmem:[#allocation2 + $0x150] sm:$0x1] %vm234, 0.0
      %250 = vst.msk [vmem:[#allocation2 + $0x168] sm:$0x1] %vm234, 0.0
      %251 = vst.msk [vmem:[#allocation2 + $0x180] sm:$0x1] %vm234, 0.0
      %252 = vst.msk [vmem:[#allocation2 + $0x198] sm:$0x1] %vm234, 0.0
      %253 = vst.msk [vmem:[#allocation2 + $0x11] sm:$0x1] %vm234, 0.0
      %254 = vst.msk [vmem:[#allocation2 + $0x29] sm:$0x1] %vm234, 0.0
      %255 = vst.msk [vmem:[#allocation2 + $0x41] sm:$0x1] %vm234, 0.0
      %256 = vst.msk [vmem:[#allocation2 + $0x59] sm:$0x1] %vm234, 0.0
      %257 = vst.msk [vmem:[#allocation2 + $0x71] sm:$0x1] %vm234, 0.0
      %258 = vst.msk [vmem:[#allocation2 + $0x89] sm:$0x1] %vm234, 0.0
      %259 = vst.msk [vmem:[#allocation2 + $0xa1] sm:$0x1] %vm234, 0.0
      %260 = vst.msk [vmem:[#allocation2 + $0xb9] sm:$0x1] %vm234, 0.0
      %261 = vst.msk [vmem:[#allocation2 + $0xd1] sm:$0x1] %vm234, 0.0
      %262 = vst.msk [vmem:[#allocation2 + $0xe9] sm:$0x1] %vm234, 0.0
      %263 = vst.msk [vmem:[#allocation2 + $0x101] sm:$0x1] %vm234, 0.0
      %264 = vst.msk [vmem:[#allocation2 + $0x119] sm:$0x1] %vm234, 0.0
      %265 = vst.msk [vmem:[#allocation2 + $0x131] sm:$0x1] %vm234, 0.0
      %266 = vst.msk [vmem:[#allocation2 + $0x149] sm:$0x1] %vm234, 0.0
      %267 = vst.msk [vmem:[#allocation2 + $0x161] sm:$0x1] %vm234, 0.0
      %268 = vst.msk [vmem:[#allocation2 + $0x179] sm:$0x1] %vm234, 0.0
      %269 = vst.msk [vmem:[#allocation2 + $0x191] sm:$0x1] %vm234, 0.0
      %270 = vst.msk [vmem:[#allocation2 + $0x1a9] sm:$0x1] %vm234, 0.0
      %271 = vst.msk [vmem:[#allocation3] sm:$0xff] %vm225, 0.0
      %272 = vst.msk [vmem:[#allocation3 + $0x8] sm:$0xff] %vm225, 0.0
      %273 = vst.msk [vmem:[#allocation3 + $0x10] sm:$0x3] %vm228, 0.0
      %s274 = scalar_lea.vmem [#allocation3], 408
      %275 = vst.msk [vmem:[%s274] sm:$0xff] %vm225, 0.0
      %276 = vst.msk [vmem:[%s274 + $0x8] sm:$0xff] %vm225, 0.0
      %277 = vst.msk [vmem:[%s274 + $0x10] sm:$0x3] %vm228, 0.0
      %278 = vst.msk [vmem:[#allocation3] sm:$0x1] %vm234, 0.0
      %279 = vst.msk [vmem:[#allocation3 + $0x18] sm:$0x1] %vm234, 0.0
      %280 = vst.msk [vmem:[#allocation3 + $0x30] sm:$0x1] %vm234, 0.0
      %281 = vst.msk [vmem:[#allocation3 + $0x48] sm:$0x1] %vm234, 0.0
      %282 = vst.msk [vmem:[#allocation3 + $0x60] sm:$0x1] %vm234, 0.0
      %283 = vst.msk [vmem:[#allocation3 + $0x78] sm:$0x1] %vm234, 0.0
      %284 = vst.msk [vmem:[#allocation3 + $0x90] sm:$0x1] %vm234, 0.0
      %285 = vst.msk [vmem:[#allocation3 + $0xa8] sm:$0x1] %vm234, 0.0
      %286 = vst.msk [vmem:[#allocation3 + $0xc0] sm:$0x1] %vm234, 0.0
      %287 = vst.msk [vmem:[#allocation3 + $0xd8] sm:$0x1] %vm234, 0.0
      %288 = vst.msk [vmem:[#allocation3 + $0xf0] sm:$0x1] %vm234, 0.0
      %289 = vst.msk [vmem:[#allocation3 + $0x108] sm:$0x1] %vm234, 0.0
      %290 = vst.msk [vmem:[#allocation3 + $0x120] sm:$0x1] %vm234, 0.0
      %291 = vst.msk [vmem:[#allocation3 + $0x138] sm:$0x1] %vm234, 0.0
      %292 = vst.msk [vmem:[#allocation3 + $0x150] sm:$0x1] %vm234, 0.0
      %293 = vst.msk [vmem:[#allocation3 + $0x168] sm:$0x1] %vm234, 0.0
      %294 = vst.msk [vmem:[#allocation3 + $0x180] sm:$0x1] %vm234, 0.0
      %295 = vst.msk [vmem:[#allocation3 + $0x198] sm:$0x1] %vm234, 0.0
      %296 = vst.msk [vmem:[#allocation3 + $0x11] sm:$0x1] %vm234, 0.0
      %297 = vst.msk [vmem:[#allocation3 + $0x29] sm:$0x1] %vm234, 0.0
      %298 = vst.msk [vmem:[#allocation3 + $0x41] sm:$0x1] %vm234, 0.0
      %299 = vst.msk [vmem:[#allocation3 + $0x59] sm:$0x1] %vm234, 0.0
      %300 = vst.msk [vmem:[#allocation3 + $0x71] sm:$0x1] %vm234, 0.0
      %301 = vst.msk [vmem:[#allocation3 + $0x89] sm:$0x1] %vm234, 0.0
      %302 = vst.msk [vmem:[#allocation3 + $0xa1] sm:$0x1] %vm234, 0.0
      %303 = vst.msk [vmem:[#allocation3 + $0xb9] sm:$0x1] %vm234, 0.0
      %304 = vst.msk [vmem:[#allocation3 + $0xd1] sm:$0x1] %vm234, 0.0
      %305 = vst.msk [vmem:[#allocation3 + $0xe9] sm:$0x1] %vm234, 0.0
      %306 = vst.msk [vmem:[#allocation3 + $0x101] sm:$0x1] %vm234, 0.0
      %307 = vst.msk [vmem:[#allocation3 + $0x119] sm:$0x1] %vm234, 0.0
      %308 = vst.msk [vmem:[#allocation3 + $0x131] sm:$0x1] %vm234, 0.0
      %309 = vst.msk [vmem:[#allocation3 + $0x149] sm:$0x1] %vm234, 0.0
      %310 = vst.msk [vmem:[#allocation3 + $0x161] sm:$0x1] %vm234, 0.0
      %311 = vst.msk [vmem:[#allocation3 + $0x179] sm:$0x1] %vm234, 0.0
      %312 = vst.msk [vmem:[#allocation3 + $0x191] sm:$0x1] %vm234, 0.0
      %313 = vst.msk [vmem:[#allocation3 + $0x1a9] sm:$0x1] %vm234, 0.0
      %v314 = vld [vmem:[%s219] sm:$0xff]
      %v315 = vld [vmem:[%s219 + $0x8] sm:$0xff]
      %v316 = vld [vmem:[%s219 + $0x10] sm:$0xff]
      %v317 = vld [vmem:[%s219 + $0x18] sm:$0xff]
      %v318 = vld [vmem:[%s219 + $0x20] sm:$0xff]
      %v319 = vld [vmem:[%s219 + $0x28] sm:$0xff]
      %v320 = vld [vmem:[%s219 + $0x30] sm:$0xff]
      %v321 = vld [vmem:[%s219 + $0x38] sm:$0xff]
      %v322 = vld [vmem:[%s219 + $0x40] sm:$0xff]
      %v323 = vld [vmem:[%s219 + $0x48] sm:$0xff]
      %v324 = vld [vmem:[%s219 + $0x50] sm:$0xff]
      %v325 = vld [vmem:[%s219 + $0x58] sm:$0xff]
      %v326 = vld [vmem:[%s219 + $0x60] sm:$0xff]
      %v327 = vld [vmem:[%s219 + $0x68] sm:$0xff]
      %v328 = vld [vmem:[%s219 + $0x70] sm:$0xff]
      %v329 = vld [vmem:[%s219 + $0x78] sm:$0xff]
      %v330 = vld [vmem:[%s219 + $0x80] sm:$0xff]
      %v331 = vld [vmem:[%s219 + $0x88] sm:$0xff]
      %v332 = vld [vmem:[%s219 + $0x90] sm:$0xff]
      %v333 = vld [vmem:[%s219 + $0x98] sm:$0xff]
      %v334 = vld [vmem:[%s219 + $0xa0] sm:$0xff]
      %v335 = vld [vmem:[%s219 + $0xa8] sm:$0xff]
      %v336 = vld [vmem:[%s219 + $0xb0] sm:$0xff]
      %v337 = vld [vmem:[%s219 + $0xb8] sm:$0xff]
      %v338 = vld [vmem:[%s219 + $0xc0] sm:$0xff]
      %v339 = vld [vmem:[%s219 + $0xc8] sm:$0xff]
      %v340 = vld [vmem:[%s219 + $0xd0] sm:$0xff]
      %v341 = vld [vmem:[%s219 + $0xd8] sm:$0xff]
      %v342 = vld [vmem:[%s219 + $0xe0] sm:$0xff]
      %v343 = vld [vmem:[%s219 + $0xe8] sm:$0xff]
      %v344 = vld [vmem:[%s219 + $0xf0] sm:$0xff]
      %v345 = vld [vmem:[%s219 + $0xf8] sm:$0xff]
      %s346 = scalar_lea.vmem [#allocation2], 24
      %347 = vst.msk [vmem:[%s346 + $0x1] sm:$0xff] %vm225, %v314
      %348 = vst.msk [vmem:[%s346 + $0x9] sm:$0xff] %vm225, %v315
      %349 = vst.msk [vmem:[%s346 + $0x19] sm:$0xff] %vm225, %v316
      %350 = vst.msk [vmem:[%s346 + $0x21] sm:$0xff] %vm225, %v317
      %351 = vst.msk [vmem:[%s346 + $0x31] sm:$0xff] %vm225, %v318
      %352 = vst.msk [vmem:[%s346 + $0x39] sm:$0xff] %vm225, %v319
      %353 = vst.msk [vmem:[%s346 + $0x49] sm:$0xff] %vm225, %v320
      %354 = vst.msk [vmem:[%s346 + $0x51] sm:$0xff] %vm225, %v321
      %355 = vst.msk [vmem:[%s346 + $0x61] sm:$0xff] %vm225, %v322
      %356 = vst.msk [vmem:[%s346 + $0x69] sm:$0xff] %vm225, %v323
      %357 = vst.msk [vmem:[%s346 + $0x79] sm:$0xff] %vm225, %v324
      %358 = vst.msk [vmem:[%s346 + $0x81] sm:$0xff] %vm225, %v325
      %359 = vst.msk [vmem:[%s346 + $0x91] sm:$0xff] %vm225, %v326
      %360 = vst.msk [vmem:[%s346 + $0x99] sm:$0xff] %vm225, %v327
      %361 = vst.msk [vmem:[%s346 + $0xa9] sm:$0xff] %vm225, %v328
      %362 = vst.msk [vmem:[%s346 + $0xb1] sm:$0xff] %vm225, %v329
      %363 = vst.msk [vmem:[%s346 + $0xc1] sm:$0xff] %vm225, %v330
      %364 = vst.msk [vmem:[%s346 + $0xc9] sm:$0xff] %vm225, %v331
      %365 = vst.msk [vmem:[%s346 + $0xd9] sm:$0xff] %vm225, %v332
      %366 = vst.msk [vmem:[%s346 + $0xe1] sm:$0xff] %vm225, %v333
      %367 = vst.msk [vmem:[%s346 + $0xf1] sm:$0xff] %vm225, %v334
      %368 = vst.msk [vmem:[%s346 + $0xf9] sm:$0xff] %vm225, %v335
      %369 = vst.msk [vmem:[%s346 + $0x109] sm:$0xff] %vm225, %v336
      %370 = vst.msk [vmem:[%s346 + $0x111] sm:$0xff] %vm225, %v337
      %371 = vst.msk [vmem:[%s346 + $0x121] sm:$0xff] %vm225, %v338
      %372 = vst.msk [vmem:[%s346 + $0x129] sm:$0xff] %vm225, %v339
      %373 = vst.msk [vmem:[%s346 + $0x139] sm:$0xff] %vm225, %v340
      %374 = vst.msk [vmem:[%s346 + $0x141] sm:$0xff] %vm225, %v341
      %375 = vst.msk [vmem:[%s346 + $0x151] sm:$0xff] %vm225, %v342
      %376 = vst.msk [vmem:[%s346 + $0x159] sm:$0xff] %vm225, %v343
      %377 = vst.msk [vmem:[%s346 + $0x169] sm:$0xff] %vm225, %v344
      %378 = vst.msk [vmem:[%s346 + $0x171] sm:$0xff] %vm225, %v345
      %v379 = vld [vmem:[%s1] sm:$0xff]
      %v380 = vld [vmem:[%s1 + $0x8] sm:$0xff]
      %v381 = vld [vmem:[%s1 + $0x10] sm:$0xff]
      %v382 = vld [vmem:[%s1 + $0x18] sm:$0xff]
      %v383 = vld [vmem:[%s1 + $0x20] sm:$0xf]
      %v384 = vld [vmem:[%s2] sm:$0xff]
      %v385 = vld [vmem:[%s2 + $0x8] sm:$0xff]
      %v386 = vld [vmem:[%s2 + $0x10] sm:$0xff]
      %v387 = vld [vmem:[%s2 + $0x18] sm:$0xff]
      %v388 = vld [vmem:[%s2 + $0x20] sm:$0xf]
      %v389 = vld [vmem:[%s3] sm:$0x1]
      %v390 = vld [vmem:[%s4] sm:$0x1]
      %v391 = vld [vmem:[#allocation2] sm:$0xff]
      %v392 = vld [vmem:[#allocation2 + $0x8] sm:$0xff]
      %v393 = vld [vmem:[#allocation2 + $0x10] sm:$0x3]
      %v394 = vld [vmem:[#allocation2 + $0x18] sm:$0xff]
      %v395 = vld [vmem:[#allocation2 + $0x20] sm:$0xff]
      %v396 = vld [vmem:[#allocation2 + $0x28] sm:$0x3]
      %v397 = vld [vmem:[#allocation2 + $0x30] sm:$0xff]
      %v398 = vld [vmem:[#allocation2 + $0x38] sm:$0xff]
      %v399 = vld [vmem:[#allocation2 + $0x40] sm:$0x3]
      %v400 = vld [vmem:[#allocation2 + $0x48] sm:$0xff]
      %v401 = vld [vmem:[#allocation2 + $0x50] sm:$0xff]
      %v402 = vld [vmem:[#allocation2 + $0x58] sm:$0x3]
      %v403 = vld [vmem:[#allocation2 + $0x60] sm:$0xff]
      %v404 = vld [vmem:[#allocation2 + $0x68] sm:$0xff]
      %v405 = vld [vmem:[#allocation2 + $0x70] sm:$0x3]
      %v406 = vld [vmem:[#allocation2 + $0x78] sm:$0xff]
      %v407 = vld [vmem:[#allocation2 + $0x80] sm:$0xff]
      %v408 = vld [vmem:[#allocation2 + $0x88] sm:$0x3]
      %v409 = vld [vmem:[#allocation2 + $0x90] sm:$0xff]
      %v410 = vld [vmem:[#allocation2 + $0x98] sm:$0xff]
      %v411 = vld [vmem:[#allocation2 + $0xa0] sm:$0x3]
      %v412 = vld [vmem:[#allocation2 + $0xa8] sm:$0xff]
      %v413 = vld [vmem:[#allocation2 + $0xb0] sm:$0xff]
      %v414 = vld [vmem:[#allocation2 + $0xb8] sm:$0x3]
      %v415 = vld [vmem:[#allocation2 + $0xc0] sm:$0xff]
      %v416 = vld [vmem:[#allocation2 + $0xc8] sm:$0xff]
      %v417 = vld [vmem:[#allocation2 + $0xd0] sm:$0x3]
      %v418 = vld [vmem:[#allocation2 + $0xd8] sm:$0xff]
      %v419 = vld [vmem:[#allocation2 + $0xe0] sm:$0xff]
      %v420 = vld [vmem:[#allocation2 + $0xe8] sm:$0x3]
      %vm445 = vcmask 1046528
      %v446 = vrot.slane %v391, 1
      %v447 = vrot.slane %v392, 1
      %v448 = vsel %vm445, %v446, %v447
      %v449 = vrot.slane %v393, 1
      %v450 = vsel %vm445, %v447, %v449
      %v451 = vrot.slane %v394, 1
      %v452 = vrot.slane %v395, 1
      %v453 = vsel %vm445, %v451, %v452
      %v454 = vrot.slane %v396, 1
      %v455 = vsel %vm445, %v452, %v454
      %v456 = vrot.slane %v397, 1
      %v457 = vrot.slane %v398, 1
      %v458 = vsel %vm445, %v456, %v457
      %v459 = vrot.slane %v399, 1
      %v460 = vsel %vm445, %v457, %v459
      %v461 = vrot.slane %v400, 1
      %v462 = vrot.slane %v401, 1
      %v463 = vsel %vm445, %v461, %v462
      %v464 = vrot.slane %v402, 1
      %v465 = vsel %vm445, %v462, %v464
      %v466 = vrot.slane %v403, 1
      %v467 = vrot.slane %v404, 1
      %v468 = vsel %vm445, %v466, %v467
      %v469 = vrot.slane %v405, 1
      %v470 = vsel %vm445, %v467, %v469
      %v471 = vrot.slane %v406, 1
      %v472 = vrot.slane %v407, 1
      %v473 = vsel %vm445, %v471, %v472
      %v474 = vrot.slane %v408, 1
      %v475 = vsel %vm445, %v472, %v474
      %v476 = vrot.slane %v409, 1
      %v477 = vrot.slane %v410, 1
      %v478 = vsel %vm445, %v476, %v477
      %v479 = vrot.slane %v411, 1
      %v480 = vsel %vm445, %v477, %v479
      %v481 = vrot.slane %v412, 1
      %v482 = vrot.slane %v413, 1
      %v483 = vsel %vm445, %v481, %v482
      %v484 = vrot.slane %v414, 1
      %v485 = vsel %vm445, %v482, %v484
      %486 = vrot.lane.b32.xlu0 %v448, 4
      %v487 = vpop.permute.xlu0 %486
      %488 = vrot.lane.b32.xlu0 %v450, 4
      %v489 = vpop.permute.xlu0 %488
      %490 = vrot.lane.b32.xlu0 %v453, 4
      %v491 = vpop.permute.xlu0 %490
      %492 = vrot.lane.b32.xlu0 %v455, 4
      %v493 = vpop.permute.xlu0 %492
      %494 = vrot.lane.b32.xlu0 %v458, 4
      %v495 = vpop.permute.xlu0 %494
      %496 = vrot.lane.b32.xlu0 %v460, 4
      %v497 = vpop.permute.xlu0 %496
      %498 = vrot.lane.b32.xlu0 %v463, 4
      %v499 = vpop.permute.xlu0 %498
      %500 = vrot.lane.b32.xlu0 %v465, 4
      %v501 = vpop.permute.xlu0 %500
      %502 = vrot.lane.b32.xlu0 %v468, 4
      %v503 = vpop.permute.xlu0 %502
      %504 = vrot.lane.b32.xlu0 %v470, 4
      %v505 = vpop.permute.xlu0 %504
      %506 = vrot.lane.b32.xlu0 %v473, 4
      %v507 = vpop.permute.xlu0 %506
      %508 = vrot.lane.b32.xlu0 %v475, 4
      %v509 = vpop.permute.xlu0 %508
      %510 = vrot.lane.b32.xlu0 %v478, 4
      %v511 = vpop.permute.xlu0 %510
      %512 = vrot.lane.b32.xlu0 %v480, 4
      %v513 = vpop.permute.xlu0 %512
      %514 = vrot.lane.b32.xlu0 %v483, 4
      %v515 = vpop.permute.xlu0 %514
      %516 = vrot.lane.b32.xlu0 %v485, 4
      %v517 = vpop.permute.xlu0 %516
      %vm534 = vcmask 1045504
      %v535 = vrot.slane %v391, 2
      %v536 = vrot.slane %v392, 2
      %v537 = vsel %vm534, %v535, %v536
      %v538 = vrot.slane %v393, 2
      %v539 = vsel %vm534, %v536, %v538
      %v540 = vrot.slane %v394, 2
      %v541 = vrot.slane %v395, 2
      %v542 = vsel %vm534, %v540, %v541
      %v543 = vrot.slane %v396, 2
      %v544 = vsel %vm534, %v541, %v543
      %v545 = vrot.slane %v397, 2
      %v546 = vrot.slane %v398, 2
      %v547 = vsel %vm534, %v545, %v546
      %v548 = vrot.slane %v399, 2
      %v549 = vsel %vm534, %v546, %v548
      %v550 = vrot.slane %v400, 2
      %v551 = vrot.slane %v401, 2
      %v552 = vsel %vm534, %v550, %v551
      %v553 = vrot.slane %v402, 2
      %v554 = vsel %vm534, %v551, %v553
      %v555 = vrot.slane %v403, 2
      %v556 = vrot.slane %v404, 2
      %v557 = vsel %vm534, %v555, %v556
      %v558 = vrot.slane %v405, 2
      %v559 = vsel %vm534, %v556, %v558
      %v560 = vrot.slane %v406, 2
      %v561 = vrot.slane %v407, 2
      %v562 = vsel %vm534, %v560, %v561
      %v563 = vrot.slane %v408, 2
      %v564 = vsel %vm534, %v561, %v563
      %v565 = vrot.slane %v409, 2
      %v566 = vrot.slane %v410, 2
      %v567 = vsel %vm534, %v565, %v566
      %v568 = vrot.slane %v411, 2
      %v569 = vsel %vm534, %v566, %v568
      %v570 = vrot.slane %v412, 2
      %v571 = vrot.slane %v413, 2
      %v572 = vsel %vm534, %v570, %v571
      %v573 = vrot.slane %v414, 2
      %v574 = vsel %vm534, %v571, %v573
      %575 = vrot.lane.b32.xlu0 %v537, 8
      %v576 = vpop.permute.xlu0 %575
      %577 = vrot.lane.b32.xlu0 %v539, 8
      %v578 = vpop.permute.xlu0 %577
      %579 = vrot.lane.b32.xlu0 %v542, 8
      %v580 = vpop.permute.xlu0 %579
      %581 = vrot.lane.b32.xlu0 %v544, 8
      %v582 = vpop.permute.xlu0 %581
      %583 = vrot.lane.b32.xlu0 %v547, 8
      %v584 = vpop.permute.xlu0 %583
      %585 = vrot.lane.b32.xlu0 %v549, 8
      %v586 = vpop.permute.xlu0 %585
      %587 = vrot.lane.b32.xlu0 %v552, 8
      %v588 = vpop.permute.xlu0 %587
      %589 = vrot.lane.b32.xlu0 %v554, 8
      %v590 = vpop.permute.xlu0 %589
      %591 = vrot.lane.b32.xlu0 %v557, 8
      %v592 = vpop.permute.xlu0 %591
      %593 = vrot.lane.b32.xlu0 %v559, 8
      %v594 = vpop.permute.xlu0 %593
      %595 = vrot.lane.b32.xlu0 %v562, 8
      %v596 = vpop.permute.xlu0 %595
      %597 = vrot.lane.b32.xlu0 %v564, 8
      %v598 = vpop.permute.xlu0 %597
      %599 = vrot.lane.b32.xlu0 %v567, 8
      %v600 = vpop.permute.xlu0 %599
      %601 = vrot.lane.b32.xlu0 %v569, 8
      %v602 = vpop.permute.xlu0 %601
      %603 = vrot.lane.b32.xlu0 %v572, 8
      %v604 = vpop.permute.xlu0 %603
      %605 = vrot.lane.b32.xlu0 %v574, 8
      %v606 = vpop.permute.xlu0 %605
      %625 = vrot.lane.b32.xlu0 %v394, 12
      %v626 = vpop.permute.xlu0 %625
      %627 = vrot.lane.b32.xlu0 %v395, 12
      %v628 = vpop.permute.xlu0 %627
      %629 = vrot.lane.b32.xlu0 %v397, 12
      %v630 = vpop.permute.xlu0 %629
      %631 = vrot.lane.b32.xlu0 %v398, 12
      %v632 = vpop.permute.xlu0 %631
      %633 = vrot.lane.b32.xlu0 %v400, 12
      %v634 = vpop.permute.xlu0 %633
      %635 = vrot.lane.b32.xlu0 %v401, 12
      %v636 = vpop.permute.xlu0 %635
      %637 = vrot.lane.b32.xlu0 %v403, 12
      %v638 = vpop.permute.xlu0 %637
      %639 = vrot.lane.b32.xlu0 %v404, 12
      %v640 = vpop.permute.xlu0 %639
      %641 = vrot.lane.b32.xlu0 %v406, 12
      %v642 = vpop.permute.xlu0 %641
      %643 = vrot.lane.b32.xlu0 %v407, 12
      %v644 = vpop.permute.xlu0 %643
      %645 = vrot.lane.b32.xlu0 %v409, 12
      %v646 = vpop.permute.xlu0 %645
      %647 = vrot.lane.b32.xlu0 %v410, 12
      %v648 = vpop.permute.xlu0 %647
      %649 = vrot.lane.b32.xlu0 %v412, 12
      %v650 = vpop.permute.xlu0 %649
      %651 = vrot.lane.b32.xlu0 %v413, 12
      %v652 = vpop.permute.xlu0 %651
      %653 = vrot.lane.b32.xlu0 %v415, 12
      %v654 = vpop.permute.xlu0 %653
      %655 = vrot.lane.b32.xlu0 %v416, 12
      %v656 = vpop.permute.xlu0 %655
      %v674 = vrot.slane %v415, 1
      %v675 = vrot.slane %v416, 1
      %v676 = vsel %vm445, %v674, %v675
      %v677 = vrot.slane %v417, 1
      %v678 = vsel %vm445, %v675, %v677
      %679 = vrot.lane.b32.xlu0 %v453, 16
      %v680 = vpop.permute.xlu0 %679
      %681 = vrot.lane.b32.xlu0 %v455, 16
      %v682 = vpop.permute.xlu0 %681
      %683 = vrot.lane.b32.xlu0 %v458, 16
      %v684 = vpop.permute.xlu0 %683
      %685 = vrot.lane.b32.xlu0 %v460, 16
      %v686 = vpop.permute.xlu0 %685
      %687 = vrot.lane.b32.xlu0 %v463, 16
      %v688 = vpop.permute.xlu0 %687
      %689 = vrot.lane.b32.xlu0 %v465, 16
      %v690 = vpop.permute.xlu0 %689
      %691 = vrot.lane.b32.xlu0 %v468, 16
      %v692 = vpop.permute.xlu0 %691
      %693 = vrot.lane.b32.xlu0 %v470, 16
      %v694 = vpop.permute.xlu0 %693
      %695 = vrot.lane.b32.xlu0 %v473, 16
      %v696 = vpop.permute.xlu0 %695
      %697 = vrot.lane.b32.xlu0 %v475, 16
      %v698 = vpop.permute.xlu0 %697
      %699 = vrot.lane.b32.xlu0 %v478, 16
      %v700 = vpop.permute.xlu0 %699
      %701 = vrot.lane.b32.xlu0 %v480, 16
      %v702 = vpop.permute.xlu0 %701
      %703 = vrot.lane.b32.xlu0 %v483, 16
      %v704 = vpop.permute.xlu0 %703
      %705 = vrot.lane.b32.xlu0 %v485, 16
      %v706 = vpop.permute.xlu0 %705
      %707 = vrot.lane.b32.xlu0 %v676, 16
      %v708 = vpop.permute.xlu0 %707
      %709 = vrot.lane.b32.xlu0 %v678, 16
      %v710 = vpop.permute.xlu0 %709
      %v727 = vrot.slane %v415, 2
      %v728 = vrot.slane %v416, 2
      %v729 = vsel %vm534, %v727, %v728
      %v730 = vrot.slane %v417, 2
      %v731 = vsel %vm534, %v728, %v730
      %732 = vrot.lane.b32.xlu0 %v542, 20
      %v733 = vpop.permute.xlu0 %732
      %734 = vrot.lane.b32.xlu0 %v544, 20
      %v735 = vpop.permute.xlu0 %734
      %736 = vrot.lane.b32.xlu0 %v547, 20
      %v737 = vpop.permute.xlu0 %736
      %738 = vrot.lane.b32.xlu0 %v549, 20
      %v739 = vpop.permute.xlu0 %738
      %740 = vrot.lane.b32.xlu0 %v552, 20
      %v741 = vpop.permute.xlu0 %740
      %742 = vrot.lane.b32.xlu0 %v554, 20
      %v743 = vpop.permute.xlu0 %742
      %744 = vrot.lane.b32.xlu0 %v557, 20
      %v745 = vpop.permute.xlu0 %744
      %746 = vrot.lane.b32.xlu0 %v559, 20
      %v747 = vpop.permute.xlu0 %746
      %748 = vrot.lane.b32.xlu0 %v562, 20
      %v749 = vpop.permute.xlu0 %748
      %750 = vrot.lane.b32.xlu0 %v564, 20
      %v751 = vpop.permute.xlu0 %750
      %752 = vrot.lane.b32.xlu0 %v567, 20
      %v753 = vpop.permute.xlu0 %752
      %754 = vrot.lane.b32.xlu0 %v569, 20
      %v755 = vpop.permute.xlu0 %754
      %756 = vrot.lane.b32.xlu0 %v572, 20
      %v757 = vpop.permute.xlu0 %756
      %758 = vrot.lane.b32.xlu0 %v574, 20
      %v759 = vpop.permute.xlu0 %758
      %760 = vrot.lane.b32.xlu0 %v729, 20
      %v761 = vpop.permute.xlu0 %760
      %762 = vrot.lane.b32.xlu0 %v731, 20
      %v763 = vpop.permute.xlu0 %762
      %782 = vrot.lane.b32.xlu0 %v397, 24
      %v783 = vpop.permute.xlu0 %782
      %784 = vrot.lane.b32.xlu0 %v398, 24
      %v785 = vpop.permute.xlu0 %784
      %786 = vrot.lane.b32.xlu0 %v400, 24
      %v787 = vpop.permute.xlu0 %786
      %788 = vrot.lane.b32.xlu0 %v401, 24
      %v789 = vpop.permute.xlu0 %788
      %790 = vrot.lane.b32.xlu0 %v403, 24
      %v791 = vpop.permute.xlu0 %790
      %792 = vrot.lane.b32.xlu0 %v404, 24
      %v793 = vpop.permute.xlu0 %792
      %794 = vrot.lane.b32.xlu0 %v406, 24
      %v795 = vpop.permute.xlu0 %794
      %796 = vrot.lane.b32.xlu0 %v407, 24
      %v797 = vpop.permute.xlu0 %796
      %798 = vrot.lane.b32.xlu0 %v409, 24
      %v799 = vpop.permute.xlu0 %798
      %800 = vrot.lane.b32.xlu0 %v410, 24
      %v801 = vpop.permute.xlu0 %800
      %802 = vrot.lane.b32.xlu0 %v412, 24
      %v803 = vpop.permute.xlu0 %802
      %804 = vrot.lane.b32.xlu0 %v413, 24
      %v805 = vpop.permute.xlu0 %804
      %806 = vrot.lane.b32.xlu0 %v415, 24
      %v807 = vpop.permute.xlu0 %806
      %808 = vrot.lane.b32.xlu0 %v416, 24
      %v809 = vpop.permute.xlu0 %808
      %810 = vrot.lane.b32.xlu0 %v418, 24
      %v811 = vpop.permute.xlu0 %810
      %812 = vrot.lane.b32.xlu0 %v419, 24
      %v813 = vpop.permute.xlu0 %812
      %v831 = vrot.slane %v418, 1
      %v832 = vrot.slane %v419, 1
      %v833 = vsel %vm445, %v831, %v832
      %v834 = vrot.slane %v420, 1
      %v835 = vsel %vm445, %v832, %v834
      %836 = vrot.lane.b32.xlu0 %v458, 28
      %v837 = vpop.permute.xlu0 %836
      %838 = vrot.lane.b32.xlu0 %v460, 28
      %v839 = vpop.permute.xlu0 %838
      %840 = vrot.lane.b32.xlu0 %v463, 28
      %v841 = vpop.permute.xlu0 %840
      %842 = vrot.lane.b32.xlu0 %v465, 28
      %v843 = vpop.permute.xlu0 %842
      %844 = vrot.lane.b32.xlu0 %v468, 28
      %v845 = vpop.permute.xlu0 %844
      %846 = vrot.lane.b32.xlu0 %v470, 28
      %v847 = vpop.permute.xlu0 %846
      %848 = vrot.lane.b32.xlu0 %v473, 28
      %v849 = vpop.permute.xlu0 %848
      %850 = vrot.lane.b32.xlu0 %v475, 28
      %v851 = vpop.permute.xlu0 %850
      %852 = vrot.lane.b32.xlu0 %v478, 28
      %v853 = vpop.permute.xlu0 %852
      %854 = vrot.lane.b32.xlu0 %v480, 28
      %v855 = vpop.permute.xlu0 %854
      %856 = vrot.lane.b32.xlu0 %v483, 28
      %v857 = vpop.permute.xlu0 %856
      %858 = vrot.lane.b32.xlu0 %v485, 28
      %v859 = vpop.permute.xlu0 %858
      %860 = vrot.lane.b32.xlu0 %v676, 28
      %v861 = vpop.permute.xlu0 %860
      %862 = vrot.lane.b32.xlu0 %v678, 28
      %v863 = vpop.permute.xlu0 %862
      %864 = vrot.lane.b32.xlu0 %v833, 28
      %v865 = vpop.permute.xlu0 %864
      %866 = vrot.lane.b32.xlu0 %v835, 28
      %v867 = vpop.permute.xlu0 %866
      %v884 = vrot.slane %v418, 2
      %v885 = vrot.slane %v419, 2
      %v886 = vsel %vm534, %v884, %v885
      %v887 = vrot.slane %v420, 2
      %v888 = vsel %vm534, %v885, %v887
      %889 = vrot.lane.b32.xlu0 %v547, 32
      %v890 = vpop.permute.xlu0 %889
      %891 = vrot.lane.b32.xlu0 %v549, 32
      %v892 = vpop.permute.xlu0 %891
      %893 = vrot.lane.b32.xlu0 %v552, 32
      %v894 = vpop.permute.xlu0 %893
      %895 = vrot.lane.b32.xlu0 %v554, 32
      %v896 = vpop.permute.xlu0 %895
      %897 = vrot.lane.b32.xlu0 %v557, 32
      %v898 = vpop.permute.xlu0 %897
      %899 = vrot.lane.b32.xlu0 %v559, 32
      %v900 = vpop.permute.xlu0 %899
      %901 = vrot.lane.b32.xlu0 %v562, 32
      %v902 = vpop.permute.xlu0 %901
      %903 = vrot.lane.b32.xlu0 %v564, 32
      %v904 = vpop.permute.xlu0 %903
      %905 = vrot.lane.b32.xlu0 %v567, 32
      %v906 = vpop.permute.xlu0 %905
      %907 = vrot.lane.b32.xlu0 %v569, 32
      %v908 = vpop.permute.xlu0 %907
      %909 = vrot.lane.b32.xlu0 %v572, 32
      %v910 = vpop.permute.xlu0 %909
      %911 = vrot.lane.b32.xlu0 %v574, 32
      %v912 = vpop.permute.xlu0 %911
      %913 = vrot.lane.b32.xlu0 %v729, 32
      %v914 = vpop.permute.xlu0 %913
      %915 = vrot.lane.b32.xlu0 %v731, 32
      %v916 = vpop.permute.xlu0 %915
      %917 = vrot.lane.b32.xlu0 %v886, 32
      %v918 = vpop.permute.xlu0 %917
      %919 = vrot.lane.b32.xlu0 %v888, 32
      %v920 = vpop.permute.xlu0 %919
      %v937 = vsel %vm225, %v391, %v487
      %v938 = vsel %vm225, %v392, %v489
      %v939 = vsel %vm225, %v394, %v491
      %v940 = vsel %vm225, %v395, %v493
      %v941 = vsel %vm225, %v397, %v495
      %v942 = vsel %vm225, %v398, %v497
      %v943 = vsel %vm225, %v400, %v499
      %v944 = vsel %vm225, %v401, %v501
      %v945 = vsel %vm225, %v403, %v503
      %v946 = vsel %vm225, %v404, %v505
      %v947 = vsel %vm225, %v406, %v507
      %v948 = vsel %vm225, %v407, %v509
      %v949 = vsel %vm225, %v409, %v511
      %v950 = vsel %vm225, %v410, %v513
      %v951 = vsel %vm225, %v412, %v515
      %v952 = vsel %vm225, %v413, %v517
      %vm953 = vcmask 64512
      %v954 = vsel %vm953, %v937, %v576
      %v955 = vsel %vm953, %v938, %v578
      %v956 = vsel %vm953, %v939, %v580
      %v957 = vsel %vm953, %v940, %v582
      %v958 = vsel %vm953, %v941, %v584
      %v959 = vsel %vm953, %v942, %v586
      %v960 = vsel %vm953, %v943, %v588
      %v961 = vsel %vm953, %v944, %v590
      %v962 = vsel %vm953, %v945, %v592
      %v963 = vsel %vm953, %v946, %v594
      %v964 = vsel %vm953, %v947, %v596
      %v965 = vsel %vm953, %v948, %v598
      %v966 = vsel %vm953, %v949, %v600
      %v967 = vsel %vm953, %v950, %v602
      %v968 = vsel %vm953, %v951, %v604
      %v969 = vsel %vm953, %v952, %v606
      %vm970 = vcmask 97280
      %v971 = vsel %vm970, %v954, %v626
      %v972 = vsel %vm970, %v955, %v628
      %v973 = vsel %vm970, %v956, %v630
      %v974 = vsel %vm970, %v957, %v632
      %v975 = vsel %vm970, %v958, %v634
      %v976 = vsel %vm970, %v959, %v636
      %v977 = vsel %vm970, %v960, %v638
      %v978 = vsel %vm970, %v961, %v640
      %v979 = vsel %vm970, %v962, %v642
      %v980 = vsel %vm970, %v963, %v644
      %v981 = vsel %vm970, %v964, %v646
      %v982 = vsel %vm970, %v965, %v648
      %v983 = vsel %vm970, %v966, %v650
      %v984 = vsel %vm970, %v967, %v652
      %v985 = vsel %vm970, %v968, %v654
      %v986 = vsel %vm970, %v969, %v656
      %vm987 = vcmask 130048
      %v988 = vsel %vm987, %v971, %v680
      %v989 = vsel %vm987, %v972, %v682
      %v990 = vsel %vm987, %v973, %v684
      %v991 = vsel %vm987, %v974, %v686
      %v992 = vsel %vm987, %v975, %v688
      %v993 = vsel %vm987, %v976, %v690
      %v994 = vsel %vm987, %v977, %v692
      %v995 = vsel %vm987, %v978, %v694
      %v996 = vsel %vm987, %v979, %v696
      %v997 = vsel %vm987, %v980, %v698
      %v998 = vsel %vm987, %v981, %v700
      %v999 = vsel %vm987, %v982, %v702
      %v1000 = vsel %vm987, %v983, %v704
      %v1001 = vsel %vm987, %v984, %v706
      %v1002 = vsel %vm987, %v985, %v708
      %v1003 = vsel %vm987, %v986, %v710
      %vm1004 = vcmask 162816
      %v1005 = vsel %vm1004, %v988, %v733
      %v1006 = vsel %vm1004, %v989, %v735
      %v1007 = vsel %vm1004, %v990, %v737
      %v1008 = vsel %vm1004, %v991, %v739
      %v1009 = vsel %vm1004, %v992, %v741
      %v1010 = vsel %vm1004, %v993, %v743
      %v1011 = vsel %vm1004, %v994, %v745
      %v1012 = vsel %vm1004, %v995, %v747
      %v1013 = vsel %vm1004, %v996, %v749
      %v1014 = vsel %vm1004, %v997, %v751
      %v1015 = vsel %vm1004, %v998, %v753
      %v1016 = vsel %vm1004, %v999, %v755
      %v1017 = vsel %vm1004, %v1000, %v757
      %v1018 = vsel %vm1004, %v1001, %v759
      %v1019 = vsel %vm1004, %v1002, %v761
      %v1020 = vsel %vm1004, %v1003, %v763
      %vm1021 = vcmask 195584
      %v1022 = vsel %vm1021, %v1005, %v783
      %v1023 = vsel %vm1021, %v1006, %v785
      %v1024 = vsel %vm1021, %v1007, %v787
      %v1025 = vsel %vm1021, %v1008, %v789
      %v1026 = vsel %vm1021, %v1009, %v791
      %v1027 = vsel %vm1021, %v1010, %v793
      %v1028 = vsel %vm1021, %v1011, %v795
      %v1029 = vsel %vm1021, %v1012, %v797
      %v1030 = vsel %vm1021, %v1013, %v799
      %v1031 = vsel %vm1021, %v1014, %v801
      %v1032 = vsel %vm1021, %v1015, %v803
      %v1033 = vsel %vm1021, %v1016, %v805
      %v1034 = vsel %vm1021, %v1017, %v807
      %v1035 = vsel %vm1021, %v1018, %v809
      %v1036 = vsel %vm1021, %v1019, %v811
      %v1037 = vsel %vm1021, %v1020, %v813
      %vm1038 = vcmask 228352
      %v1039 = vsel %vm1038, %v1022, %v837
      %v1040 = vsel %vm1038, %v1023, %v839
      %v1041 = vsel %vm1038, %v1024, %v841
      %v1042 = vsel %vm1038, %v1025, %v843
      %v1043 = vsel %vm1038, %v1026, %v845
      %v1044 = vsel %vm1038, %v1027, %v847
      %v1045 = vsel %vm1038, %v1028, %v849
      %v1046 = vsel %vm1038, %v1029, %v851
      %v1047 = vsel %vm1038, %v1030, %v853
      %v1048 = vsel %vm1038, %v1031, %v855
      %v1049 = vsel %vm1038, %v1032, %v857
      %v1050 = vsel %vm1038, %v1033, %v859
      %v1051 = vsel %vm1038, %v1034, %v861
      %v1052 = vsel %vm1038, %v1035, %v863
      %v1053 = vsel %vm1038, %v1036, %v865
      %v1054 = vsel %vm1038, %v1037, %v867
      %vm1055 = vcmask 261120
      %v1056 = vsel %vm1055, %v1039, %v890
      %v1057 = vsel %vm1055, %v1040, %v892
      %v1058 = vsel %vm1055, %v1041, %v894
      %v1059 = vsel %vm1055, %v1042, %v896
      %v1060 = vsel %vm1055, %v1043, %v898
      %v1061 = vsel %vm1055, %v1044, %v900
      %v1062 = vsel %vm1055, %v1045, %v902
      %v1063 = vsel %vm1055, %v1046, %v904
      %v1064 = vsel %vm1055, %v1047, %v906
      %v1065 = vsel %vm1055, %v1048, %v908
      %v1066 = vsel %vm1055, %v1049, %v910
      %v1067 = vsel %vm1055, %v1050, %v912
      %v1068 = vsel %vm1055, %v1051, %v914
      %v1069 = vsel %vm1055, %v1052, %v916
      %v1070 = vsel %vm1055, %v1053, %v918
      %v1071 = vsel %vm1055, %v1054, %v920
      %v1073 = vlaneseq
      %v1074 = vshrl.u32 %v1073, 7
      %v1075 = vsub.s32 0, %v1074
      %v1076 = vrot.slane %v389, %v1075
      %vm1078 = vcmask 293888
      %v1080 = vsel %vm1078, %v1056, 0
      %v1083 = vsel %vm1078, %v1057, 0
      %v1086 = vsel %vm1078, %v1058, 0
      %v1089 = vsel %vm1078, %v1059, 0
      %v1092 = vsel %vm1078, %v1060, 0
      %v1095 = vsel %vm1078, %v1061, 0
      %v1098 = vsel %vm1078, %v1062, 0
      %v1101 = vsel %vm1078, %v1063, 0
      %v1104 = vsel %vm1078, %v1064, 0
      %v1107 = vsel %vm1078, %v1065, 0
      %v1110 = vsel %vm1078, %v1066, 0
      %v1113 = vsel %vm1078, %v1067, 0
      %v1116 = vsel %vm1078, %v1068, 0
      %v1119 = vsel %vm1078, %v1069, 0
      %v1122 = vsel %vm1078, %v1070, 0
      %v1125 = vsel %vm1078, %v1071, 0
      %vm1127 = vcmask 1043456
      %v1129 = vsel %vm1127, %v383, 0
      %1131 = vmatprep.subr.mxu0 0.0
      %1132 = vmatpush1.msra.mxu0 %v379
      %1133 = vmatprep.subr.mxu0 0.0
      %1134 = vmatpush1.msra.mxu0 %v380
      %1135 = vmatprep.subr.mxu0 0.0
      %1136 = vmatpush1.msra.mxu0 %v381
      %1137 = vmatprep.subr.mxu0 0.0
      %1138 = vmatpush1.msra.mxu0 %v382
      %1139 = vmatprep.subr.mxu0 0.0
      %1140 = vmatpush1.msra.mxu0 %v1129
      %1141 = vmatprep.subr.mxu0 0.0
      %1142 = vmatpush1.msra.mxu0 0.0
      %1143 = vmatprep.subr.mxu0 0.0
      %1144 = vmatpush1.msra.mxu0 0.0
      %1145 = vmatprep.subr.mxu0 0.0
      %1146 = vmatpush1.msra.mxu0 0.0
      %1147 = vmatprep.subr.mxu0 0.0
      %1148 = vmatpush1.msra.mxu0 0.0
      %1149 = vmatprep.subr.mxu0 0.0
      %1150 = vmatpush1.msra.mxu0 0.0
      %1151 = vmatprep.subr.mxu0 0.0
      %1152 = vmatpush1.msra.mxu0 0.0
      %1153 = vmatprep.subr.mxu0 0.0
      %1154 = vmatpush1.msra.mxu0 0.0
      %1155 = vmatprep.subr.mxu0 0.0
      %1156 = vmatpush1.msra.mxu0 0.0
      %1157 = vmatprep.subr.mxu0 0.0
      %1158 = vmatpush1.msra.mxu0 0.0
      %1159 = vmatprep.subr.mxu0 0.0
      %1160 = vmatpush1.msra.mxu0 0.0
      %1161 = vmatprep.subr.mxu0 0.0
      %1162 = vmatpush1.msra.mxu0 0.0
      %1163 = vmatprep.subr.mxu0 0.0
      %1164 = vmatpush1.msra.mxu0 0.0
      %1165 = vmatprep.subr.mxu0 0.0
      %1166 = vmatpush1.msra.mxu0 0.0
      %1167 = vmatprep.subr.mxu0 0.0
      %1168 = vmatpush1.msra.mxu0 0.0
      %1169 = vmatprep.subr.mxu0 0.0
      %1170 = vmatpush1.msra.mxu0 0.0
      %1171 = vmatprep.subr.mxu0 0.0
      %1172 = vmatpush1.msra.mxu0 0.0
      %1173 = vmatprep.subr.mxu0 0.0
      %1174 = vmatpush1.msra.mxu0 0.0
      %1175 = vmatprep.subr.mxu0 0.0
      %1176 = vmatpush1.msra.mxu0 0.0
      %1177 = vmatprep.subr.mxu0 0.0
      %1178 = vmatpush1.msra.mxu0 0.0
      %1179 = vmatprep.subr.mxu0 0.0
      %1180 = vmatpush1.msra.mxu0 0.0
      %1181 = vmatprep.subr.mxu0 0.0
      %1182 = vmatpush1.msra.mxu0 0.0
      %1183 = vmatprep.subr.mxu0 0.0
      %1184 = vmatpush1.msra.mxu0 0.0
      %1185 = vmatprep.subr.mxu0 0.0
      %1186 = vmatpush1.msra.mxu0 0.0
      %1187 = vmatprep.subr.mxu0 0.0
      %1188 = vmatpush1.msra.mxu0 0.0
      %1189 = vmatprep.subr.mxu0 0.0
      %1190 = vmatpush1.msra.mxu0 0.0
      %1191 = vmatprep.subr.mxu0 0.0
      %1192 = vmatpush1.msra.mxu0 0.0
      %1193 = vmatprep.subr.mxu0 0.0
      %1194 = vmatpush1.msra.mxu0 0.0
      %1195 = vmatprep.mubr.f32.mxu0 0.0
      %1196 = vmatmul.mubr.f32.gmra.mrb[0].mxu0 %v1080
      %v1197 = vpop.f32.mrb[0].mxu0
      %v1198 = vadd.f32 %v1076, %v1197
      %v1199 = vpop.f32.mrb[0].mxu0
      %1200 = vmatprep.mubr.f32.mxu0 0.0
      %1201 = vmatmul.mubr.f32.gmra.mrb[0].mxu0 %v1083
      %v1202 = vpop.f32.mrb[0].mxu0
      %v1203 = vadd.f32 %v1076, %v1202
      %v1204 = vpop.f32.mrb[0].mxu0
      %1205 = vmatprep.mubr.f32.mxu0 0.0
      %1206 = vmatmul.mubr.f32.gmra.mrb[0].mxu0 %v1086
      %v1207 = vpop.f32.mrb[0].mxu0
      %v1208 = vadd.f32 %v1076, %v1207
      %v1209 = vpop.f32.mrb[0].mxu0
      %1210 = vmatprep.mubr.f32.mxu0 0.0
      %1211 = vmatmul.mubr.f32.gmra.mrb[0].mxu0 %v1089
      %v1212 = vpop.f32.mrb[0].mxu0
      %v1213 = vadd.f32 %v1076, %v1212
      %v1214 = vpop.f32.mrb[0].mxu0
      %1215 = vmatprep.mubr.f32.mxu0 0.0
      %1216 = vmatmul.mubr.f32.gmra.mrb[0].mxu0 %v1092
      %v1217 = vpop.f32.mrb[0].mxu0
      %v1218 = vadd.f32 %v1076, %v1217
      %v1219 = vpop.f32.mrb[0].mxu0
      %1220 = vmatprep.mubr.f32.mxu0 0.0
      %1221 = vmatmul.mubr.f32.gmra.mrb[0].mxu0 %v1095
      %v1222 = vpop.f32.mrb[0].mxu0
      %v1223 = vadd.f32 %v1076, %v1222
      %v1224 = vpop.f32.mrb[0].mxu0
      %1225 = vmatprep.mubr.f32.mxu0 0.0
      %1226 = vmatmul.mubr.f32.gmra.mrb[0].mxu0 %v1098
      %v1227 = vpop.f32.mrb[0].mxu0
      %v1228 = vadd.f32 %v1076, %v1227
      %v1229 = vpop.f32.mrb[0].mxu0
      %1230 = vmatprep.mubr.f32.mxu0 0.0
      %1231 = vmatmul.mubr.f32.gmra.mrb[0].mxu0 %v1101
      %v1232 = vpop.f32.mrb[0].mxu0
      %v1233 = vadd.f32 %v1076, %v1232
      %v1234 = vpop.f32.mrb[0].mxu0
      %1235 = vmatprep.mubr.f32.mxu0 0.0
      %1236 = vmatmul.mubr.f32.gmra.mrb[0].mxu0 %v1104
      %v1237 = vpop.f32.mrb[0].mxu0
      %v1238 = vadd.f32 %v1076, %v1237
      %v1239 = vpop.f32.mrb[0].mxu0
      %1240 = vmatprep.mubr.f32.mxu0 0.0
      %1241 = vmatmul.mubr.f32.gmra.mrb[0].mxu0 %v1107
      %v1242 = vpop.f32.mrb[0].mxu0
      %v1243 = vadd.f32 %v1076, %v1242
      %v1244 = vpop.f32.mrb[0].mxu0
      %1245 = vmatprep.mubr.f32.mxu0 0.0
      %1246 = vmatmul.mubr.f32.gmra.mrb[0].mxu0 %v1110
      %v1247 = vpop.f32.mrb[0].mxu0
      %v1248 = vadd.f32 %v1076, %v1247
      %v1249 = vpop.f32.mrb[0].mxu0
      %1250 = vmatprep.mubr.f32.mxu0 0.0
      %1251 = vmatmul.mubr.f32.gmra.mrb[0].mxu0 %v1113
      %v1252 = vpop.f32.mrb[0].mxu0
      %v1253 = vadd.f32 %v1076, %v1252
      %v1254 = vpop.f32.mrb[0].mxu0
      %1255 = vmatprep.mubr.f32.mxu0 0.0
      %1256 = vmatmul.mubr.f32.gmra.mrb[0].mxu0 %v1116
      %v1257 = vpop.f32.mrb[0].mxu0
      %v1258 = vadd.f32 %v1076, %v1257
      %v1259 = vpop.f32.mrb[0].mxu0
      %1260 = vmatprep.mubr.f32.mxu0 0.0
      %1261 = vmatmul.mubr.f32.gmra.mrb[0].mxu0 %v1119
      %v1262 = vpop.f32.mrb[0].mxu0
      %v1263 = vadd.f32 %v1076, %v1262
      %v1264 = vpop.f32.mrb[0].mxu0
      %1265 = vmatprep.mubr.f32.mxu0 0.0
      %1266 = vmatmul.mubr.f32.gmra.mrb[0].mxu0 %v1122
      %v1267 = vpop.f32.mrb[0].mxu0
      %v1268 = vadd.f32 %v1076, %v1267
      %v1269 = vpop.f32.mrb[0].mxu0
      %1270 = vmatprep.mubr.f32.mxu0 0.0
      %1271 = vmatmul.mubr.f32.gmra.mrb[0].mxu0 %v1125
      %v1272 = vpop.f32.mrb[0].mxu0
      %v1273 = vadd.f32 %v1076, %v1272
      %v1274 = vpop.f32.mrb[0].mxu0
      %1275 = vdwg.mxu0
      %v1276 = vmax.f32 %v1198, 0.0
      %v1277 = vmax.f32 %v1203, 0.0
      %v1278 = vmax.f32 %v1208, 0.0
      %v1279 = vmax.f32 %v1213, 0.0
      %v1280 = vmax.f32 %v1218, 0.0
      %v1281 = vmax.f32 %v1223, 0.0
      %v1282 = vmax.f32 %v1228, 0.0
      %v1283 = vmax.f32 %v1233, 0.0
      %v1284 = vmax.f32 %v1238, 0.0
      %v1285 = vmax.f32 %v1243, 0.0
      %v1286 = vmax.f32 %v1248, 0.0
      %v1287 = vmax.f32 %v1253, 0.0
      %v1288 = vmax.f32 %v1258, 0.0
      %v1289 = vmax.f32 %v1263, 0.0
      %v1290 = vmax.f32 %v1268, 0.0
      %v1291 = vmax.f32 %v1273, 0.0
      %s1292 = scalar_lea.vmem [#allocation3], 24
      %1293 = vst.msk [vmem:[%s1292 + $0x1] sm:$0xff] %vm225, %v1276
      %1294 = vst.msk [vmem:[%s1292 + $0x9] sm:$0xff] %vm225, %v1277
      %1295 = vst.msk [vmem:[%s1292 + $0x19] sm:$0xff] %vm225, %v1278
      %1296 = vst.msk [vmem:[%s1292 + $0x21] sm:$0xff] %vm225, %v1279
      %1297 = vst.msk [vmem:[%s1292 + $0x31] sm:$0xff] %vm225, %v1280
      %1298 = vst.msk [vmem:[%s1292 + $0x39] sm:$0xff] %vm225, %v1281
      %1299 = vst.msk [vmem:[%s1292 + $0x49] sm:$0xff] %vm225, %v1282
      %1300 = vst.msk [vmem:[%s1292 + $0x51] sm:$0xff] %vm225, %v1283
      %1301 = vst.msk [vmem:[%s1292 + $0x61] sm:$0xff] %vm225, %v1284
      %1302 = vst.msk [vmem:[%s1292 + $0x69] sm:$0xff] %vm225, %v1285
      %1303 = vst.msk [vmem:[%s1292 + $0x79] sm:$0xff] %vm225, %v1286
      %1304 = vst.msk [vmem:[%s1292 + $0x81] sm:$0xff] %vm225, %v1287
      %1305 = vst.msk [vmem:[%s1292 + $0x91] sm:$0xff] %vm225, %v1288
      %1306 = vst.msk [vmem:[%s1292 + $0x99] sm:$0xff] %vm225, %v1289
      %1307 = vst.msk [vmem:[%s1292 + $0xa9] sm:$0xff] %vm225, %v1290
      %1308 = vst.msk [vmem:[%s1292 + $0xb1] sm:$0xff] %vm225, %v1291
      %s1309 = scalar_lea.vmem [#allocation2], 192
      %v1310 = vld [vmem:[%s1309] sm:$0xff]
      %v1311 = vld [vmem:[%s1309 + $0x8] sm:$0xff]
      %v1312 = vld [vmem:[%s1309 + $0x10] sm:$0x3]
      %v1313 = vld [vmem:[%s1309 + $0x18] sm:$0xff]
      %v1314 = vld [vmem:[%s1309 + $0x20] sm:$0xff]
      %v1315 = vld [vmem:[%s1309 + $0x28] sm:$0x3]
      %v1316 = vld [vmem:[%s1309 + $0x30] sm:$0xff]
      %v1317 = vld [vmem:[%s1309 + $0x38] sm:$0xff]
      %v1318 = vld [vmem:[%s1309 + $0x40] sm:$0x3]
      %v1319 = vld [vmem:[%s1309 + $0x48] sm:$0xff]
      %v1320 = vld [vmem:[%s1309 + $0x50] sm:$0xff]
      %v1321 = vld [vmem:[%s1309 + $0x58] sm:$0x3]
      %v1322 = vld [vmem:[%s1309 + $0x60] sm:$0xff]
      %v1323 = vld [vmem:[%s1309 + $0x68] sm:$0xff]
      %v1324 = vld [vmem:[%s1309 + $0x70] sm:$0x3]
      %v1325 = vld [vmem:[%s1309 + $0x78] sm:$0xff]
      %v1326 = vld [vmem:[%s1309 + $0x80] sm:$0xff]
      %v1327 = vld [vmem:[%s1309 + $0x88] sm:$0x3]
      %v1328 = vld [vmem:[%s1309 + $0x90] sm:$0xff]
      %v1329 = vld [vmem:[%s1309 + $0x98] sm:$0xff]
      %v1330 = vld [vmem:[%s1309 + $0xa0] sm:$0x3]
      %v1331 = vld [vmem:[%s1309 + $0xa8] sm:$0xff]
      %v1332 = vld [vmem:[%s1309 + $0xb0] sm:$0xff]
      %v1333 = vld [vmem:[%s1309 + $0xb8] sm:$0x3]
      %v1334 = vld [vmem:[%s1309 + $0xc0] sm:$0xff]
      %v1335 = vld [vmem:[%s1309 + $0xc8] sm:$0xff]
      %v1336 = vld [vmem:[%s1309 + $0xd0] sm:$0x3]
      %v1337 = vld [vmem:[%s1309 + $0xd8] sm:$0xff]
      %v1338 = vld [vmem:[%s1309 + $0xe0] sm:$0xff]
      %v1339 = vld [vmem:[%s1309 + $0xe8] sm:$0x3]
      %v1364 = vrot.slane %v1310, 1
      %v1365 = vrot.slane %v1311, 1
      %v1366 = vsel %vm445, %v1364, %v1365
      %v1367 = vrot.slane %v1312, 1
      %v1368 = vsel %vm445, %v1365, %v1367
      %v1369 = vrot.slane %v1313, 1
      %v1370 = vrot.slane %v1314, 1
      %v1371 = vsel %vm445, %v1369, %v1370
      %v1372 = vrot.slane %v1315, 1
      %v1373 = vsel %vm445, %v1370, %v1372
      %v1374 = vrot.slane %v1316, 1
      %v1375 = vrot.slane %v1317, 1
      %v1376 = vsel %vm445, %v1374, %v1375
      %v1377 = vrot.slane %v1318, 1
      %v1378 = vsel %vm445, %v1375, %v1377
      %v1379 = vrot.slane %v1319, 1
      %v1380 = vrot.slane %v1320, 1
      %v1381 = vsel %vm445, %v1379, %v1380
      %v1382 = vrot.slane %v1321, 1
      %v1383 = vsel %vm445, %v1380, %v1382
      %v1384 = vrot.slane %v1322, 1
      %v1385 = vrot.slane %v1323, 1
      %v1386 = vsel %vm445, %v1384, %v1385
      %v1387 = vrot.slane %v1324, 1
      %v1388 = vsel %vm445, %v1385, %v1387
      %v1389 = vrot.slane %v1325, 1
      %v1390 = vrot.slane %v1326, 1
      %v1391 = vsel %vm445, %v1389, %v1390
      %v1392 = vrot.slane %v1327, 1
      %v1393 = vsel %vm445, %v1390, %v1392
      %v1394 = vrot.slane %v1328, 1
      %v1395 = vrot.slane %v1329, 1
      %v1396 = vsel %vm445, %v1394, %v1395
      %v1397 = vrot.slane %v1330, 1
      %v1398 = vsel %vm445, %v1395, %v1397
      %v1399 = vrot.slane %v1331, 1
      %v1400 = vrot.slane %v1332, 1
      %v1401 = vsel %vm445, %v1399, %v1400
      %v1402 = vrot.slane %v1333, 1
      %v1403 = vsel %vm445, %v1400, %v1402
      %1404 = vrot.lane.b32.xlu0 %v1366, 4
      %v1405 = vpop.permute.xlu0 %1404
      %1406 = vrot.lane.b32.xlu0 %v1368, 4
      %v1407 = vpop.permute.xlu0 %1406
      %1408 = vrot.lane.b32.xlu0 %v1371, 4
      %v1409 = vpop.permute.xlu0 %1408
      %1410 = vrot.lane.b32.xlu0 %v1373, 4
      %v1411 = vpop.permute.xlu0 %1410
      %1412 = vrot.lane.b32.xlu0 %v1376, 4
      %v1413 = vpop.permute.xlu0 %1412
      %1414 = vrot.lane.b32.xlu0 %v1378, 4
      %v1415 = vpop.permute.xlu0 %1414
      %1416 = vrot.lane.b32.xlu0 %v1381, 4
      %v1417 = vpop.permute.xlu0 %1416
      %1418 = vrot.lane.b32.xlu0 %v1383, 4
      %v1419 = vpop.permute.xlu0 %1418
      %1420 = vrot.lane.b32.xlu0 %v1386, 4
      %v1421 = vpop.permute.xlu0 %1420
      %1422 = vrot.lane.b32.xlu0 %v1388, 4
      %v1423 = vpop.permute.xlu0 %1422
      %1424 = vrot.lane.b32.xlu0 %v1391, 4
      %v1425 = vpop.permute.xlu0 %1424
      %1426 = vrot.lane.b32.xlu0 %v1393, 4
      %v1427 = vpop.permute.xlu0 %1426
      %1428 = vrot.lane.b32.xlu0 %v1396, 4
      %v1429 = vpop.permute.xlu0 %1428
      %1430 = vrot.lane.b32.xlu0 %v1398, 4
      %v1431 = vpop.permute.xlu0 %1430
      %1432 = vrot.lane.b32.xlu0 %v1401, 4
      %v1433 = vpop.permute.xlu0 %1432
      %1434 = vrot.lane.b32.xlu0 %v1403, 4
      %v1435 = vpop.permute.xlu0 %1434
      %v1452 = vrot.slane %v1310, 2
      %v1453 = vrot.slane %v1311, 2
      %v1454 = vsel %vm534, %v1452, %v1453
      %v1455 = vrot.slane %v1312, 2
      %v1456 = vsel %vm534, %v1453, %v1455
      %v1457 = vrot.slane %v1313, 2
      %v1458 = vrot.slane %v1314, 2
      %v1459 = vsel %vm534, %v1457, %v1458
      %v1460 = vrot.slane %v1315, 2
      %v1461 = vsel %vm534, %v1458, %v1460
      %v1462 = vrot.slane %v1316, 2
      %v1463 = vrot.slane %v1317, 2
      %v1464 = vsel %vm534, %v1462, %v1463
      %v1465 = vrot.slane %v1318, 2
      %v1466 = vsel %vm534, %v1463, %v1465
      %v1467 = vrot.slane %v1319, 2
      %v1468 = vrot.slane %v1320, 2
      %v1469 = vsel %vm534, %v1467, %v1468
      %v1470 = vrot.slane %v1321, 2
      %v1471 = vsel %vm534, %v1468, %v1470
      %v1472 = vrot.slane %v1322, 2
      %v1473 = vrot.slane %v1323, 2
      %v1474 = vsel %vm534, %v1472, %v1473
      %v1475 = vrot.slane %v1324, 2
      %v1476 = vsel %vm534, %v1473, %v1475
      %v1477 = vrot.slane %v1325, 2
      %v1478 = vrot.slane %v1326, 2
      %v1479 = vsel %vm534, %v1477, %v1478
      %v1480 = vrot.slane %v1327, 2
      %v1481 = vsel %vm534, %v1478, %v1480
      %v1482 = vrot.slane %v1328, 2
      %v1483 = vrot.slane %v1329, 2
      %v1484 = vsel %vm534, %v1482, %v1483
      %v1485 = vrot.slane %v1330, 2
      %v1486 = vsel %vm534, %v1483, %v1485
      %v1487 = vrot.slane %v1331, 2
      %v1488 = vrot.slane %v1332, 2
      %v1489 = vsel %vm534, %v1487, %v1488
      %v1490 = vrot.slane %v1333, 2
      %v1491 = vsel %vm534, %v1488, %v1490
      %1492 = vrot.lane.b32.xlu0 %v1454, 8
      %v1493 = vpop.permute.xlu0 %1492
      %1494 = vrot.lane.b32.xlu0 %v1456, 8
      %v1495 = vpop.permute.xlu0 %1494
      %1496 = vrot.lane.b32.xlu0 %v1459, 8
      %v1497 = vpop.permute.xlu0 %1496
      %1498 = vrot.lane.b32.xlu0 %v1461, 8
      %v1499 = vpop.permute.xlu0 %1498
      %1500 = vrot.lane.b32.xlu0 %v1464, 8
      %v1501 = vpop.permute.xlu0 %1500
      %1502 = vrot.lane.b32.xlu0 %v1466, 8
      %v1503 = vpop.permute.xlu0 %1502
      %1504 = vrot.lane.b32.xlu0 %v1469, 8
      %v1505 = vpop.permute.xlu0 %1504
      %1506 = vrot.lane.b32.xlu0 %v1471, 8
      %v1507 = vpop.permute.xlu0 %1506
      %1508 = vrot.lane.b32.xlu0 %v1474, 8
      %v1509 = vpop.permute.xlu0 %1508
      %1510 = vrot.lane.b32.xlu0 %v1476, 8
      %v1511 = vpop.permute.xlu0 %1510
      %1512 = vrot.lane.b32.xlu0 %v1479, 8
      %v1513 = vpop.permute.xlu0 %1512
      %1514 = vrot.lane.b32.xlu0 %v1481, 8
      %v1515 = vpop.permute.xlu0 %1514
      %1516 = vrot.lane.b32.xlu0 %v1484, 8
      %v1517 = vpop.permute.xlu0 %1516
      %1518 = vrot.lane.b32.xlu0 %v1486, 8
      %v1519 = vpop.permute.xlu0 %1518
      %1520 = vrot.lane.b32.xlu0 %v1489, 8
      %v1521 = vpop.permute.xlu0 %1520
      %1522 = vrot.lane.b32.xlu0 %v1491, 8
      %v1523 = vpop.permute.xlu0 %1522
      %1542 = vrot.lane.b32.xlu0 %v1313, 12
      %v1543 = vpop.permute.xlu0 %1542
      %1544 = vrot.lane.b32.xlu0 %v1314, 12
      %v1545 = vpop.permute.xlu0 %1544
      %1546 = vrot.lane.b32.xlu0 %v1316, 12
      %v1547 = vpop.permute.xlu0 %1546
      %1548 = vrot.lane.b32.xlu0 %v1317, 12
      %v1549 = vpop.permute.xlu0 %1548
      %1550 = vrot.lane.b32.xlu0 %v1319, 12
      %v1551 = vpop.permute.xlu0 %1550
      %1552 = vrot.lane.b32.xlu0 %v1320, 12
      %v1553 = vpop.permute.xlu0 %1552
      %1554 = vrot.lane.b32.xlu0 %v1322, 12
      %v1555 = vpop.permute.xlu0 %1554
      %1556 = vrot.lane.b32.xlu0 %v1323, 12
      %v1557 = vpop.permute.xlu0 %1556
      %1558 = vrot.lane.b32.xlu0 %v1325, 12
      %v1559 = vpop.permute.xlu0 %1558
      %1560 = vrot.lane.b32.xlu0 %v1326, 12
      %v1561 = vpop.permute.xlu0 %1560
      %1562 = vrot.lane.b32.xlu0 %v1328, 12
      %v1563 = vpop.permute.xlu0 %1562
      %1564 = vrot.lane.b32.xlu0 %v1329, 12
      %v1565 = vpop.permute.xlu0 %1564
      %1566 = vrot.lane.b32.xlu0 %v1331, 12
      %v1567 = vpop.permute.xlu0 %1566
      %1568 = vrot.lane.b32.xlu0 %v1332, 12
      %v1569 = vpop.permute.xlu0 %1568
      %1570 = vrot.lane.b32.xlu0 %v1334, 12
      %v1571 = vpop.permute.xlu0 %1570
      %1572 = vrot.lane.b32.xlu0 %v1335, 12
      %v1573 = vpop.permute.xlu0 %1572
      %v1591 = vrot.slane %v1334, 1
      %v1592 = vrot.slane %v1335, 1
      %v1593 = vsel %vm445, %v1591, %v1592
      %v1594 = vrot.slane %v1336, 1
      %v1595 = vsel %vm445, %v1592, %v1594
      %1596 = vrot.lane.b32.xlu0 %v1371, 16
      %v1597 = vpop.permute.xlu0 %1596
      %1598 = vrot.lane.b32.xlu0 %v1373, 16
      %v1599 = vpop.permute.xlu0 %1598
      %1600 = vrot.lane.b32.xlu0 %v1376, 16
      %v1601 = vpop.permute.xlu0 %1600
      %1602 = vrot.lane.b32.xlu0 %v1378, 16
      %v1603 = vpop.permute.xlu0 %1602
      %1604 = vrot.lane.b32.xlu0 %v1381, 16
      %v1605 = vpop.permute.xlu0 %1604
      %1606 = vrot.lane.b32.xlu0 %v1383, 16
      %v1607 = vpop.permute.xlu0 %1606
      %1608 = vrot.lane.b32.xlu0 %v1386, 16
      %v1609 = vpop.permute.xlu0 %1608
      %1610 = vrot.lane.b32.xlu0 %v1388, 16
      %v1611 = vpop.permute.xlu0 %1610
      %1612 = vrot.lane.b32.xlu0 %v1391, 16
      %v1613 = vpop.permute.xlu0 %1612
      %1614 = vrot.lane.b32.xlu0 %v1393, 16
      %v1615 = vpop.permute.xlu0 %1614
      %1616 = vrot.lane.b32.xlu0 %v1396, 16
      %v1617 = vpop.permute.xlu0 %1616
      %1618 = vrot.lane.b32.xlu0 %v1398, 16
      %v1619 = vpop.permute.xlu0 %1618
      %1620 = vrot.lane.b32.xlu0 %v1401, 16
      %v1621 = vpop.permute.xlu0 %1620
      %1622 = vrot.lane.b32.xlu0 %v1403, 16
      %v1623 = vpop.permute.xlu0 %1622
      %1624 = vrot.lane.b32.xlu0 %v1593, 16
      %v1625 = vpop.permute.xlu0 %1624
      %1626 = vrot.lane.b32.xlu0 %v1595, 16
      %v1627 = vpop.permute.xlu0 %1626
      %v1644 = vrot.slane %v1334, 2
      %v1645 = vrot.slane %v1335, 2
      %v1646 = vsel %vm534, %v1644, %v1645
      %v1647 = vrot.slane %v1336, 2
      %v1648 = vsel %vm534, %v1645, %v1647
      %1649 = vrot.lane.b32.xlu0 %v1459, 20
      %v1650 = vpop.permute.xlu0 %1649
      %1651 = vrot.lane.b32.xlu0 %v1461, 20
      %v1652 = vpop.permute.xlu0 %1651
      %1653 = vrot.lane.b32.xlu0 %v1464, 20
      %v1654 = vpop.permute.xlu0 %1653
      %1655 = vrot.lane.b32.xlu0 %v1466, 20
      %v1656 = vpop.permute.xlu0 %1655
      %1657 = vrot.lane.b32.xlu0 %v1469, 20
      %v1658 = vpop.permute.xlu0 %1657
      %1659 = vrot.lane.b32.xlu0 %v1471, 20
      %v1660 = vpop.permute.xlu0 %1659
      %1661 = vrot.lane.b32.xlu0 %v1474, 20
      %v1662 = vpop.permute.xlu0 %1661
      %1663 = vrot.lane.b32.xlu0 %v1476, 20
      %v1664 = vpop.permute.xlu0 %1663
      %1665 = vrot.lane.b32.xlu0 %v1479, 20
      %v1666 = vpop.permute.xlu0 %1665
      %1667 = vrot.lane.b32.xlu0 %v1481, 20
      %v1668 = vpop.permute.xlu0 %1667
      %1669 = vrot.lane.b32.xlu0 %v1484, 20
      %v1670 = vpop.permute.xlu0 %1669
      %1671 = vrot.lane.b32.xlu0 %v1486, 20
      %v1672 = vpop.permute.xlu0 %1671
      %1673 = vrot.lane.b32.xlu0 %v1489, 20
      %v1674 = vpop.permute.xlu0 %1673
      %1675 = vrot.lane.b32.xlu0 %v1491, 20
      %v1676 = vpop.permute.xlu0 %1675
      %1677 = vrot.lane.b32.xlu0 %v1646, 20
      %v1678 = vpop.permute.xlu0 %1677
      %1679 = vrot.lane.b32.xlu0 %v1648, 20
      %v1680 = vpop.permute.xlu0 %1679
      %1699 = vrot.lane.b32.xlu0 %v1316, 24
      %v1700 = vpop.permute.xlu0 %1699
      %1701 = vrot.lane.b32.xlu0 %v1317, 24
      %v1702 = vpop.permute.xlu0 %1701
      %1703 = vrot.lane.b32.xlu0 %v1319, 24
      %v1704 = vpop.permute.xlu0 %1703
      %1705 = vrot.lane.b32.xlu0 %v1320, 24
      %v1706 = vpop.permute.xlu0 %1705
      %1707 = vrot.lane.b32.xlu0 %v1322, 24
      %v1708 = vpop.permute.xlu0 %1707
      %1709 = vrot.lane.b32.xlu0 %v1323, 24
      %v1710 = vpop.permute.xlu0 %1709
      %1711 = vrot.lane.b32.xlu0 %v1325, 24
      %v1712 = vpop.permute.xlu0 %1711
      %1713 = vrot.lane.b32.xlu0 %v1326, 24
      %v1714 = vpop.permute.xlu0 %1713
      %1715 = vrot.lane.b32.xlu0 %v1328, 24
      %v1716 = vpop.permute.xlu0 %1715
      %1717 = vrot.lane.b32.xlu0 %v1329, 24
      %v1718 = vpop.permute.xlu0 %1717
      %1719 = vrot.lane.b32.xlu0 %v1331, 24
      %v1720 = vpop.permute.xlu0 %1719
      %1721 = vrot.lane.b32.xlu0 %v1332, 24
      %v1722 = vpop.permute.xlu0 %1721
      %1723 = vrot.lane.b32.xlu0 %v1334, 24
      %v1724 = vpop.permute.xlu0 %1723
      %1725 = vrot.lane.b32.xlu0 %v1335, 24
      %v1726 = vpop.permute.xlu0 %1725
      %1727 = vrot.lane.b32.xlu0 %v1337, 24
      %v1728 = vpop.permute.xlu0 %1727
      %1729 = vrot.lane.b32.xlu0 %v1338, 24
      %v1730 = vpop.permute.xlu0 %1729
      %v1748 = vrot.slane %v1337, 1
      %v1749 = vrot.slane %v1338, 1
      %v1750 = vsel %vm445, %v1748, %v1749
      %v1751 = vrot.slane %v1339, 1
      %v1752 = vsel %vm445, %v1749, %v1751
      %1753 = vrot.lane.b32.xlu0 %v1376, 28
      %v1754 = vpop.permute.xlu0 %1753
      %1755 = vrot.lane.b32.xlu0 %v1378, 28
      %v1756 = vpop.permute.xlu0 %1755
      %1757 = vrot.lane.b32.xlu0 %v1381, 28
      %v1758 = vpop.permute.xlu0 %1757
      %1759 = vrot.lane.b32.xlu0 %v1383, 28
      %v1760 = vpop.permute.xlu0 %1759
      %1761 = vrot.lane.b32.xlu0 %v1386, 28
      %v1762 = vpop.permute.xlu0 %1761
      %1763 = vrot.lane.b32.xlu0 %v1388, 28
      %v1764 = vpop.permute.xlu0 %1763
      %1765 = vrot.lane.b32.xlu0 %v1391, 28
      %v1766 = vpop.permute.xlu0 %1765
      %1767 = vrot.lane.b32.xlu0 %v1393, 28
      %v1768 = vpop.permute.xlu0 %1767
      %1769 = vrot.lane.b32.xlu0 %v1396, 28
      %v1770 = vpop.permute.xlu0 %1769
      %1771 = vrot.lane.b32.xlu0 %v1398, 28
      %v1772 = vpop.permute.xlu0 %1771
      %1773 = vrot.lane.b32.xlu0 %v1401, 28
      %v1774 = vpop.permute.xlu0 %1773
      %1775 = vrot.lane.b32.xlu0 %v1403, 28
      %v1776 = vpop.permute.xlu0 %1775
      %1777 = vrot.lane.b32.xlu0 %v1593, 28
      %v1778 = vpop.permute.xlu0 %1777
      %1779 = vrot.lane.b32.xlu0 %v1595, 28
      %v1780 = vpop.permute.xlu0 %1779
      %1781 = vrot.lane.b32.xlu0 %v1750, 28
      %v1782 = vpop.permute.xlu0 %1781
      %1783 = vrot.lane.b32.xlu0 %v1752, 28
      %v1784 = vpop.permute.xlu0 %1783
      %v1801 = vrot.slane %v1337, 2
      %v1802 = vrot.slane %v1338, 2
      %v1803 = vsel %vm534, %v1801, %v1802
      %v1804 = vrot.slane %v1339, 2
      %v1805 = vsel %vm534, %v1802, %v1804
      %1806 = vrot.lane.b32.xlu0 %v1464, 32
      %v1807 = vpop.permute.xlu0 %1806
      %1808 = vrot.lane.b32.xlu0 %v1466, 32
      %v1809 = vpop.permute.xlu0 %1808
      %1810 = vrot.lane.b32.xlu0 %v1469, 32
      %v1811 = vpop.permute.xlu0 %1810
      %1812 = vrot.lane.b32.xlu0 %v1471, 32
      %v1813 = vpop.permute.xlu0 %1812
      %1814 = vrot.lane.b32.xlu0 %v1474, 32
      %v1815 = vpop.permute.xlu0 %1814
      %1816 = vrot.lane.b32.xlu0 %v1476, 32
      %v1817 = vpop.permute.xlu0 %1816
      %1818 = vrot.lane.b32.xlu0 %v1479, 32
      %v1819 = vpop.permute.xlu0 %1818
      %1820 = vrot.lane.b32.xlu0 %v1481, 32
      %v1821 = vpop.permute.xlu0 %1820
      %1822 = vrot.lane.b32.xlu0 %v1484, 32
      %v1823 = vpop.permute.xlu0 %1822
      %1824 = vrot.lane.b32.xlu0 %v1486, 32
      %v1825 = vpop.permute.xlu0 %1824
      %1826 = vrot.lane.b32.xlu0 %v1489, 32
      %v1827 = vpop.permute.xlu0 %1826
      %1828 = vrot.lane.b32.xlu0 %v1491, 32
      %v1829 = vpop.permute.xlu0 %1828
      %1830 = vrot.lane.b32.xlu0 %v1646, 32
      %v1831 = vpop.permute.xlu0 %1830
      %1832 = vrot.lane.b32.xlu0 %v1648, 32
      %v1833 = vpop.permute.xlu0 %1832
      %1834 = vrot.lane.b32.xlu0 %v1803, 32
      %v1835 = vpop.permute.xlu0 %1834
      %1836 = vrot.lane.b32.xlu0 %v1805, 32
      %v1837 = vpop.permute.xlu0 %1836
      %v1854 = vsel %vm225, %v1310, %v1405
      %v1855 = vsel %vm225, %v1311, %v1407
      %v1856 = vsel %vm225, %v1313, %v1409
      %v1857 = vsel %vm225, %v1314, %v1411
      %v1858 = vsel %vm225, %v1316, %v1413
      %v1859 = vsel %vm225, %v1317, %v1415
      %v1860 = vsel %vm225, %v1319, %v1417
      %v1861 = vsel %vm225, %v1320, %v1419
      %v1862 = vsel %vm225, %v1322, %v1421
      %v1863 = vsel %vm225, %v1323, %v1423
      %v1864 = vsel %vm225, %v1325, %v1425
      %v1865 = vsel %vm225, %v1326, %v1427
      %v1866 = vsel %vm225, %v1328, %v1429
      %v1867 = vsel %vm225, %v1329, %v1431
      %v1868 = vsel %vm225, %v1331, %v1433
      %v1869 = vsel %vm225, %v1332, %v1435
      %v1870 = vsel %vm953, %v1854, %v1493
      %v1871 = vsel %vm953, %v1855, %v1495
      %v1872 = vsel %vm953, %v1856, %v1497
      %v1873 = vsel %vm953, %v1857, %v1499
      %v1874 = vsel %vm953, %v1858, %v1501
      %v1875 = vsel %vm953, %v1859, %v1503
      %v1876 = vsel %vm953, %v1860, %v1505
      %v1877 = vsel %vm953, %v1861, %v1507
      %v1878 = vsel %vm953, %v1862, %v1509
      %v1879 = vsel %vm953, %v1863, %v1511
      %v1880 = vsel %vm953, %v1864, %v1513
      %v1881 = vsel %vm953, %v1865, %v1515
      %v1882 = vsel %vm953, %v1866, %v1517
      %v1883 = vsel %vm953, %v1867, %v1519
      %v1884 = vsel %vm953, %v1868, %v1521
      %v1885 = vsel %vm953, %v1869, %v1523
      %v1886 = vsel %vm970, %v1870, %v1543
      %v1887 = vsel %vm970, %v1871, %v1545
      %v1888 = vsel %vm970, %v1872, %v1547
      %v1889 = vsel %vm970, %v1873, %v1549
      %v1890 = vsel %vm970, %v1874, %v1551
      %v1891 = vsel %vm970, %v1875, %v1553
      %v1892 = vsel %vm970, %v1876, %v1555
      %v1893 = vsel %vm970, %v1877, %v1557
      %v1894 = vsel %vm970, %v1878, %v1559
      %v1895 = vsel %vm970, %v1879, %v1561
      %v1896 = vsel %vm970, %v1880, %v1563
      %v1897 = vsel %vm970, %v1881, %v1565
      %v1898 = vsel %vm970, %v1882, %v1567
      %v1899 = vsel %vm970, %v1883, %v1569
      %v1900 = vsel %vm970, %v1884, %v1571
      %v1901 = vsel %vm970, %v1885, %v1573
      %v1902 = vsel %vm987, %v1886, %v1597
      %v1903 = vsel %vm987, %v1887, %v1599
      %v1904 = vsel %vm987, %v1888, %v1601
      %v1905 = vsel %vm987, %v1889, %v1603
      %v1906 = vsel %vm987, %v1890, %v1605
      %v1907 = vsel %vm987, %v1891, %v1607
      %v1908 = vsel %vm987, %v1892, %v1609
      %v1909 = vsel %vm987, %v1893, %v1611
      %v1910 = vsel %vm987, %v1894, %v1613
      %v1911 = vsel %vm987, %v1895, %v1615
      %v1912 = vsel %vm987, %v1896, %v1617
      %v1913 = vsel %vm987, %v1897, %v1619
      %v1914 = vsel %vm987, %v1898, %v1621
      %v1915 = vsel %vm987, %v1899, %v1623
      %v1916 = vsel %vm987, %v1900, %v1625
      %v1917 = vsel %vm987, %v1901, %v1627
      %v1918 = vsel %vm1004, %v1902, %v1650
      %v1919 = vsel %vm1004, %v1903, %v1652
      %v1920 = vsel %vm1004, %v1904, %v1654
      %v1921 = vsel %vm1004, %v1905, %v1656
      %v1922 = vsel %vm1004, %v1906, %v1658
      %v1923 = vsel %vm1004, %v1907, %v1660
      %v1924 = vsel %vm1004, %v1908, %v1662
      %v1925 = vsel %vm1004, %v1909, %v1664
      %v1926 = vsel %vm1004, %v1910, %v1666
      %v1927 = vsel %vm1004, %v1911, %v1668
      %v1928 = vsel %vm1004, %v1912, %v1670
      %v1929 = vsel %vm1004, %v1913, %v1672
      %v1930 = vsel %vm1004, %v1914, %v1674
      %v1931 = vsel %vm1004, %v1915, %v1676
      %v1932 = vsel %vm1004, %v1916, %v1678
      %v1933 = vsel %vm1004, %v1917, %v1680
      %v1934 = vsel %vm1021, %v1918, %v1700
      %v1935 = vsel %vm1021, %v1919, %v1702
      %v1936 = vsel %vm1021, %v1920, %v1704
      %v1937 = vsel %vm1021, %v1921, %v1706
      %v1938 = vsel %vm1021, %v1922, %v1708
      %v1939 = vsel %vm1021, %v1923, %v1710
      %v1940 = vsel %vm1021, %v1924, %v1712
      %v1941 = vsel %vm1021, %v1925, %v1714
      %v1942 = vsel %vm1021, %v1926, %v1716
      %v1943 = vsel %vm1021, %v1927, %v1718
      %v1944 = vsel %vm1021, %v1928, %v1720
      %v1945 = vsel %vm1021, %v1929, %v1722
      %v1946 = vsel %vm1021, %v1930, %v1724
      %v1947 = vsel %vm1021, %v1931, %v1726
      %v1948 = vsel %vm1021, %v1932, %v1728
      %v1949 = vsel %vm1021, %v1933, %v1730
      %v1950 = vsel %vm1038, %v1934, %v1754
      %v1951 = vsel %vm1038, %v1935, %v1756
      %v1952 = vsel %vm1038, %v1936, %v1758
      %v1953 = vsel %vm1038, %v1937, %v1760
      %v1954 = vsel %vm1038, %v1938, %v1762
      %v1955 = vsel %vm1038, %v1939, %v1764
      %v1956 = vsel %vm1038, %v1940, %v1766
      %v1957 = vsel %vm1038, %v1941, %v1768
      %v1958 = vsel %vm1038, %v1942, %v1770
      %v1959 = vsel %vm1038, %v1943, %v1772
      %v1960 = vsel %vm1038, %v1944, %v1774
      %v1961 = vsel %vm1038, %v1945, %v1776
      %v1962 = vsel %vm1038, %v1946, %v1778
      %v1963 = vsel %vm1038, %v1947, %v1780
      %v1964 = vsel %vm1038, %v1948, %v1782
      %v1965 = vsel %vm1038, %v1949, %v1784
      %v1966 = vsel %vm1055, %v1950, %v1807
      %v1967 = vsel %vm1055, %v1951, %v1809
      %v1968 = vsel %vm1055, %v1952, %v1811
      %v1969 = vsel %vm1055, %v1953, %v1813
      %v1970 = vsel %vm1055, %v1954, %v1815
      %v1971 = vsel %vm1055, %v1955, %v1817
      %v1972 = vsel %vm1055, %v1956, %v1819
      %v1973 = vsel %vm1055, %v1957, %v1821
      %v1974 = vsel %vm1055, %v1958, %v1823
      %v1975 = vsel %vm1055, %v1959, %v1825
      %v1976 = vsel %vm1055, %v1960, %v1827
      %v1977 = vsel %vm1055, %v1961, %v1829
      %v1978 = vsel %vm1055, %v1962, %v1831
      %v1979 = vsel %vm1055, %v1963, %v1833
      %v1980 = vsel %vm1055, %v1964, %v1835
      %v1981 = vsel %vm1055, %v1965, %v1837
      %v1983 = vsel %vm1078, %v1966, 0
      %v1986 = vsel %vm1078, %v1967, 0
      %v1989 = vsel %vm1078, %v1968, 0
      %v1992 = vsel %vm1078, %v1969, 0
      %v1995 = vsel %vm1078, %v1970, 0
      %v1998 = vsel %vm1078, %v1971, 0
      %v2001 = vsel %vm1078, %v1972, 0
      %v2004 = vsel %vm1078, %v1973, 0
      %v2007 = vsel %vm1078, %v1974, 0
      %v2010 = vsel %vm1078, %v1975, 0
      %v2013 = vsel %vm1078, %v1976, 0
      %v2016 = vsel %vm1078, %v1977, 0
      %v2019 = vsel %vm1078, %v1978, 0
      %v2022 = vsel %vm1078, %v1979, 0
      %v2025 = vsel %vm1078, %v1980, 0
      %v2028 = vsel %vm1078, %v1981, 0
      %2030 = vmatprep.subr.mxu0 0.0
      %2031 = vmatpush1.msra.mxu0 %v379
      %2032 = vmatprep.subr.mxu0 0.0
      %2033 = vmatpush1.msra.mxu0 %v380
      %2034 = vmatprep.subr.mxu0 0.0
      %2035 = vmatpush1.msra.mxu0 %v381
      %2036 = vmatprep.subr.mxu0 0.0
      %2037 = vmatpush1.msra.mxu0 %v382
      %2038 = vmatprep.subr.mxu0 0.0
      %2039 = vmatpush1.msra.mxu0 %v1129
      %2040 = vmatprep.subr.mxu0 0.0
      %2041 = vmatpush1.msra.mxu0 0.0
      %2042 = vmatprep.subr.mxu0 0.0
      %2043 = vmatpush1.msra.mxu0 0.0
      %2044 = vmatprep.subr.mxu0 0.0
      %2045 = vmatpush1.msra.mxu0 0.0
      %2046 = vmatprep.subr.mxu0 0.0
      %2047 = vmatpush1.msra.mxu0 0.0
      %2048 = vmatprep.subr.mxu0 0.0
      %2049 = vmatpush1.msra.mxu0 0.0
      %2050 = vmatprep.subr.mxu0 0.0
      %2051 = vmatpush1.msra.mxu0 0.0
      %2052 = vmatprep.subr.mxu0 0.0
      %2053 = vmatpush1.msra.mxu0 0.0
      %2054 = vmatprep.subr.mxu0 0.0
      %2055 = vmatpush1.msra.mxu0 0.0
      %2056 = vmatprep.subr.mxu0 0.0
      %2057 = vmatpush1.msra.mxu0 0.0
      %2058 = vmatprep.subr.mxu0 0.0
      %2059 = vmatpush1.msra.mxu0 0.0
      %2060 = vmatprep.subr.mxu0 0.0
      %2061 = vmatpush1.msra.mxu0 0.0
      %2062 = vmatprep.subr.mxu0 0.0
      %2063 = vmatpush1.msra.mxu0 0.0
      %2064 = vmatprep.subr.mxu0 0.0
      %2065 = vmatpush1.msra.mxu0 0.0
      %2066 = vmatprep.subr.mxu0 0.0
      %2067 = vmatpush1.msra.mxu0 0.0
      %2068 = vmatprep.subr.mxu0 0.0
      %2069 = vmatpush1.msra.mxu0 0.0
      %2070 = vmatprep.subr.mxu0 0.0
      %2071 = vmatpush1.msra.mxu0 0.0
      %2072 = vmatprep.subr.mxu0 0.0
      %2073 = vmatpush1.msra.mxu0 0.0
      %2074 = vmatprep.subr.mxu0 0.0
      %2075 = vmatpush1.msra.mxu0 0.0
      %2076 = vmatprep.subr.mxu0 0.0
      %2077 = vmatpush1.msra.mxu0 0.0
      %2078 = vmatprep.subr.mxu0 0.0
      %2079 = vmatpush1.msra.mxu0 0.0
      %2080 = vmatprep.subr.mxu0 0.0
      %2081 = vmatpush1.msra.mxu0 0.0
      %2082 = vmatprep.subr.mxu0 0.0
      %2083 = vmatpush1.msra.mxu0 0.0
      %2084 = vmatprep.subr.mxu0 0.0
      %2085 = vmatpush1.msra.mxu0 0.0
      %2086 = vmatprep.subr.mxu0 0.0
      %2087 = vmatpush1.msra.mxu0 0.0
      %2088 = vmatprep.subr.mxu0 0.0
      %2089 = vmatpush1.msra.mxu0 0.0
      %2090 = vmatprep.subr.mxu0 0.0
      %2091 = vmatpush1.msra.mxu0 0.0
      %2092 = vmatprep.subr.mxu0 0.0
      %2093 = vmatpush1.msra.mxu0 0.0
      %2094 = vmatprep.mubr.f32.mxu0 0.0
      %2095 = vmatmul.mubr.f32.gmra.mrb[0].mxu0 %v1983
      %v2096 = vpop.f32.mrb[0].mxu0
      %v2097 = vadd.f32 %v1076, %v2096
      %v2098 = vpop.f32.mrb[0].mxu0
      %2099 = vmatprep.mubr.f32.mxu0 0.0
      %2100 = vmatmul.mubr.f32.gmra.mrb[0].mxu0 %v1986
      %v2101 = vpop.f32.mrb[0].mxu0
      %v2102 = vadd.f32 %v1076, %v2101
      %v2103 = vpop.f32.mrb[0].mxu0
      %2104 = vmatprep.mubr.f32.mxu0 0.0
      %2105 = vmatmul.mubr.f32.gmra.mrb[0].mxu0 %v1989
      %v2106 = vpop.f32.mrb[0].mxu0
      %v2107 = vadd.f32 %v1076, %v2106
      %v2108 = vpop.f32.mrb[0].mxu0
      %2109 = vmatprep.mubr.f32.mxu0 0.0
      %2110 = vmatmul.mubr.f32.gmra.mrb[0].mxu0 %v1992
      %v2111 = vpop.f32.mrb[0].mxu0
      %v2112 = vadd.f32 %v1076, %v2111
      %v2113 = vpop.f32.mrb[0].mxu0
      %2114 = vmatprep.mubr.f32.mxu0 0.0
      %2115 = vmatmul.mubr.f32.gmra.mrb[0].mxu0 %v1995
      %v2116 = vpop.f32.mrb[0].mxu0
      %v2117 = vadd.f32 %v1076, %v2116
      %v2118 = vpop.f32.mrb[0].mxu0
      %2119 = vmatprep.mubr.f32.mxu0 0.0
      %2120 = vmatmul.mubr.f32.gmra.mrb[0].mxu0 %v1998
      %v2121 = vpop.f32.mrb[0].mxu0
      %v2122 = vadd.f32 %v1076, %v2121
      %v2123 = vpop.f32.mrb[0].mxu0
      %2124 = vmatprep.mubr.f32.mxu0 0.0
      %2125 = vmatmul.mubr.f32.gmra.mrb[0].mxu0 %v2001
      %v2126 = vpop.f32.mrb[0].mxu0
      %v2127 = vadd.f32 %v1076, %v2126
      %v2128 = vpop.f32.mrb[0].mxu0
      %2129 = vmatprep.mubr.f32.mxu0 0.0
      %2130 = vmatmul.mubr.f32.gmra.mrb[0].mxu0 %v2004
      %v2131 = vpop.f32.mrb[0].mxu0
      %v2132 = vadd.f32 %v1076, %v2131
      %v2133 = vpop.f32.mrb[0].mxu0
      %2134 = vmatprep.mubr.f32.mxu0 0.0
      %2135 = vmatmul.mubr.f32.gmra.mrb[0].mxu0 %v2007
      %v2136 = vpop.f32.mrb[0].mxu0
      %v2137 = vadd.f32 %v1076, %v2136
      %v2138 = vpop.f32.mrb[0].mxu0
      %2139 = vmatprep.mubr.f32.mxu0 0.0
      %2140 = vmatmul.mubr.f32.gmra.mrb[0].mxu0 %v2010
      %v2141 = vpop.f32.mrb[0].mxu0
      %v2142 = vadd.f32 %v1076, %v2141
      %v2143 = vpop.f32.mrb[0].mxu0
      %2144 = vmatprep.mubr.f32.mxu0 0.0
      %2145 = vmatmul.mubr.f32.gmra.mrb[0].mxu0 %v2013
      %v2146 = vpop.f32.mrb[0].mxu0
      %v2147 = vadd.f32 %v1076, %v2146
      %v2148 = vpop.f32.mrb[0].mxu0
      %2149 = vmatprep.mubr.f32.mxu0 0.0
      %2150 = vmatmul.mubr.f32.gmra.mrb[0].mxu0 %v2016
      %v2151 = vpop.f32.mrb[0].mxu0
      %v2152 = vadd.f32 %v1076, %v2151
      %v2153 = vpop.f32.mrb[0].mxu0
      %2154 = vmatprep.mubr.f32.mxu0 0.0
      %2155 = vmatmul.mubr.f32.gmra.mrb[0].mxu0 %v2019
      %v2156 = vpop.f32.mrb[0].mxu0
      %v2157 = vadd.f32 %v1076, %v2156
      %v2158 = vpop.f32.mrb[0].mxu0
      %2159 = vmatprep.mubr.f32.mxu0 0.0
      %2160 = vmatmul.mubr.f32.gmra.mrb[0].mxu0 %v2022
      %v2161 = vpop.f32.mrb[0].mxu0
      %v2162 = vadd.f32 %v1076, %v2161
      %v2163 = vpop.f32.mrb[0].mxu0
      %2164 = vmatprep.mubr.f32.mxu0 0.0
      %2165 = vmatmul.mubr.f32.gmra.mrb[0].mxu0 %v2025
      %v2166 = vpop.f32.mrb[0].mxu0
      %v2167 = vadd.f32 %v1076, %v2166
      %v2168 = vpop.f32.mrb[0].mxu0
      %2169 = vmatprep.mubr.f32.mxu0 0.0
      %2170 = vmatmul.mubr.f32.gmra.mrb[0].mxu0 %v2028
      %v2171 = vpop.f32.mrb[0].mxu0
      %v2172 = vadd.f32 %v1076, %v2171
      %v2173 = vpop.f32.mrb[0].mxu0
      %2174 = vdwg.mxu0
      %v2175 = vmax.f32 %v2097, 0.0
      %v2176 = vmax.f32 %v2102, 0.0
      %v2177 = vmax.f32 %v2107, 0.0
      %v2178 = vmax.f32 %v2112, 0.0
      %v2179 = vmax.f32 %v2117, 0.0
      %v2180 = vmax.f32 %v2122, 0.0
      %v2181 = vmax.f32 %v2127, 0.0
      %v2182 = vmax.f32 %v2132, 0.0
      %v2183 = vmax.f32 %v2137, 0.0
      %v2184 = vmax.f32 %v2142, 0.0
      %v2185 = vmax.f32 %v2147, 0.0
      %v2186 = vmax.f32 %v2152, 0.0
      %v2187 = vmax.f32 %v2157, 0.0
      %v2188 = vmax.f32 %v2162, 0.0
      %v2189 = vmax.f32 %v2167, 0.0
      %v2190 = vmax.f32 %v2172, 0.0
      %s2191 = scalar_lea.vmem [#allocation3], 216
      %2192 = vst.msk [vmem:[%s2191 + $0x1] sm:$0xff] %vm225, %v2175
      %2193 = vst.msk [vmem:[%s2191 + $0x9] sm:$0xff] %vm225, %v2176
      %2194 = vst.msk [vmem:[%s2191 + $0x19] sm:$0xff] %vm225, %v2177
      %2195 = vst.msk [vmem:[%s2191 + $0x21] sm:$0xff] %vm225, %v2178
      %2196 = vst.msk [vmem:[%s2191 + $0x31] sm:$0xff] %vm225, %v2179
      %2197 = vst.msk [vmem:[%s2191 + $0x39] sm:$0xff] %vm225, %v2180
      %2198 = vst.msk [vmem:[%s2191 + $0x49] sm:$0xff] %vm225, %v2181
      %2199 = vst.msk [vmem:[%s2191 + $0x51] sm:$0xff] %vm225, %v2182
      %2200 = vst.msk [vmem:[%s2191 + $0x61] sm:$0xff] %vm225, %v2183
      %2201 = vst.msk [vmem:[%s2191 + $0x69] sm:$0xff] %vm225, %v2184
      %2202 = vst.msk [vmem:[%s2191 + $0x79] sm:$0xff] %vm225, %v2185
      %2203 = vst.msk [vmem:[%s2191 + $0x81] sm:$0xff] %vm225, %v2186
      %2204 = vst.msk [vmem:[%s2191 + $0x91] sm:$0xff] %vm225, %v2187
      %2205 = vst.msk [vmem:[%s2191 + $0x99] sm:$0xff] %vm225, %v2188
      %2206 = vst.msk [vmem:[%s2191 + $0xa9] sm:$0xff] %vm225, %v2189
      %2207 = vst.msk [vmem:[%s2191 + $0xb1] sm:$0xff] %vm225, %v2190
      %v2208 = vld [vmem:[#allocation3] sm:$0xff]
      %v2209 = vld [vmem:[#allocation3 + $0x8] sm:$0xff]
      %v2210 = vld [vmem:[#allocation3 + $0x10] sm:$0x3]
      %v2211 = vld [vmem:[#allocation3 + $0x18] sm:$0xff]
      %v2212 = vld [vmem:[#allocation3 + $0x20] sm:$0xff]
      %v2213 = vld [vmem:[#allocation3 + $0x28] sm:$0x3]
      %v2214 = vld [vmem:[#allocation3 + $0x30] sm:$0xff]
      %v2215 = vld [vmem:[#allocation3 + $0x38] sm:$0xff]
      %v2216 = vld [vmem:[#allocation3 + $0x40] sm:$0x3]
      %v2217 = vld [vmem:[#allocation3 + $0x48] sm:$0xff]
      %v2218 = vld [vmem:[#allocation3 + $0x50] sm:$0xff]
      %v2219 = vld [vmem:[#allocation3 + $0x58] sm:$0x3]
      %v2220 = vld [vmem:[#allocation3 + $0x60] sm:$0xff]
      %v2221 = vld [vmem:[#allocation3 + $0x68] sm:$0xff]
      %v2222 = vld [vmem:[#allocation3 + $0x70] sm:$0x3]
      %v2223 = vld [vmem:[#allocation3 + $0x78] sm:$0xff]
      %v2224 = vld [vmem:[#allocation3 + $0x80] sm:$0xff]
      %v2225 = vld [vmem:[#allocation3 + $0x88] sm:$0x3]
      %v2226 = vld [vmem:[#allocation3 + $0x90] sm:$0xff]
      %v2227 = vld [vmem:[#allocation3 + $0x98] sm:$0xff]
      %v2228 = vld [vmem:[#allocation3 + $0xa0] sm:$0x3]
      %v2229 = vld [vmem:[#allocation3 + $0xa8] sm:$0xff]
      %v2230 = vld [vmem:[#allocation3 + $0xb0] sm:$0xff]
      %v2231 = vld [vmem:[#allocation3 + $0xb8] sm:$0x3]
      %v2232 = vld [vmem:[#allocation3 + $0xc0] sm:$0xff]
      %v2233 = vld [vmem:[#allocation3 + $0xc8] sm:$0xff]
      %v2234 = vld [vmem:[#allocation3 + $0xd0] sm:$0x3]
      %v2235 = vld [vmem:[#allocation3 + $0xd8] sm:$0xff]
      %v2236 = vld [vmem:[#allocation3 + $0xe0] sm:$0xff]
      %v2237 = vld [vmem:[#allocation3 + $0xe8] sm:$0x3]
      %v2262 = vrot.slane %v2208, 1
      %v2263 = vrot.slane %v2209, 1
      %v2264 = vsel %vm445, %v2262, %v2263
      %v2265 = vrot.slane %v2210, 1
      %v2266 = vsel %vm445, %v2263, %v2265
      %v2267 = vrot.slane %v2211, 1
      %v2268 = vrot.slane %v2212, 1
      %v2269 = vsel %vm445, %v2267, %v2268
      %v2270 = vrot.slane %v2213, 1
      %v2271 = vsel %vm445, %v2268, %v2270
      %v2272 = vrot.slane %v2214, 1
      %v2273 = vrot.slane %v2215, 1
      %v2274 = vsel %vm445, %v2272, %v2273
      %v2275 = vrot.slane %v2216, 1
      %v2276 = vsel %vm445, %v2273, %v2275
      %v2277 = vrot.slane %v2217, 1
      %v2278 = vrot.slane %v2218, 1
      %v2279 = vsel %vm445, %v2277, %v2278
      %v2280 = vrot.slane %v2219, 1
      %v2281 = vsel %vm445, %v2278, %v2280
      %v2282 = vrot.slane %v2220, 1
      %v2283 = vrot.slane %v2221, 1
      %v2284 = vsel %vm445, %v2282, %v2283
      %v2285 = vrot.slane %v2222, 1
      %v2286 = vsel %vm445, %v2283, %v2285
      %v2287 = vrot.slane %v2223, 1
      %v2288 = vrot.slane %v2224, 1
      %v2289 = vsel %vm445, %v2287, %v2288
      %v2290 = vrot.slane %v2225, 1
      %v2291 = vsel %vm445, %v2288, %v2290
      %v2292 = vrot.slane %v2226, 1
      %v2293 = vrot.slane %v2227, 1
      %v2294 = vsel %vm445, %v2292, %v2293
      %v2295 = vrot.slane %v2228, 1
      %v2296 = vsel %vm445, %v2293, %v2295
      %v2297 = vrot.slane %v2229, 1
      %v2298 = vrot.slane %v2230, 1
      %v2299 = vsel %vm445, %v2297, %v2298
      %v2300 = vrot.slane %v2231, 1
      %v2301 = vsel %vm445, %v2298, %v2300
      %2302 = vrot.lane.b32.xlu0 %v2264, 4
      %v2303 = vpop.permute.xlu0 %2302
      %2304 = vrot.lane.b32.xlu0 %v2266, 4
      %v2305 = vpop.permute.xlu0 %2304
      %2306 = vrot.lane.b32.xlu0 %v2269, 4
      %v2307 = vpop.permute.xlu0 %2306
      %2308 = vrot.lane.b32.xlu0 %v2271, 4
      %v2309 = vpop.permute.xlu0 %2308
      %2310 = vrot.lane.b32.xlu0 %v2274, 4
      %v2311 = vpop.permute.xlu0 %2310
      %2312 = vrot.lane.b32.xlu0 %v2276, 4
      %v2313 = vpop.permute.xlu0 %2312
      %2314 = vrot.lane.b32.xlu0 %v2279, 4
      %v2315 = vpop.permute.xlu0 %2314
      %2316 = vrot.lane.b32.xlu0 %v2281, 4
      %v2317 = vpop.permute.xlu0 %2316
      %2318 = vrot.lane.b32.xlu0 %v2284, 4
      %v2319 = vpop.permute.xlu0 %2318
      %2320 = vrot.lane.b32.xlu0 %v2286, 4
      %v2321 = vpop.permute.xlu0 %2320
      %2322 = vrot.lane.b32.xlu0 %v2289, 4
      %v2323 = vpop.permute.xlu0 %2322
      %2324 = vrot.lane.b32.xlu0 %v2291, 4
      %v2325 = vpop.permute.xlu0 %2324
      %2326 = vrot.lane.b32.xlu0 %v2294, 4
      %v2327 = vpop.permute.xlu0 %2326
      %2328 = vrot.lane.b32.xlu0 %v2296, 4
      %v2329 = vpop.permute.xlu0 %2328
      %2330 = vrot.lane.b32.xlu0 %v2299, 4
      %v2331 = vpop.permute.xlu0 %2330
      %2332 = vrot.lane.b32.xlu0 %v2301, 4
      %v2333 = vpop.permute.xlu0 %2332
      %v2350 = vrot.slane %v2208, 2
      %v2351 = vrot.slane %v2209, 2
      %v2352 = vsel %vm534, %v2350, %v2351
      %v2353 = vrot.slane %v2210, 2
      %v2354 = vsel %vm534, %v2351, %v2353
      %v2355 = vrot.slane %v2211, 2
      %v2356 = vrot.slane %v2212, 2
      %v2357 = vsel %vm534, %v2355, %v2356
      %v2358 = vrot.slane %v2213, 2
      %v2359 = vsel %vm534, %v2356, %v2358
      %v2360 = vrot.slane %v2214, 2
      %v2361 = vrot.slane %v2215, 2
      %v2362 = vsel %vm534, %v2360, %v2361
      %v2363 = vrot.slane %v2216, 2
      %v2364 = vsel %vm534, %v2361, %v2363
      %v2365 = vrot.slane %v2217, 2
      %v2366 = vrot.slane %v2218, 2
      %v2367 = vsel %vm534, %v2365, %v2366
      %v2368 = vrot.slane %v2219, 2
      %v2369 = vsel %vm534, %v2366, %v2368
      %v2370 = vrot.slane %v2220, 2
      %v2371 = vrot.slane %v2221, 2
      %v2372 = vsel %vm534, %v2370, %v2371
      %v2373 = vrot.slane %v2222, 2
      %v2374 = vsel %vm534, %v2371, %v2373
      %v2375 = vrot.slane %v2223, 2
      %v2376 = vrot.slane %v2224, 2
      %v2377 = vsel %vm534, %v2375, %v2376
      %v2378 = vrot.slane %v2225, 2
      %v2379 = vsel %vm534, %v2376, %v2378
      %v2380 = vrot.slane %v2226, 2
      %v2381 = vrot.slane %v2227, 2
      %v2382 = vsel %vm534, %v2380, %v2381
      %v2383 = vrot.slane %v2228, 2
      %v2384 = vsel %vm534, %v2381, %v2383
      %v2385 = vrot.slane %v2229, 2
      %v2386 = vrot.slane %v2230, 2
      %v2387 = vsel %vm534, %v2385, %v2386
      %v2388 = vrot.slane %v2231, 2
      %v2389 = vsel %vm534, %v2386, %v2388
      %2390 = vrot.lane.b32.xlu0 %v2352, 8
      %v2391 = vpop.permute.xlu0 %2390
      %2392 = vrot.lane.b32.xlu0 %v2354, 8
      %v2393 = vpop.permute.xlu0 %2392
      %2394 = vrot.lane.b32.xlu0 %v2357, 8
      %v2395 = vpop.permute.xlu0 %2394
      %2396 = vrot.lane.b32.xlu0 %v2359, 8
      %v2397 = vpop.permute.xlu0 %2396
      %2398 = vrot.lane.b32.xlu0 %v2362, 8
      %v2399 = vpop.permute.xlu0 %2398
      %2400 = vrot.lane.b32.xlu0 %v2364, 8
      %v2401 = vpop.permute.xlu0 %2400
      %2402 = vrot.lane.b32.xlu0 %v2367, 8
      %v2403 = vpop.permute.xlu0 %2402
      %2404 = vrot.lane.b32.xlu0 %v2369, 8
      %v2405 = vpop.permute.xlu0 %2404
      %2406 = vrot.lane.b32.xlu0 %v2372, 8
      %v2407 = vpop.permute.xlu0 %2406
      %2408 = vrot.lane.b32.xlu0 %v2374, 8
      %v2409 = vpop.permute.xlu0 %2408
      %2410 = vrot.lane.b32.xlu0 %v2377, 8
      %v2411 = vpop.permute.xlu0 %2410
      %2412 = vrot.lane.b32.xlu0 %v2379, 8
      %v2413 = vpop.permute.xlu0 %2412
      %2414 = vrot.lane.b32.xlu0 %v2382, 8
      %v2415 = vpop.permute.xlu0 %2414
      %2416 = vrot.lane.b32.xlu0 %v2384, 8
      %v2417 = vpop.permute.xlu0 %2416
      %2418 = vrot.lane.b32.xlu0 %v2387, 8
      %v2419 = vpop.permute.xlu0 %2418
      %2420 = vrot.lane.b32.xlu0 %v2389, 8
      %v2421 = vpop.permute.xlu0 %2420
      %2440 = vrot.lane.b32.xlu0 %v2211, 12
      %v2441 = vpop.permute.xlu0 %2440
      %2442 = vrot.lane.b32.xlu0 %v2212, 12
      %v2443 = vpop.permute.xlu0 %2442
      %2444 = vrot.lane.b32.xlu0 %v2214, 12
      %v2445 = vpop.permute.xlu0 %2444
      %2446 = vrot.lane.b32.xlu0 %v2215, 12
      %v2447 = vpop.permute.xlu0 %2446
      %2448 = vrot.lane.b32.xlu0 %v2217, 12
      %v2449 = vpop.permute.xlu0 %2448
      %2450 = vrot.lane.b32.xlu0 %v2218, 12
      %v2451 = vpop.permute.xlu0 %2450
      %2452 = vrot.lane.b32.xlu0 %v2220, 12
      %v2453 = vpop.permute.xlu0 %2452
      %2454 = vrot.lane.b32.xlu0 %v2221, 12
      %v2455 = vpop.permute.xlu0 %2454
      %2456 = vrot.lane.b32.xlu0 %v2223, 12
      %v2457 = vpop.permute.xlu0 %2456
      %2458 = vrot.lane.b32.xlu0 %v2224, 12
      %v2459 = vpop.permute.xlu0 %2458
      %2460 = vrot.lane.b32.xlu0 %v2226, 12
      %v2461 = vpop.permute.xlu0 %2460
      %2462 = vrot.lane.b32.xlu0 %v2227, 12
      %v2463 = vpop.permute.xlu0 %2462
      %2464 = vrot.lane.b32.xlu0 %v2229, 12
      %v2465 = vpop.permute.xlu0 %2464
      %2466 = vrot.lane.b32.xlu0 %v2230, 12
      %v2467 = vpop.permute.xlu0 %2466
      %2468 = vrot.lane.b32.xlu0 %v2232, 12
      %v2469 = vpop.permute.xlu0 %2468
      %2470 = vrot.lane.b32.xlu0 %v2233, 12
      %v2471 = vpop.permute.xlu0 %2470
      %v2489 = vrot.slane %v2232, 1
      %v2490 = vrot.slane %v2233, 1
      %v2491 = vsel %vm445, %v2489, %v2490
      %v2492 = vrot.slane %v2234, 1
      %v2493 = vsel %vm445, %v2490, %v2492
      %2494 = vrot.lane.b32.xlu0 %v2269, 16
      %v2495 = vpop.permute.xlu0 %2494
      %2496 = vrot.lane.b32.xlu0 %v2271, 16
      %v2497 = vpop.permute.xlu0 %2496
      %2498 = vrot.lane.b32.xlu0 %v2274, 16
      %v2499 = vpop.permute.xlu0 %2498
      %2500 = vrot.lane.b32.xlu0 %v2276, 16
      %v2501 = vpop.permute.xlu0 %2500
      %2502 = vrot.lane.b32.xlu0 %v2279, 16
      %v2503 = vpop.permute.xlu0 %2502
      %2504 = vrot.lane.b32.xlu0 %v2281, 16
      %v2505 = vpop.permute.xlu0 %2504
      %2506 = vrot.lane.b32.xlu0 %v2284, 16
      %v2507 = vpop.permute.xlu0 %2506
      %2508 = vrot.lane.b32.xlu0 %v2286, 16
      %v2509 = vpop.permute.xlu0 %2508
      %2510 = vrot.lane.b32.xlu0 %v2289, 16
      %v2511 = vpop.permute.xlu0 %2510
      %2512 = vrot.lane.b32.xlu0 %v2291, 16
      %v2513 = vpop.permute.xlu0 %2512
      %2514 = vrot.lane.b32.xlu0 %v2294, 16
      %v2515 = vpop.permute.xlu0 %2514
      %2516 = vrot.lane.b32.xlu0 %v2296, 16
      %v2517 = vpop.permute.xlu0 %2516
      %2518 = vrot.lane.b32.xlu0 %v2299, 16
      %v2519 = vpop.permute.xlu0 %2518
      %2520 = vrot.lane.b32.xlu0 %v2301, 16
      %v2521 = vpop.permute.xlu0 %2520
      %2522 = vrot.lane.b32.xlu0 %v2491, 16
      %v2523 = vpop.permute.xlu0 %2522
      %2524 = vrot.lane.b32.xlu0 %v2493, 16
      %v2525 = vpop.permute.xlu0 %2524
      %v2542 = vrot.slane %v2232, 2
      %v2543 = vrot.slane %v2233, 2
      %v2544 = vsel %vm534, %v2542, %v2543
      %v2545 = vrot.slane %v2234, 2
      %v2546 = vsel %vm534, %v2543, %v2545
      %2547 = vrot.lane.b32.xlu0 %v2357, 20
      %v2548 = vpop.permute.xlu0 %2547
      %2549 = vrot.lane.b32.xlu0 %v2359, 20
      %v2550 = vpop.permute.xlu0 %2549
      %2551 = vrot.lane.b32.xlu0 %v2362, 20
      %v2552 = vpop.permute.xlu0 %2551
      %2553 = vrot.lane.b32.xlu0 %v2364, 20
      %v2554 = vpop.permute.xlu0 %2553
      %2555 = vrot.lane.b32.xlu0 %v2367, 20
      %v2556 = vpop.permute.xlu0 %2555
      %2557 = vrot.lane.b32.xlu0 %v2369, 20
      %v2558 = vpop.permute.xlu0 %2557
      %2559 = vrot.lane.b32.xlu0 %v2372, 20
      %v2560 = vpop.permute.xlu0 %2559
      %2561 = vrot.lane.b32.xlu0 %v2374, 20
      %v2562 = vpop.permute.xlu0 %2561
      %2563 = vrot.lane.b32.xlu0 %v2377, 20
      %v2564 = vpop.permute.xlu0 %2563
      %2565 = vrot.lane.b32.xlu0 %v2379, 20
      %v2566 = vpop.permute.xlu0 %2565
      %2567 = vrot.lane.b32.xlu0 %v2382, 20
      %v2568 = vpop.permute.xlu0 %2567
      %2569 = vrot.lane.b32.xlu0 %v2384, 20
      %v2570 = vpop.permute.xlu0 %2569
      %2571 = vrot.lane.b32.xlu0 %v2387, 20
      %v2572 = vpop.permute.xlu0 %2571
      %2573 = vrot.lane.b32.xlu0 %v2389, 20
      %v2574 = vpop.permute.xlu0 %2573
      %2575 = vrot.lane.b32.xlu0 %v2544, 20
      %v2576 = vpop.permute.xlu0 %2575
      %2577 = vrot.lane.b32.xlu0 %v2546, 20
      %v2578 = vpop.permute.xlu0 %2577
      %2597 = vrot.lane.b32.xlu0 %v2214, 24
      %v2598 = vpop.permute.xlu0 %2597
      %2599 = vrot.lane.b32.xlu0 %v2215, 24
      %v2600 = vpop.permute.xlu0 %2599
      %2601 = vrot.lane.b32.xlu0 %v2217, 24
      %v2602 = vpop.permute.xlu0 %2601
      %2603 = vrot.lane.b32.xlu0 %v2218, 24
      %v2604 = vpop.permute.xlu0 %2603
      %2605 = vrot.lane.b32.xlu0 %v2220, 24
      %v2606 = vpop.permute.xlu0 %2605
      %2607 = vrot.lane.b32.xlu0 %v2221, 24
      %v2608 = vpop.permute.xlu0 %2607
      %2609 = vrot.lane.b32.xlu0 %v2223, 24
      %v2610 = vpop.permute.xlu0 %2609
      %2611 = vrot.lane.b32.xlu0 %v2224, 24
      %v2612 = vpop.permute.xlu0 %2611
      %2613 = vrot.lane.b32.xlu0 %v2226, 24
      %v2614 = vpop.permute.xlu0 %2613
      %2615 = vrot.lane.b32.xlu0 %v2227, 24
      %v2616 = vpop.permute.xlu0 %2615
      %2617 = vrot.lane.b32.xlu0 %v2229, 24
      %v2618 = vpop.permute.xlu0 %2617
      %2619 = vrot.lane.b32.xlu0 %v2230, 24
      %v2620 = vpop.permute.xlu0 %2619
      %2621 = vrot.lane.b32.xlu0 %v2232, 24
      %v2622 = vpop.permute.xlu0 %2621
      %2623 = vrot.lane.b32.xlu0 %v2233, 24
      %v2624 = vpop.permute.xlu0 %2623
      %2625 = vrot.lane.b32.xlu0 %v2235, 24
      %v2626 = vpop.permute.xlu0 %2625
      %2627 = vrot.lane.b32.xlu0 %v2236, 24
      %v2628 = vpop.permute.xlu0 %2627
      %v2646 = vrot.slane %v2235, 1
      %v2647 = vrot.slane %v2236, 1
      %v2648 = vsel %vm445, %v2646, %v2647
      %v2649 = vrot.slane %v2237, 1
      %v2650 = vsel %vm445, %v2647, %v2649
      %2651 = vrot.lane.b32.xlu0 %v2274, 28
      %v2652 = vpop.permute.xlu0 %2651
      %2653 = vrot.lane.b32.xlu0 %v2276, 28
      %v2654 = vpop.permute.xlu0 %2653
      %2655 = vrot.lane.b32.xlu0 %v2279, 28
      %v2656 = vpop.permute.xlu0 %2655
      %2657 = vrot.lane.b32.xlu0 %v2281, 28
      %v2658 = vpop.permute.xlu0 %2657
      %2659 = vrot.lane.b32.xlu0 %v2284, 28
      %v2660 = vpop.permute.xlu0 %2659
      %2661 = vrot.lane.b32.xlu0 %v2286, 28
      %v2662 = vpop.permute.xlu0 %2661
      %2663 = vrot.lane.b32.xlu0 %v2289, 28
      %v2664 = vpop.permute.xlu0 %2663
      %2665 = vrot.lane.b32.xlu0 %v2291, 28
      %v2666 = vpop.permute.xlu0 %2665
      %2667 = vrot.lane.b32.xlu0 %v2294, 28
      %v2668 = vpop.permute.xlu0 %2667
      %2669 = vrot.lane.b32.xlu0 %v2296, 28
      %v2670 = vpop.permute.xlu0 %2669
      %2671 = vrot.lane.b32.xlu0 %v2299, 28
      %v2672 = vpop.permute.xlu0 %2671
      %2673 = vrot.lane.b32.xlu0 %v2301, 28
      %v2674 = vpop.permute.xlu0 %2673
      %2675 = vrot.lane.b32.xlu0 %v2491, 28
      %v2676 = vpop.permute.xlu0 %2675
      %2677 = vrot.lane.b32.xlu0 %v2493, 28
      %v2678 = vpop.permute.xlu0 %2677
      %2679 = vrot.lane.b32.xlu0 %v2648, 28
      %v2680 = vpop.permute.xlu0 %2679
      %2681 = vrot.lane.b32.xlu0 %v2650, 28
      %v2682 = vpop.permute.xlu0 %2681
      %v2699 = vrot.slane %v2235, 2
      %v2700 = vrot.slane %v2236, 2
      %v2701 = vsel %vm534, %v2699, %v2700
      %v2702 = vrot.slane %v2237, 2
      %v2703 = vsel %vm534, %v2700, %v2702
      %2704 = vrot.lane.b32.xlu0 %v2362, 32
      %v2705 = vpop.permute.xlu0 %2704
      %2706 = vrot.lane.b32.xlu0 %v2364, 32
      %v2707 = vpop.permute.xlu0 %2706
      %2708 = vrot.lane.b32.xlu0 %v2367, 32
      %v2709 = vpop.permute.xlu0 %2708
      %2710 = vrot.lane.b32.xlu0 %v2369, 32
      %v2711 = vpop.permute.xlu0 %2710
      %2712 = vrot.lane.b32.xlu0 %v2372, 32
      %v2713 = vpop.permute.xlu0 %2712
      %2714 = vrot.lane.b32.xlu0 %v2374, 32
      %v2715 = vpop.permute.xlu0 %2714
      %2716 = vrot.lane.b32.xlu0 %v2377, 32
      %v2717 = vpop.permute.xlu0 %2716
      %2718 = vrot.lane.b32.xlu0 %v2379, 32
      %v2719 = vpop.permute.xlu0 %2718
      %2720 = vrot.lane.b32.xlu0 %v2382, 32
      %v2721 = vpop.permute.xlu0 %2720
      %2722 = vrot.lane.b32.xlu0 %v2384, 32
      %v2723 = vpop.permute.xlu0 %2722
      %2724 = vrot.lane.b32.xlu0 %v2387, 32
      %v2725 = vpop.permute.xlu0 %2724
      %2726 = vrot.lane.b32.xlu0 %v2389, 32
      %v2727 = vpop.permute.xlu0 %2726
      %2728 = vrot.lane.b32.xlu0 %v2544, 32
      %v2729 = vpop.permute.xlu0 %2728
      %2730 = vrot.lane.b32.xlu0 %v2546, 32
      %v2731 = vpop.permute.xlu0 %2730
      %2732 = vrot.lane.b32.xlu0 %v2701, 32
      %v2733 = vpop.permute.xlu0 %2732
      %2734 = vrot.lane.b32.xlu0 %v2703, 32
      %v2735 = vpop.permute.xlu0 %2734
      %v2752 = vsel %vm225, %v2208, %v2303
      %v2753 = vsel %vm225, %v2209, %v2305
      %v2754 = vsel %vm225, %v2211, %v2307
      %v2755 = vsel %vm225, %v2212, %v2309
      %v2756 = vsel %vm225, %v2214, %v2311
      %v2757 = vsel %vm225, %v2215, %v2313
      %v2758 = vsel %vm225, %v2217, %v2315
      %v2759 = vsel %vm225, %v2218, %v2317
      %v2760 = vsel %vm225, %v2220, %v2319
      %v2761 = vsel %vm225, %v2221, %v2321
      %v2762 = vsel %vm225, %v2223, %v2323
      %v2763 = vsel %vm225, %v2224, %v2325
      %v2764 = vsel %vm225, %v2226, %v2327
      %v2765 = vsel %vm225, %v2227, %v2329
      %v2766 = vsel %vm225, %v2229, %v2331
      %v2767 = vsel %vm225, %v2230, %v2333
      %v2768 = vsel %vm953, %v2752, %v2391
      %v2769 = vsel %vm953, %v2753, %v2393
      %v2770 = vsel %vm953, %v2754, %v2395
      %v2771 = vsel %vm953, %v2755, %v2397
      %v2772 = vsel %vm953, %v2756, %v2399
      %v2773 = vsel %vm953, %v2757, %v2401
      %v2774 = vsel %vm953, %v2758, %v2403
      %v2775 = vsel %vm953, %v2759, %v2405
      %v2776 = vsel %vm953, %v2760, %v2407
      %v2777 = vsel %vm953, %v2761, %v2409
      %v2778 = vsel %vm953, %v2762, %v2411
      %v2779 = vsel %vm953, %v2763, %v2413
      %v2780 = vsel %vm953, %v2764, %v2415
      %v2781 = vsel %vm953, %v2765, %v2417
      %v2782 = vsel %vm953, %v2766, %v2419
      %v2783 = vsel %vm953, %v2767, %v2421
      %v2784 = vsel %vm970, %v2768, %v2441
      %v2785 = vsel %vm970, %v2769, %v2443
      %v2786 = vsel %vm970, %v2770, %v2445
      %v2787 = vsel %vm970, %v2771, %v2447
      %v2788 = vsel %vm970, %v2772, %v2449
      %v2789 = vsel %vm970, %v2773, %v2451
      %v2790 = vsel %vm970, %v2774, %v2453
      %v2791 = vsel %vm970, %v2775, %v2455
      %v2792 = vsel %vm970, %v2776, %v2457
      %v2793 = vsel %vm970, %v2777, %v2459
      %v2794 = vsel %vm970, %v2778, %v2461
      %v2795 = vsel %vm970, %v2779, %v2463
      %v2796 = vsel %vm970, %v2780, %v2465
      %v2797 = vsel %vm970, %v2781, %v2467
      %v2798 = vsel %vm970, %v2782, %v2469
      %v2799 = vsel %vm970, %v2783, %v2471
      %v2800 = vsel %vm987, %v2784, %v2495
      %v2801 = vsel %vm987, %v2785, %v2497
      %v2802 = vsel %vm987, %v2786, %v2499
      %v2803 = vsel %vm987, %v2787, %v2501
      %v2804 = vsel %vm987, %v2788, %v2503
      %v2805 = vsel %vm987, %v2789, %v2505
      %v2806 = vsel %vm987, %v2790, %v2507
      %v2807 = vsel %vm987, %v2791, %v2509
      %v2808 = vsel %vm987, %v2792, %v2511
      %v2809 = vsel %vm987, %v2793, %v2513
      %v2810 = vsel %vm987, %v2794, %v2515
      %v2811 = vsel %vm987, %v2795, %v2517
      %v2812 = vsel %vm987, %v2796, %v2519
      %v2813 = vsel %vm987, %v2797, %v2521
      %v2814 = vsel %vm987, %v2798, %v2523
      %v2815 = vsel %vm987, %v2799, %v2525
      %v2816 = vsel %vm1004, %v2800, %v2548
      %v2817 = vsel %vm1004, %v2801, %v2550
      %v2818 = vsel %vm1004, %v2802, %v2552
      %v2819 = vsel %vm1004, %v2803, %v2554
      %v2820 = vsel %vm1004, %v2804, %v2556
      %v2821 = vsel %vm1004, %v2805, %v2558
      %v2822 = vsel %vm1004, %v2806, %v2560
      %v2823 = vsel %vm1004, %v2807, %v2562
      %v2824 = vsel %vm1004, %v2808, %v2564
      %v2825 = vsel %vm1004, %v2809, %v2566
      %v2826 = vsel %vm1004, %v2810, %v2568
      %v2827 = vsel %vm1004, %v2811, %v2570
      %v2828 = vsel %vm1004, %v2812, %v2572
      %v2829 = vsel %vm1004, %v2813, %v2574
      %v2830 = vsel %vm1004, %v2814, %v2576
      %v2831 = vsel %vm1004, %v2815, %v2578
      %v2832 = vsel %vm1021, %v2816, %v2598
      %v2833 = vsel %vm1021, %v2817, %v2600
      %v2834 = vsel %vm1021, %v2818, %v2602
      %v2835 = vsel %vm1021, %v2819, %v2604
      %v2836 = vsel %vm1021, %v2820, %v2606
      %v2837 = vsel %vm1021, %v2821, %v2608
      %v2838 = vsel %vm1021, %v2822, %v2610
      %v2839 = vsel %vm1021, %v2823, %v2612
      %v2840 = vsel %vm1021, %v2824, %v2614
      %v2841 = vsel %vm1021, %v2825, %v2616
      %v2842 = vsel %vm1021, %v2826, %v2618
      %v2843 = vsel %vm1021, %v2827, %v2620
      %v2844 = vsel %vm1021, %v2828, %v2622
      %v2845 = vsel %vm1021, %v2829, %v2624
      %v2846 = vsel %vm1021, %v2830, %v2626
      %v2847 = vsel %vm1021, %v2831, %v2628
      %v2848 = vsel %vm1038, %v2832, %v2652
      %v2849 = vsel %vm1038, %v2833, %v2654
      %v2850 = vsel %vm1038, %v2834, %v2656
      %v2851 = vsel %vm1038, %v2835, %v2658
      %v2852 = vsel %vm1038, %v2836, %v2660
      %v2853 = vsel %vm1038, %v2837, %v2662
      %v2854 = vsel %vm1038, %v2838, %v2664
      %v2855 = vsel %vm1038, %v2839, %v2666
      %v2856 = vsel %vm1038, %v2840, %v2668
      %v2857 = vsel %vm1038, %v2841, %v2670
      %v2858 = vsel %vm1038, %v2842, %v2672
      %v2859 = vsel %vm1038, %v2843, %v2674
      %v2860 = vsel %vm1038, %v2844, %v2676
      %v2861 = vsel %vm1038, %v2845, %v2678
      %v2862 = vsel %vm1038, %v2846, %v2680
      %v2863 = vsel %vm1038, %v2847, %v2682
      %v2864 = vsel %vm1055, %v2848, %v2705
      %v2865 = vsel %vm1055, %v2849, %v2707
      %v2866 = vsel %vm1055, %v2850, %v2709
      %v2867 = vsel %vm1055, %v2851, %v2711
      %v2868 = vsel %vm1055, %v2852, %v2713
      %v2869 = vsel %vm1055, %v2853, %v2715
      %v2870 = vsel %vm1055, %v2854, %v2717
      %v2871 = vsel %vm1055, %v2855, %v2719
      %v2872 = vsel %vm1055, %v2856, %v2721
      %v2873 = vsel %vm1055, %v2857, %v2723
      %v2874 = vsel %vm1055, %v2858, %v2725
      %v2875 = vsel %vm1055, %v2859, %v2727
      %v2876 = vsel %vm1055, %v2860, %v2729
      %v2877 = vsel %vm1055, %v2861, %v2731
      %v2878 = vsel %vm1055, %v2862, %v2733
      %v2879 = vsel %vm1055, %v2863, %v2735
      %v2881 = vlaneseq
      %v2882 = vshrl.u32 %v2881, 7
      %v2883 = vsub.s32 0, %v2882
      %v2884 = vrot.slane %v390, %v2883
      %v2887 = vsel %vm1078, %v2864, 0
      %v2890 = vsel %vm1078, %v2865, 0
      %v2893 = vsel %vm1078, %v2866, 0
      %v2896 = vsel %vm1078, %v2867, 0
      %v2899 = vsel %vm1078, %v2868, 0
      %v2902 = vsel %vm1078, %v2869, 0
      %v2905 = vsel %vm1078, %v2870, 0
      %v2908 = vsel %vm1078, %v2871, 0
      %v2911 = vsel %vm1078, %v2872, 0
      %v2914 = vsel %vm1078, %v2873, 0
      %v2917 = vsel %vm1078, %v2874, 0
      %v2920 = vsel %vm1078, %v2875, 0
      %v2923 = vsel %vm1078, %v2876, 0
      %v2926 = vsel %vm1078, %v2877, 0
      %v2929 = vsel %vm1078, %v2878, 0
      %v2932 = vsel %vm1078, %v2879, 0
      %v2935 = vsel %vm1127, %v388, 0
      %2937 = vmatprep.subr.mxu0 0.0
      %2938 = vmatpush1.msra.mxu0 %v384
      %2939 = vmatprep.subr.mxu0 0.0
      %2940 = vmatpush1.msra.mxu0 %v385
      %2941 = vmatprep.subr.mxu0 0.0
      %2942 = vmatpush1.msra.mxu0 %v386
      %2943 = vmatprep.subr.mxu0 0.0
      %2944 = vmatpush1.msra.mxu0 %v387
      %2945 = vmatprep.subr.mxu0 0.0
      %2946 = vmatpush1.msra.mxu0 %v2935
      %2947 = vmatprep.subr.mxu0 0.0
      %2948 = vmatpush1.msra.mxu0 0.0
      %2949 = vmatprep.subr.mxu0 0.0
      %2950 = vmatpush1.msra.mxu0 0.0
      %2951 = vmatprep.subr.mxu0 0.0
      %2952 = vmatpush1.msra.mxu0 0.0
      %2953 = vmatprep.subr.mxu0 0.0
      %2954 = vmatpush1.msra.mxu0 0.0
      %2955 = vmatprep.subr.mxu0 0.0
      %2956 = vmatpush1.msra.mxu0 0.0
      %2957 = vmatprep.subr.mxu0 0.0
      %2958 = vmatpush1.msra.mxu0 0.0
      %2959 = vmatprep.subr.mxu0 0.0
      %2960 = vmatpush1.msra.mxu0 0.0
      %2961 = vmatprep.subr.mxu0 0.0
      %2962 = vmatpush1.msra.mxu0 0.0
      %2963 = vmatprep.subr.mxu0 0.0
      %2964 = vmatpush1.msra.mxu0 0.0
      %2965 = vmatprep.subr.mxu0 0.0
      %2966 = vmatpush1.msra.mxu0 0.0
      %2967 = vmatprep.subr.mxu0 0.0
      %2968 = vmatpush1.msra.mxu0 0.0
      %2969 = vmatprep.subr.mxu0 0.0
      %2970 = vmatpush1.msra.mxu0 0.0
      %2971 = vmatprep.subr.mxu0 0.0
      %2972 = vmatpush1.msra.mxu0 0.0
      %2973 = vmatprep.subr.mxu0 0.0
      %2974 = vmatpush1.msra.mxu0 0.0
      %2975 = vmatprep.subr.mxu0 0.0
      %2976 = vmatpush1.msra.mxu0 0.0
      %2977 = vmatprep.subr.mxu0 0.0
      %2978 = vmatpush1.msra.mxu0 0.0
      %2979 = vmatprep.subr.mxu0 0.0
      %2980 = vmatpush1.msra.mxu0 0.0
      %2981 = vmatprep.subr.mxu0 0.0
      %2982 = vmatpush1.msra.mxu0 0.0
      %2983 = vmatprep.subr.mxu0 0.0
      %2984 = vmatpush1.msra.mxu0 0.0
      %2985 = vmatprep.subr.mxu0 0.0
      %2986 = vmatpush1.msra.mxu0 0.0
      %2987 = vmatprep.subr.mxu0 0.0
      %2988 = vmatpush1.msra.mxu0 0.0
      %2989 = vmatprep.subr.mxu0 0.0
      %2990 = vmatpush1.msra.mxu0 0.0
      %2991 = vmatprep.subr.mxu0 0.0
      %2992 = vmatpush1.msra.mxu0 0.0
      %2993 = vmatprep.subr.mxu0 0.0
      %2994 = vmatpush1.msra.mxu0 0.0
      %2995 = vmatprep.subr.mxu0 0.0
      %2996 = vmatpush1.msra.mxu0 0.0
      %2997 = vmatprep.subr.mxu0 0.0
      %2998 = vmatpush1.msra.mxu0 0.0
      %2999 = vmatprep.subr.mxu0 0.0
      %3000 = vmatpush1.msra.mxu0 0.0
      %3001 = vmatprep.mubr.f32.mxu0 0.0
      %3002 = vmatmul.mubr.f32.gmra.mrb[0].mxu0 %v2887
      %v3003 = vpop.f32.mrb[0].mxu0
      %v3004 = vadd.f32 %v2884, %v3003
      %v3005 = vpop.f32.mrb[0].mxu0
      %3006 = vmatprep.mubr.f32.mxu0 0.0
      %3007 = vmatmul.mubr.f32.gmra.mrb[0].mxu0 %v2890
      %v3008 = vpop.f32.mrb[0].mxu0
      %v3009 = vadd.f32 %v2884, %v3008
      %v3010 = vpop.f32.mrb[0].mxu0
      %3011 = vmatprep.mubr.f32.mxu0 0.0
      %3012 = vmatmul.mubr.f32.gmra.mrb[0].mxu0 %v2893
      %v3013 = vpop.f32.mrb[0].mxu0
      %v3014 = vadd.f32 %v2884, %v3013
      %v3015 = vpop.f32.mrb[0].mxu0
      %3016 = vmatprep.mubr.f32.mxu0 0.0
      %3017 = vmatmul.mubr.f32.gmra.mrb[0].mxu0 %v2896
      %v3018 = vpop.f32.mrb[0].mxu0
      %v3019 = vadd.f32 %v2884, %v3018
      %v3020 = vpop.f32.mrb[0].mxu0
      %3021 = vmatprep.mubr.f32.mxu0 0.0
      %3022 = vmatmul.mubr.f32.gmra.mrb[0].mxu0 %v2899
      %v3023 = vpop.f32.mrb[0].mxu0
      %v3024 = vadd.f32 %v2884, %v3023
      %v3025 = vpop.f32.mrb[0].mxu0
      %3026 = vmatprep.mubr.f32.mxu0 0.0
      %3027 = vmatmul.mubr.f32.gmra.mrb[0].mxu0 %v2902
      %v3028 = vpop.f32.mrb[0].mxu0
      %v3029 = vadd.f32 %v2884, %v3028
      %v3030 = vpop.f32.mrb[0].mxu0
      %3031 = vmatprep.mubr.f32.mxu0 0.0
      %3032 = vmatmul.mubr.f32.gmra.mrb[0].mxu0 %v2905
      %v3033 = vpop.f32.mrb[0].mxu0
      %v3034 = vadd.f32 %v2884, %v3033
      %v3035 = vpop.f32.mrb[0].mxu0
      %3036 = vmatprep.mubr.f32.mxu0 0.0
      %3037 = vmatmul.mubr.f32.gmra.mrb[0].mxu0 %v2908
      %v3038 = vpop.f32.mrb[0].mxu0
      %v3039 = vadd.f32 %v2884, %v3038
      %v3040 = vpop.f32.mrb[0].mxu0
      %3041 = vmatprep.mubr.f32.mxu0 0.0
      %3042 = vmatmul.mubr.f32.gmra.mrb[0].mxu0 %v2911
      %v3043 = vpop.f32.mrb[0].mxu0
      %v3044 = vadd.f32 %v2884, %v3043
      %v3045 = vpop.f32.mrb[0].mxu0
      %3046 = vmatprep.mubr.f32.mxu0 0.0
      %3047 = vmatmul.mubr.f32.gmra.mrb[0].mxu0 %v2914
      %v3048 = vpop.f32.mrb[0].mxu0
      %v3049 = vadd.f32 %v2884, %v3048
      %v3050 = vpop.f32.mrb[0].mxu0
      %3051 = vmatprep.mubr.f32.mxu0 0.0
      %3052 = vmatmul.mubr.f32.gmra.mrb[0].mxu0 %v2917
      %v3053 = vpop.f32.mrb[0].mxu0
      %v3054 = vadd.f32 %v2884, %v3053
      %v3055 = vpop.f32.mrb[0].mxu0
      %3056 = vmatprep.mubr.f32.mxu0 0.0
      %3057 = vmatmul.mubr.f32.gmra.mrb[0].mxu0 %v2920
      %v3058 = vpop.f32.mrb[0].mxu0
      %v3059 = vadd.f32 %v2884, %v3058
      %v3060 = vpop.f32.mrb[0].mxu0
      %3061 = vmatprep.mubr.f32.mxu0 0.0
      %3062 = vmatmul.mubr.f32.gmra.mrb[0].mxu0 %v2923
      %v3063 = vpop.f32.mrb[0].mxu0
      %v3064 = vadd.f32 %v2884, %v3063
      %v3065 = vpop.f32.mrb[0].mxu0
      %3066 = vmatprep.mubr.f32.mxu0 0.0
      %3067 = vmatmul.mubr.f32.gmra.mrb[0].mxu0 %v2926
      %v3068 = vpop.f32.mrb[0].mxu0
      %v3069 = vadd.f32 %v2884, %v3068
      %v3070 = vpop.f32.mrb[0].mxu0
      %3071 = vmatprep.mubr.f32.mxu0 0.0
      %3072 = vmatmul.mubr.f32.gmra.mrb[0].mxu0 %v2929
      %v3073 = vpop.f32.mrb[0].mxu0
      %v3074 = vadd.f32 %v2884, %v3073
      %v3075 = vpop.f32.mrb[0].mxu0
      %3076 = vmatprep.mubr.f32.mxu0 0.0
      %3077 = vmatmul.mubr.f32.gmra.mrb[0].mxu0 %v2932
      %v3078 = vpop.f32.mrb[0].mxu0
      %v3079 = vadd.f32 %v2884, %v3078
      %v3080 = vpop.f32.mrb[0].mxu0
      %3081 = vdwg.mxu0
      %v3082 = vadd.f32 %v3004, %v314
      %v3083 = vadd.f32 %v3009, %v315
      %v3084 = vadd.f32 %v3014, %v316
      %v3085 = vadd.f32 %v3019, %v317
      %v3086 = vadd.f32 %v3024, %v318
      %v3087 = vadd.f32 %v3029, %v319
      %v3088 = vadd.f32 %v3034, %v320
      %v3089 = vadd.f32 %v3039, %v321
      %v3090 = vadd.f32 %v3044, %v322
      %v3091 = vadd.f32 %v3049, %v323
      %v3092 = vadd.f32 %v3054, %v324
      %v3093 = vadd.f32 %v3059, %v325
      %v3094 = vadd.f32 %v3064, %v326
      %v3095 = vadd.f32 %v3069, %v327
      %v3096 = vadd.f32 %v3074, %v328
      %v3097 = vadd.f32 %v3079, %v329
      %v3098 = vmax.f32 %v3082, 0.0
      %v3099 = vmax.f32 %v3083, 0.0
      %v3100 = vmax.f32 %v3084, 0.0
      %v3101 = vmax.f32 %v3085, 0.0
      %v3102 = vmax.f32 %v3086, 0.0
      %v3103 = vmax.f32 %v3087, 0.0
      %v3104 = vmax.f32 %v3088, 0.0
      %v3105 = vmax.f32 %v3089, 0.0
      %v3106 = vmax.f32 %v3090, 0.0
      %v3107 = vmax.f32 %v3091, 0.0
      %v3108 = vmax.f32 %v3092, 0.0
      %v3109 = vmax.f32 %v3093, 0.0
      %v3110 = vmax.f32 %v3094, 0.0
      %v3111 = vmax.f32 %v3095, 0.0
      %v3112 = vmax.f32 %v3096, 0.0
      %v3113 = vmax.f32 %v3097, 0.0
      %3114 = vst.msk [vmem:[%s224] sm:$0xff] %vm225, %v3098
      %3115 = vst.msk [vmem:[%s224 + $0x8] sm:$0xff] %vm225, %v3099
      %3116 = vst.msk [vmem:[%s224 + $0x10] sm:$0xff] %vm225, %v3100
      %3117 = vst.msk [vmem:[%s224 + $0x18] sm:$0xff] %vm225, %v3101
      %3118 = vst.msk [vmem:[%s224 + $0x20] sm:$0xff] %vm225, %v3102
      %3119 = vst.msk [vmem:[%s224 + $0x28] sm:$0xff] %vm225, %v3103
      %3120 = vst.msk [vmem:[%s224 + $0x30] sm:$0xff] %vm225, %v3104
      %3121 = vst.msk [vmem:[%s224 + $0x38] sm:$0xff] %vm225, %v3105
      %3122 = vst.msk [vmem:[%s224 + $0x40] sm:$0xff] %vm225, %v3106
      %3123 = vst.msk [vmem:[%s224 + $0x48] sm:$0xff] %vm225, %v3107
      %3124 = vst.msk [vmem:[%s224 + $0x50] sm:$0xff] %vm225, %v3108
      %3125 = vst.msk [vmem:[%s224 + $0x58] sm:$0xff] %vm225, %v3109
      %3126 = vst.msk [vmem:[%s224 + $0x60] sm:$0xff] %vm225, %v3110
      %3127 = vst.msk [vmem:[%s224 + $0x68] sm:$0xff] %vm225, %v3111
      %3128 = vst.msk [vmem:[%s224 + $0x70] sm:$0xff] %vm225, %v3112
      %3129 = vst.msk [vmem:[%s224 + $0x78] sm:$0xff] %vm225, %v3113
      %s3130 = scalar_lea.vmem [#allocation3], 192
      %v3131 = vld [vmem:[%s3130] sm:$0xff]
      %v3132 = vld [vmem:[%s3130 + $0x8] sm:$0xff]
      %v3133 = vld [vmem:[%s3130 + $0x10] sm:$0x3]
      %v3134 = vld [vmem:[%s3130 + $0x18] sm:$0xff]
      %v3135 = vld [vmem:[%s3130 + $0x20] sm:$0xff]
      %v3136 = vld [vmem:[%s3130 + $0x28] sm:$0x3]
      %v3137 = vld [vmem:[%s3130 + $0x30] sm:$0xff]
      %v3138 = vld [vmem:[%s3130 + $0x38] sm:$0xff]
      %v3139 = vld [vmem:[%s3130 + $0x40] sm:$0x3]
      %v3140 = vld [vmem:[%s3130 + $0x48] sm:$0xff]
      %v3141 = vld [vmem:[%s3130 + $0x50] sm:$0xff]
      %v3142 = vld [vmem:[%s3130 + $0x58] sm:$0x3]
      %v3143 = vld [vmem:[%s3130 + $0x60] sm:$0xff]
      %v3144 = vld [vmem:[%s3130 + $0x68] sm:$0xff]
      %v3145 = vld [vmem:[%s3130 + $0x70] sm:$0x3]
      %v3146 = vld [vmem:[%s3130 + $0x78] sm:$0xff]
      %v3147 = vld [vmem:[%s3130 + $0x80] sm:$0xff]
      %v3148 = vld [vmem:[%s3130 + $0x88] sm:$0x3]
      %v3149 = vld [vmem:[%s3130 + $0x90] sm:$0xff]
      %v3150 = vld [vmem:[%s3130 + $0x98] sm:$0xff]
      %v3151 = vld [vmem:[%s3130 + $0xa0] sm:$0x3]
      %v3152 = vld [vmem:[%s3130 + $0xa8] sm:$0xff]
      %v3153 = vld [vmem:[%s3130 + $0xb0] sm:$0xff]
      %v3154 = vld [vmem:[%s3130 + $0xb8] sm:$0x3]
      %v3155 = vld [vmem:[%s3130 + $0xc0] sm:$0xff]
      %v3156 = vld [vmem:[%s3130 + $0xc8] sm:$0xff]
      %v3157 = vld [vmem:[%s3130 + $0xd0] sm:$0x3]
      %v3158 = vld [vmem:[%s3130 + $0xd8] sm:$0xff]
      %v3159 = vld [vmem:[%s3130 + $0xe0] sm:$0xff]
      %v3160 = vld [vmem:[%s3130 + $0xe8] sm:$0x3]
      %v3185 = vrot.slane %v3131, 1
      %v3186 = vrot.slane %v3132, 1
      %v3187 = vsel %vm445, %v3185, %v3186
      %v3188 = vrot.slane %v3133, 1
      %v3189 = vsel %vm445, %v3186, %v3188
      %v3190 = vrot.slane %v3134, 1
      %v3191 = vrot.slane %v3135, 1
      %v3192 = vsel %vm445, %v3190, %v3191
      %v3193 = vrot.slane %v3136, 1
      %v3194 = vsel %vm445, %v3191, %v3193
      %v3195 = vrot.slane %v3137, 1
      %v3196 = vrot.slane %v3138, 1
      %v3197 = vsel %vm445, %v3195, %v3196
      %v3198 = vrot.slane %v3139, 1
      %v3199 = vsel %vm445, %v3196, %v3198
      %v3200 = vrot.slane %v3140, 1
      %v3201 = vrot.slane %v3141, 1
      %v3202 = vsel %vm445, %v3200, %v3201
      %v3203 = vrot.slane %v3142, 1
      %v3204 = vsel %vm445, %v3201, %v3203
      %v3205 = vrot.slane %v3143, 1
      %v3206 = vrot.slane %v3144, 1
      %v3207 = vsel %vm445, %v3205, %v3206
      %v3208 = vrot.slane %v3145, 1
      %v3209 = vsel %vm445, %v3206, %v3208
      %v3210 = vrot.slane %v3146, 1
      %v3211 = vrot.slane %v3147, 1
      %v3212 = vsel %vm445, %v3210, %v3211
      %v3213 = vrot.slane %v3148, 1
      %v3214 = vsel %vm445, %v3211, %v3213
      %v3215 = vrot.slane %v3149, 1
      %v3216 = vrot.slane %v3150, 1
      %v3217 = vsel %vm445, %v3215, %v3216
      %v3218 = vrot.slane %v3151, 1
      %v3219 = vsel %vm445, %v3216, %v3218
      %v3220 = vrot.slane %v3152, 1
      %v3221 = vrot.slane %v3153, 1
      %v3222 = vsel %vm445, %v3220, %v3221
      %v3223 = vrot.slane %v3154, 1
      %v3224 = vsel %vm445, %v3221, %v3223
      %3225 = vrot.lane.b32.xlu0 %v3187, 4
      %v3226 = vpop.permute.xlu0 %3225
      %3227 = vrot.lane.b32.xlu0 %v3189, 4
      %v3228 = vpop.permute.xlu0 %3227
      %3229 = vrot.lane.b32.xlu0 %v3192, 4
      %v3230 = vpop.permute.xlu0 %3229
      %3231 = vrot.lane.b32.xlu0 %v3194, 4
      %v3232 = vpop.permute.xlu0 %3231
      %3233 = vrot.lane.b32.xlu0 %v3197, 4
      %v3234 = vpop.permute.xlu0 %3233
      %3235 = vrot.lane.b32.xlu0 %v3199, 4
      %v3236 = vpop.permute.xlu0 %3235
      %3237 = vrot.lane.b32.xlu0 %v3202, 4
      %v3238 = vpop.permute.xlu0 %3237
      %3239 = vrot.lane.b32.xlu0 %v3204, 4
      %v3240 = vpop.permute.xlu0 %3239
      %3241 = vrot.lane.b32.xlu0 %v3207, 4
      %v3242 = vpop.permute.xlu0 %3241
      %3243 = vrot.lane.b32.xlu0 %v3209, 4
      %v3244 = vpop.permute.xlu0 %3243
      %3245 = vrot.lane.b32.xlu0 %v3212, 4
      %v3246 = vpop.permute.xlu0 %3245
      %3247 = vrot.lane.b32.xlu0 %v3214, 4
      %v3248 = vpop.permute.xlu0 %3247
      %3249 = vrot.lane.b32.xlu0 %v3217, 4
      %v3250 = vpop.permute.xlu0 %3249
      %3251 = vrot.lane.b32.xlu0 %v3219, 4
      %v3252 = vpop.permute.xlu0 %3251
      %3253 = vrot.lane.b32.xlu0 %v3222, 4
      %v3254 = vpop.permute.xlu0 %3253
      %3255 = vrot.lane.b32.xlu0 %v3224, 4
      %v3256 = vpop.permute.xlu0 %3255
      %v3273 = vrot.slane %v3131, 2
      %v3274 = vrot.slane %v3132, 2
      %v3275 = vsel %vm534, %v3273, %v3274
      %v3276 = vrot.slane %v3133, 2
      %v3277 = vsel %vm534, %v3274, %v3276
      %v3278 = vrot.slane %v3134, 2
      %v3279 = vrot.slane %v3135, 2
      %v3280 = vsel %vm534, %v3278, %v3279
      %v3281 = vrot.slane %v3136, 2
      %v3282 = vsel %vm534, %v3279, %v3281
      %v3283 = vrot.slane %v3137, 2
      %v3284 = vrot.slane %v3138, 2
      %v3285 = vsel %vm534, %v3283, %v3284
      %v3286 = vrot.slane %v3139, 2
      %v3287 = vsel %vm534, %v3284, %v3286
      %v3288 = vrot.slane %v3140, 2
      %v3289 = vrot.slane %v3141, 2
      %v3290 = vsel %vm534, %v3288, %v3289
      %v3291 = vrot.slane %v3142, 2
      %v3292 = vsel %vm534, %v3289, %v3291
      %v3293 = vrot.slane %v3143, 2
      %v3294 = vrot.slane %v3144, 2
      %v3295 = vsel %vm534, %v3293, %v3294
      %v3296 = vrot.slane %v3145, 2
      %v3297 = vsel %vm534, %v3294, %v3296
      %v3298 = vrot.slane %v3146, 2
      %v3299 = vrot.slane %v3147, 2
      %v3300 = vsel %vm534, %v3298, %v3299
      %v3301 = vrot.slane %v3148, 2
      %v3302 = vsel %vm534, %v3299, %v3301
      %v3303 = vrot.slane %v3149, 2
      %v3304 = vrot.slane %v3150, 2
      %v3305 = vsel %vm534, %v3303, %v3304
      %v3306 = vrot.slane %v3151, 2
      %v3307 = vsel %vm534, %v3304, %v3306
      %v3308 = vrot.slane %v3152, 2
      %v3309 = vrot.slane %v3153, 2
      %v3310 = vsel %vm534, %v3308, %v3309
      %v3311 = vrot.slane %v3154, 2
      %v3312 = vsel %vm534, %v3309, %v3311
      %3313 = vrot.lane.b32.xlu0 %v3275, 8
      %v3314 = vpop.permute.xlu0 %3313
      %3315 = vrot.lane.b32.xlu0 %v3277, 8
      %v3316 = vpop.permute.xlu0 %3315
      %3317 = vrot.lane.b32.xlu0 %v3280, 8
      %v3318 = vpop.permute.xlu0 %3317
      %3319 = vrot.lane.b32.xlu0 %v3282, 8
      %v3320 = vpop.permute.xlu0 %3319
      %3321 = vrot.lane.b32.xlu0 %v3285, 8
      %v3322 = vpop.permute.xlu0 %3321
      %3323 = vrot.lane.b32.xlu0 %v3287, 8
      %v3324 = vpop.permute.xlu0 %3323
      %3325 = vrot.lane.b32.xlu0 %v3290, 8
      %v3326 = vpop.permute.xlu0 %3325
      %3327 = vrot.lane.b32.xlu0 %v3292, 8
      %v3328 = vpop.permute.xlu0 %3327
      %3329 = vrot.lane.b32.xlu0 %v3295, 8
      %v3330 = vpop.permute.xlu0 %3329
      %3331 = vrot.lane.b32.xlu0 %v3297, 8
      %v3332 = vpop.permute.xlu0 %3331
      %3333 = vrot.lane.b32.xlu0 %v3300, 8
      %v3334 = vpop.permute.xlu0 %3333
      %3335 = vrot.lane.b32.xlu0 %v3302, 8
      %v3336 = vpop.permute.xlu0 %3335
      %3337 = vrot.lane.b32.xlu0 %v3305, 8
      %v3338 = vpop.permute.xlu0 %3337
      %3339 = vrot.lane.b32.xlu0 %v3307, 8
      %v3340 = vpop.permute.xlu0 %3339
      %3341 = vrot.lane.b32.xlu0 %v3310, 8
      %v3342 = vpop.permute.xlu0 %3341
      %3343 = vrot.lane.b32.xlu0 %v3312, 8
      %v3344 = vpop.permute.xlu0 %3343
      %3363 = vrot.lane.b32.xlu0 %v3134, 12
      %v3364 = vpop.permute.xlu0 %3363
      %3365 = vrot.lane.b32.xlu0 %v3135, 12
      %v3366 = vpop.permute.xlu0 %3365
      %3367 = vrot.lane.b32.xlu0 %v3137, 12
      %v3368 = vpop.permute.xlu0 %3367
      %3369 = vrot.lane.b32.xlu0 %v3138, 12
      %v3370 = vpop.permute.xlu0 %3369
      %3371 = vrot.lane.b32.xlu0 %v3140, 12
      %v3372 = vpop.permute.xlu0 %3371
      %3373 = vrot.lane.b32.xlu0 %v3141, 12
      %v3374 = vpop.permute.xlu0 %3373
      %3375 = vrot.lane.b32.xlu0 %v3143, 12
      %v3376 = vpop.permute.xlu0 %3375
      %3377 = vrot.lane.b32.xlu0 %v3144, 12
      %v3378 = vpop.permute.xlu0 %3377
      %3379 = vrot.lane.b32.xlu0 %v3146, 12
      %v3380 = vpop.permute.xlu0 %3379
      %3381 = vrot.lane.b32.xlu0 %v3147, 12
      %v3382 = vpop.permute.xlu0 %3381
      %3383 = vrot.lane.b32.xlu0 %v3149, 12
      %v3384 = vpop.permute.xlu0 %3383
      %3385 = vrot.lane.b32.xlu0 %v3150, 12
      %v3386 = vpop.permute.xlu0 %3385
      %3387 = vrot.lane.b32.xlu0 %v3152, 12
      %v3388 = vpop.permute.xlu0 %3387
      %3389 = vrot.lane.b32.xlu0 %v3153, 12
      %v3390 = vpop.permute.xlu0 %3389
      %3391 = vrot.lane.b32.xlu0 %v3155, 12
      %v3392 = vpop.permute.xlu0 %3391
      %3393 = vrot.lane.b32.xlu0 %v3156, 12
      %v3394 = vpop.permute.xlu0 %3393
      %v3412 = vrot.slane %v3155, 1
      %v3413 = vrot.slane %v3156, 1
      %v3414 = vsel %vm445, %v3412, %v3413
      %v3415 = vrot.slane %v3157, 1
      %v3416 = vsel %vm445, %v3413, %v3415
      %3417 = vrot.lane.b32.xlu0 %v3192, 16
      %v3418 = vpop.permute.xlu0 %3417
      %3419 = vrot.lane.b32.xlu0 %v3194, 16
      %v3420 = vpop.permute.xlu0 %3419
      %3421 = vrot.lane.b32.xlu0 %v3197, 16
      %v3422 = vpop.permute.xlu0 %3421
      %3423 = vrot.lane.b32.xlu0 %v3199, 16
      %v3424 = vpop.permute.xlu0 %3423
      %3425 = vrot.lane.b32.xlu0 %v3202, 16
      %v3426 = vpop.permute.xlu0 %3425
      %3427 = vrot.lane.b32.xlu0 %v3204, 16
      %v3428 = vpop.permute.xlu0 %3427
      %3429 = vrot.lane.b32.xlu0 %v3207, 16
      %v3430 = vpop.permute.xlu0 %3429
      %3431 = vrot.lane.b32.xlu0 %v3209, 16
      %v3432 = vpop.permute.xlu0 %3431
      %3433 = vrot.lane.b32.xlu0 %v3212, 16
      %v3434 = vpop.permute.xlu0 %3433
      %3435 = vrot.lane.b32.xlu0 %v3214, 16
      %v3436 = vpop.permute.xlu0 %3435
      %3437 = vrot.lane.b32.xlu0 %v3217, 16
      %v3438 = vpop.permute.xlu0 %3437
      %3439 = vrot.lane.b32.xlu0 %v3219, 16
      %v3440 = vpop.permute.xlu0 %3439
      %3441 = vrot.lane.b32.xlu0 %v3222, 16
      %v3442 = vpop.permute.xlu0 %3441
      %3443 = vrot.lane.b32.xlu0 %v3224, 16
      %v3444 = vpop.permute.xlu0 %3443
      %3445 = vrot.lane.b32.xlu0 %v3414, 16
      %v3446 = vpop.permute.xlu0 %3445
      %3447 = vrot.lane.b32.xlu0 %v3416, 16
      %v3448 = vpop.permute.xlu0 %3447
      %v3465 = vrot.slane %v3155, 2
      %v3466 = vrot.slane %v3156, 2
      %v3467 = vsel %vm534, %v3465, %v3466
      %v3468 = vrot.slane %v3157, 2
      %v3469 = vsel %vm534, %v3466, %v3468
      %3470 = vrot.lane.b32.xlu0 %v3280, 20
      %v3471 = vpop.permute.xlu0 %3470
      %3472 = vrot.lane.b32.xlu0 %v3282, 20
      %v3473 = vpop.permute.xlu0 %3472
      %3474 = vrot.lane.b32.xlu0 %v3285, 20
      %v3475 = vpop.permute.xlu0 %3474
      %3476 = vrot.lane.b32.xlu0 %v3287, 20
      %v3477 = vpop.permute.xlu0 %3476
      %3478 = vrot.lane.b32.xlu0 %v3290, 20
      %v3479 = vpop.permute.xlu0 %3478
      %3480 = vrot.lane.b32.xlu0 %v3292, 20
      %v3481 = vpop.permute.xlu0 %3480
      %3482 = vrot.lane.b32.xlu0 %v3295, 20
      %v3483 = vpop.permute.xlu0 %3482
      %3484 = vrot.lane.b32.xlu0 %v3297, 20
      %v3485 = vpop.permute.xlu0 %3484
      %3486 = vrot.lane.b32.xlu0 %v3300, 20
      %v3487 = vpop.permute.xlu0 %3486
      %3488 = vrot.lane.b32.xlu0 %v3302, 20
      %v3489 = vpop.permute.xlu0 %3488
      %3490 = vrot.lane.b32.xlu0 %v3305, 20
      %v3491 = vpop.permute.xlu0 %3490
      %3492 = vrot.lane.b32.xlu0 %v3307, 20
      %v3493 = vpop.permute.xlu0 %3492
      %3494 = vrot.lane.b32.xlu0 %v3310, 20
      %v3495 = vpop.permute.xlu0 %3494
      %3496 = vrot.lane.b32.xlu0 %v3312, 20
      %v3497 = vpop.permute.xlu0 %3496
      %3498 = vrot.lane.b32.xlu0 %v3467, 20
      %v3499 = vpop.permute.xlu0 %3498
      %3500 = vrot.lane.b32.xlu0 %v3469, 20
      %v3501 = vpop.permute.xlu0 %3500
      %3520 = vrot.lane.b32.xlu0 %v3137, 24
      %v3521 = vpop.permute.xlu0 %3520
      %3522 = vrot.lane.b32.xlu0 %v3138, 24
      %v3523 = vpop.permute.xlu0 %3522
      %3524 = vrot.lane.b32.xlu0 %v3140, 24
      %v3525 = vpop.permute.xlu0 %3524
      %3526 = vrot.lane.b32.xlu0 %v3141, 24
      %v3527 = vpop.permute.xlu0 %3526
      %3528 = vrot.lane.b32.xlu0 %v3143, 24
      %v3529 = vpop.permute.xlu0 %3528
      %3530 = vrot.lane.b32.xlu0 %v3144, 24
      %v3531 = vpop.permute.xlu0 %3530
      %3532 = vrot.lane.b32.xlu0 %v3146, 24
      %v3533 = vpop.permute.xlu0 %3532
      %3534 = vrot.lane.b32.xlu0 %v3147, 24
      %v3535 = vpop.permute.xlu0 %3534
      %3536 = vrot.lane.b32.xlu0 %v3149, 24
      %v3537 = vpop.permute.xlu0 %3536
      %3538 = vrot.lane.b32.xlu0 %v3150, 24
      %v3539 = vpop.permute.xlu0 %3538
      %3540 = vrot.lane.b32.xlu0 %v3152, 24
      %v3541 = vpop.permute.xlu0 %3540
      %3542 = vrot.lane.b32.xlu0 %v3153, 24
      %v3543 = vpop.permute.xlu0 %3542
      %3544 = vrot.lane.b32.xlu0 %v3155, 24
      %v3545 = vpop.permute.xlu0 %3544
      %3546 = vrot.lane.b32.xlu0 %v3156, 24
      %v3547 = vpop.permute.xlu0 %3546
      %3548 = vrot.lane.b32.xlu0 %v3158, 24
      %v3549 = vpop.permute.xlu0 %3548
      %3550 = vrot.lane.b32.xlu0 %v3159, 24
      %v3551 = vpop.permute.xlu0 %3550
      %v3569 = vrot.slane %v3158, 1
      %v3570 = vrot.slane %v3159, 1
      %v3571 = vsel %vm445, %v3569, %v3570
      %v3572 = vrot.slane %v3160, 1
      %v3573 = vsel %vm445, %v3570, %v3572
      %3574 = vrot.lane.b32.xlu0 %v3197, 28
      %v3575 = vpop.permute.xlu0 %3574
      %3576 = vrot.lane.b32.xlu0 %v3199, 28
      %v3577 = vpop.permute.xlu0 %3576
      %3578 = vrot.lane.b32.xlu0 %v3202, 28
      %v3579 = vpop.permute.xlu0 %3578
      %3580 = vrot.lane.b32.xlu0 %v3204, 28
      %v3581 = vpop.permute.xlu0 %3580
      %3582 = vrot.lane.b32.xlu0 %v3207, 28
      %v3583 = vpop.permute.xlu0 %3582
      %3584 = vrot.lane.b32.xlu0 %v3209, 28
      %v3585 = vpop.permute.xlu0 %3584
      %3586 = vrot.lane.b32.xlu0 %v3212, 28
      %v3587 = vpop.permute.xlu0 %3586
      %3588 = vrot.lane.b32.xlu0 %v3214, 28
      %v3589 = vpop.permute.xlu0 %3588
      %3590 = vrot.lane.b32.xlu0 %v3217, 28
      %v3591 = vpop.permute.xlu0 %3590
      %3592 = vrot.lane.b32.xlu0 %v3219, 28
      %v3593 = vpop.permute.xlu0 %3592
      %3594 = vrot.lane.b32.xlu0 %v3222, 28
      %v3595 = vpop.permute.xlu0 %3594
      %3596 = vrot.lane.b32.xlu0 %v3224, 28
      %v3597 = vpop.permute.xlu0 %3596
      %3598 = vrot.lane.b32.xlu0 %v3414, 28
      %v3599 = vpop.permute.xlu0 %3598
      %3600 = vrot.lane.b32.xlu0 %v3416, 28
      %v3601 = vpop.permute.xlu0 %3600
      %3602 = vrot.lane.b32.xlu0 %v3571, 28
      %v3603 = vpop.permute.xlu0 %3602
      %3604 = vrot.lane.b32.xlu0 %v3573, 28
      %v3605 = vpop.permute.xlu0 %3604
      %v3622 = vrot.slane %v3158, 2
      %v3623 = vrot.slane %v3159, 2
      %v3624 = vsel %vm534, %v3622, %v3623
      %v3625 = vrot.slane %v3160, 2
      %v3626 = vsel %vm534, %v3623, %v3625
      %3627 = vrot.lane.b32.xlu0 %v3285, 32
      %v3628 = vpop.permute.xlu0 %3627
      %3629 = vrot.lane.b32.xlu0 %v3287, 32
      %v3630 = vpop.permute.xlu0 %3629
      %3631 = vrot.lane.b32.xlu0 %v3290, 32
      %v3632 = vpop.permute.xlu0 %3631
      %3633 = vrot.lane.b32.xlu0 %v3292, 32
      %v3634 = vpop.permute.xlu0 %3633
      %3635 = vrot.lane.b32.xlu0 %v3295, 32
      %v3636 = vpop.permute.xlu0 %3635
      %3637 = vrot.lane.b32.xlu0 %v3297, 32
      %v3638 = vpop.permute.xlu0 %3637
      %3639 = vrot.lane.b32.xlu0 %v3300, 32
      %v3640 = vpop.permute.xlu0 %3639
      %3641 = vrot.lane.b32.xlu0 %v3302, 32
      %v3642 = vpop.permute.xlu0 %3641
      %3643 = vrot.lane.b32.xlu0 %v3305, 32
      %v3644 = vpop.permute.xlu0 %3643
      %3645 = vrot.lane.b32.xlu0 %v3307, 32
      %v3646 = vpop.permute.xlu0 %3645
      %3647 = vrot.lane.b32.xlu0 %v3310, 32
      %v3648 = vpop.permute.xlu0 %3647
      %3649 = vrot.lane.b32.xlu0 %v3312, 32
      %v3650 = vpop.permute.xlu0 %3649
      %3651 = vrot.lane.b32.xlu0 %v3467, 32
      %v3652 = vpop.permute.xlu0 %3651
      %3653 = vrot.lane.b32.xlu0 %v3469, 32
      %v3654 = vpop.permute.xlu0 %3653
      %3655 = vrot.lane.b32.xlu0 %v3624, 32
      %v3656 = vpop.permute.xlu0 %3655
      %3657 = vrot.lane.b32.xlu0 %v3626, 32
      %v3658 = vpop.permute.xlu0 %3657
      %v3675 = vsel %vm225, %v3131, %v3226
      %v3676 = vsel %vm225, %v3132, %v3228
      %v3677 = vsel %vm225, %v3134, %v3230
      %v3678 = vsel %vm225, %v3135, %v3232
      %v3679 = vsel %vm225, %v3137, %v3234
      %v3680 = vsel %vm225, %v3138, %v3236
      %v3681 = vsel %vm225, %v3140, %v3238
      %v3682 = vsel %vm225, %v3141, %v3240
      %v3683 = vsel %vm225, %v3143, %v3242
      %v3684 = vsel %vm225, %v3144, %v3244
      %v3685 = vsel %vm225, %v3146, %v3246
      %v3686 = vsel %vm225, %v3147, %v3248
      %v3687 = vsel %vm225, %v3149, %v3250
      %v3688 = vsel %vm225, %v3150, %v3252
      %v3689 = vsel %vm225, %v3152, %v3254
      %v3690 = vsel %vm225, %v3153, %v3256
      %v3691 = vsel %vm953, %v3675, %v3314
      %v3692 = vsel %vm953, %v3676, %v3316
      %v3693 = vsel %vm953, %v3677, %v3318
      %v3694 = vsel %vm953, %v3678, %v3320
      %v3695 = vsel %vm953, %v3679, %v3322
      %v3696 = vsel %vm953, %v3680, %v3324
      %v3697 = vsel %vm953, %v3681, %v3326
      %v3698 = vsel %vm953, %v3682, %v3328
      %v3699 = vsel %vm953, %v3683, %v3330
      %v3700 = vsel %vm953, %v3684, %v3332
      %v3701 = vsel %vm953, %v3685, %v3334
      %v3702 = vsel %vm953, %v3686, %v3336
      %v3703 = vsel %vm953, %v3687, %v3338
      %v3704 = vsel %vm953, %v3688, %v3340
      %v3705 = vsel %vm953, %v3689, %v3342
      %v3706 = vsel %vm953, %v3690, %v3344
      %v3707 = vsel %vm970, %v3691, %v3364
      %v3708 = vsel %vm970, %v3692, %v3366
      %v3709 = vsel %vm970, %v3693, %v3368
      %v3710 = vsel %vm970, %v3694, %v3370
      %v3711 = vsel %vm970, %v3695, %v3372
      %v3712 = vsel %vm970, %v3696, %v3374
      %v3713 = vsel %vm970, %v3697, %v3376
      %v3714 = vsel %vm970, %v3698, %v3378
      %v3715 = vsel %vm970, %v3699, %v3380
      %v3716 = vsel %vm970, %v3700, %v3382
      %v3717 = vsel %vm970, %v3701, %v3384
      %v3718 = vsel %vm970, %v3702, %v3386
      %v3719 = vsel %vm970, %v3703, %v3388
      %v3720 = vsel %vm970, %v3704, %v3390
      %v3721 = vsel %vm970, %v3705, %v3392
      %v3722 = vsel %vm970, %v3706, %v3394
      %v3723 = vsel %vm987, %v3707, %v3418
      %v3724 = vsel %vm987, %v3708, %v3420
      %v3725 = vsel %vm987, %v3709, %v3422
      %v3726 = vsel %vm987, %v3710, %v3424
      %v3727 = vsel %vm987, %v3711, %v3426
      %v3728 = vsel %vm987, %v3712, %v3428
      %v3729 = vsel %vm987, %v3713, %v3430
      %v3730 = vsel %vm987, %v3714, %v3432
      %v3731 = vsel %vm987, %v3715, %v3434
      %v3732 = vsel %vm987, %v3716, %v3436
      %v3733 = vsel %vm987, %v3717, %v3438
      %v3734 = vsel %vm987, %v3718, %v3440
      %v3735 = vsel %vm987, %v3719, %v3442
      %v3736 = vsel %vm987, %v3720, %v3444
      %v3737 = vsel %vm987, %v3721, %v3446
      %v3738 = vsel %vm987, %v3722, %v3448
      %v3739 = vsel %vm1004, %v3723, %v3471
      %v3740 = vsel %vm1004, %v3724, %v3473
      %v3741 = vsel %vm1004, %v3725, %v3475
      %v3742 = vsel %vm1004, %v3726, %v3477
      %v3743 = vsel %vm1004, %v3727, %v3479
      %v3744 = vsel %vm1004, %v3728, %v3481
      %v3745 = vsel %vm1004, %v3729, %v3483
      %v3746 = vsel %vm1004, %v3730, %v3485
      %v3747 = vsel %vm1004, %v3731, %v3487
      %v3748 = vsel %vm1004, %v3732, %v3489
      %v3749 = vsel %vm1004, %v3733, %v3491
      %v3750 = vsel %vm1004, %v3734, %v3493
      %v3751 = vsel %vm1004, %v3735, %v3495
      %v3752 = vsel %vm1004, %v3736, %v3497
      %v3753 = vsel %vm1004, %v3737, %v3499
      %v3754 = vsel %vm1004, %v3738, %v3501
      %v3755 = vsel %vm1021, %v3739, %v3521
      %v3756 = vsel %vm1021, %v3740, %v3523
      %v3757 = vsel %vm1021, %v3741, %v3525
      %v3758 = vsel %vm1021, %v3742, %v3527
      %v3759 = vsel %vm1021, %v3743, %v3529
      %v3760 = vsel %vm1021, %v3744, %v3531
      %v3761 = vsel %vm1021, %v3745, %v3533
      %v3762 = vsel %vm1021, %v3746, %v3535
      %v3763 = vsel %vm1021, %v3747, %v3537
      %v3764 = vsel %vm1021, %v3748, %v3539
      %v3765 = vsel %vm1021, %v3749, %v3541
      %v3766 = vsel %vm1021, %v3750, %v3543
      %v3767 = vsel %vm1021, %v3751, %v3545
      %v3768 = vsel %vm1021, %v3752, %v3547
      %v3769 = vsel %vm1021, %v3753, %v3549
      %v3770 = vsel %vm1021, %v3754, %v3551
      %v3771 = vsel %vm1038, %v3755, %v3575
      %v3772 = vsel %vm1038, %v3756, %v3577
      %v3773 = vsel %vm1038, %v3757, %v3579
      %v3774 = vsel %vm1038, %v3758, %v3581
      %v3775 = vsel %vm1038, %v3759, %v3583
      %v3776 = vsel %vm1038, %v3760, %v3585
      %v3777 = vsel %vm1038, %v3761, %v3587
      %v3778 = vsel %vm1038, %v3762, %v3589
      %v3779 = vsel %vm1038, %v3763, %v3591
      %v3780 = vsel %vm1038, %v3764, %v3593
      %v3781 = vsel %vm1038, %v3765, %v3595
      %v3782 = vsel %vm1038, %v3766, %v3597
      %v3783 = vsel %vm1038, %v3767, %v3599
      %v3784 = vsel %vm1038, %v3768, %v3601
      %v3785 = vsel %vm1038, %v3769, %v3603
      %v3786 = vsel %vm1038, %v3770, %v3605
      %v3787 = vsel %vm1055, %v3771, %v3628
      %v3788 = vsel %vm1055, %v3772, %v3630
      %v3789 = vsel %vm1055, %v3773, %v3632
      %v3790 = vsel %vm1055, %v3774, %v3634
      %v3791 = vsel %vm1055, %v3775, %v3636
      %v3792 = vsel %vm1055, %v3776, %v3638
      %v3793 = vsel %vm1055, %v3777, %v3640
      %v3794 = vsel %vm1055, %v3778, %v3642
      %v3795 = vsel %vm1055, %v3779, %v3644
      %v3796 = vsel %vm1055, %v3780, %v3646
      %v3797 = vsel %vm1055, %v3781, %v3648
      %v3798 = vsel %vm1055, %v3782, %v3650
      %v3799 = vsel %vm1055, %v3783, %v3652
      %v3800 = vsel %vm1055, %v3784, %v3654
      %v3801 = vsel %vm1055, %v3785, %v3656
      %v3802 = vsel %vm1055, %v3786, %v3658
      %v3804 = vsel %vm1078, %v3787, 0
      %v3807 = vsel %vm1078, %v3788, 0
      %v3810 = vsel %vm1078, %v3789, 0
      %v3813 = vsel %vm1078, %v3790, 0
      %v3816 = vsel %vm1078, %v3791, 0
      %v3819 = vsel %vm1078, %v3792, 0
      %v3822 = vsel %vm1078, %v3793, 0
      %v3825 = vsel %vm1078, %v3794, 0
      %v3828 = vsel %vm1078, %v3795, 0
      %v3831 = vsel %vm1078, %v3796, 0
      %v3834 = vsel %vm1078, %v3797, 0
      %v3837 = vsel %vm1078, %v3798, 0
      %v3840 = vsel %vm1078, %v3799, 0
      %v3843 = vsel %vm1078, %v3800, 0
      %v3846 = vsel %vm1078, %v3801, 0
      %v3849 = vsel %vm1078, %v3802, 0
      %3851 = vmatprep.subr.mxu0 0.0
      %3852 = vmatpush1.msra.mxu0 %v384
      %3853 = vmatprep.subr.mxu0 0.0
      %3854 = vmatpush1.msra.mxu0 %v385
      %3855 = vmatprep.subr.mxu0 0.0
      %3856 = vmatpush1.msra.mxu0 %v386
      %3857 = vmatprep.subr.mxu0 0.0
      %3858 = vmatpush1.msra.mxu0 %v387
      %3859 = vmatprep.subr.mxu0 0.0
      %3860 = vmatpush1.msra.mxu0 %v2935
      %3861 = vmatprep.subr.mxu0 0.0
      %3862 = vmatpush1.msra.mxu0 0.0
      %3863 = vmatprep.subr.mxu0 0.0
      %3864 = vmatpush1.msra.mxu0 0.0
      %3865 = vmatprep.subr.mxu0 0.0
      %3866 = vmatpush1.msra.mxu0 0.0
      %3867 = vmatprep.subr.mxu0 0.0
      %3868 = vmatpush1.msra.mxu0 0.0
      %3869 = vmatprep.subr.mxu0 0.0
      %3870 = vmatpush1.msra.mxu0 0.0
      %3871 = vmatprep.subr.mxu0 0.0
      %3872 = vmatpush1.msra.mxu0 0.0
      %3873 = vmatprep.subr.mxu0 0.0
      %3874 = vmatpush1.msra.mxu0 0.0
      %3875 = vmatprep.subr.mxu0 0.0
      %3876 = vmatpush1.msra.mxu0 0.0
      %3877 = vmatprep.subr.mxu0 0.0
      %3878 = vmatpush1.msra.mxu0 0.0
      %3879 = vmatprep.subr.mxu0 0.0
      %3880 = vmatpush1.msra.mxu0 0.0
      %3881 = vmatprep.subr.mxu0 0.0
      %3882 = vmatpush1.msra.mxu0 0.0
      %3883 = vmatprep.subr.mxu0 0.0
      %3884 = vmatpush1.msra.mxu0 0.0
      %3885 = vmatprep.subr.mxu0 0.0
      %3886 = vmatpush1.msra.mxu0 0.0
      %3887 = vmatprep.subr.mxu0 0.0
      %3888 = vmatpush1.msra.mxu0 0.0
      %3889 = vmatprep.subr.mxu0 0.0
      %3890 = vmatpush1.msra.mxu0 0.0
      %3891 = vmatprep.subr.mxu0 0.0
      %3892 = vmatpush1.msra.mxu0 0.0
      %3893 = vmatprep.subr.mxu0 0.0
      %3894 = vmatpush1.msra.mxu0 0.0
      %3895 = vmatprep.subr.mxu0 0.0
      %3896 = vmatpush1.msra.mxu0 0.0
      %3897 = vmatprep.subr.mxu0 0.0
      %3898 = vmatpush1.msra.mxu0 0.0
      %3899 = vmatprep.subr.mxu0 0.0
      %3900 = vmatpush1.msra.mxu0 0.0
      %3901 = vmatprep.subr.mxu0 0.0
      %3902 = vmatpush1.msra.mxu0 0.0
      %3903 = vmatprep.subr.mxu0 0.0
      %3904 = vmatpush1.msra.mxu0 0.0
      %3905 = vmatprep.subr.mxu0 0.0
      %3906 = vmatpush1.msra.mxu0 0.0
      %3907 = vmatprep.subr.mxu0 0.0
      %3908 = vmatpush1.msra.mxu0 0.0
      %3909 = vmatprep.subr.mxu0 0.0
      %3910 = vmatpush1.msra.mxu0 0.0
      %3911 = vmatprep.subr.mxu0 0.0
      %3912 = vmatpush1.msra.mxu0 0.0
      %3913 = vmatprep.subr.mxu0 0.0
      %3914 = vmatpush1.msra.mxu0 0.0
      %3915 = vmatprep.mubr.f32.mxu0 0.0
      %3916 = vmatmul.mubr.f32.gmra.mrb[0].mxu0 %v3804
      %v3917 = vpop.f32.mrb[0].mxu0
      %v3918 = vadd.f32 %v2884, %v3917
      %v3919 = vpop.f32.mrb[0].mxu0
      %3920 = vmatprep.mubr.f32.mxu0 0.0
      %3921 = vmatmul.mubr.f32.gmra.mrb[0].mxu0 %v3807
      %v3922 = vpop.f32.mrb[0].mxu0
      %v3923 = vadd.f32 %v2884, %v3922
      %v3924 = vpop.f32.mrb[0].mxu0
      %3925 = vmatprep.mubr.f32.mxu0 0.0
      %3926 = vmatmul.mubr.f32.gmra.mrb[0].mxu0 %v3810
      %v3927 = vpop.f32.mrb[0].mxu0
      %v3928 = vadd.f32 %v2884, %v3927
      %v3929 = vpop.f32.mrb[0].mxu0
      %3930 = vmatprep.mubr.f32.mxu0 0.0
      %3931 = vmatmul.mubr.f32.gmra.mrb[0].mxu0 %v3813
      %v3932 = vpop.f32.mrb[0].mxu0
      %v3933 = vadd.f32 %v2884, %v3932
      %v3934 = vpop.f32.mrb[0].mxu0
      %3935 = vmatprep.mubr.f32.mxu0 0.0
      %3936 = vmatmul.mubr.f32.gmra.mrb[0].mxu0 %v3816
      %v3937 = vpop.f32.mrb[0].mxu0
      %v3938 = vadd.f32 %v2884, %v3937
      %v3939 = vpop.f32.mrb[0].mxu0
      %3940 = vmatprep.mubr.f32.mxu0 0.0
      %3941 = vmatmul.mubr.f32.gmra.mrb[0].mxu0 %v3819
      %v3942 = vpop.f32.mrb[0].mxu0
      %v3943 = vadd.f32 %v2884, %v3942
      %v3944 = vpop.f32.mrb[0].mxu0
      %3945 = vmatprep.mubr.f32.mxu0 0.0
      %3946 = vmatmul.mubr.f32.gmra.mrb[0].mxu0 %v3822
      %v3947 = vpop.f32.mrb[0].mxu0
      %v3948 = vadd.f32 %v2884, %v3947
      %v3949 = vpop.f32.mrb[0].mxu0
      %3950 = vmatprep.mubr.f32.mxu0 0.0
      %3951 = vmatmul.mubr.f32.gmra.mrb[0].mxu0 %v3825
      %v3952 = vpop.f32.mrb[0].mxu0
      %v3953 = vadd.f32 %v2884, %v3952
      %v3954 = vpop.f32.mrb[0].mxu0
      %3955 = vmatprep.mubr.f32.mxu0 0.0
      %3956 = vmatmul.mubr.f32.gmra.mrb[0].mxu0 %v3828
      %v3957 = vpop.f32.mrb[0].mxu0
      %v3958 = vadd.f32 %v2884, %v3957
      %v3959 = vpop.f32.mrb[0].mxu0
      %3960 = vmatprep.mubr.f32.mxu0 0.0
      %3961 = vmatmul.mubr.f32.gmra.mrb[0].mxu0 %v3831
      %v3962 = vpop.f32.mrb[0].mxu0
      %v3963 = vadd.f32 %v2884, %v3962
      %v3964 = vpop.f32.mrb[0].mxu0
      %3965 = vmatprep.mubr.f32.mxu0 0.0
      %3966 = vmatmul.mubr.f32.gmra.mrb[0].mxu0 %v3834
      %v3967 = vpop.f32.mrb[0].mxu0
      %v3968 = vadd.f32 %v2884, %v3967
      %v3969 = vpop.f32.mrb[0].mxu0
      %3970 = vmatprep.mubr.f32.mxu0 0.0
      %3971 = vmatmul.mubr.f32.gmra.mrb[0].mxu0 %v3837
      %v3972 = vpop.f32.mrb[0].mxu0
      %v3973 = vadd.f32 %v2884, %v3972
      %v3974 = vpop.f32.mrb[0].mxu0
      %3975 = vmatprep.mubr.f32.mxu0 0.0
      %3976 = vmatmul.mubr.f32.gmra.mrb[0].mxu0 %v3840
      %v3977 = vpop.f32.mrb[0].mxu0
      %v3978 = vadd.f32 %v2884, %v3977
      %v3979 = vpop.f32.mrb[0].mxu0
      %3980 = vmatprep.mubr.f32.mxu0 0.0
      %3981 = vmatmul.mubr.f32.gmra.mrb[0].mxu0 %v3843
      %v3982 = vpop.f32.mrb[0].mxu0
      %v3983 = vadd.f32 %v2884, %v3982
      %v3984 = vpop.f32.mrb[0].mxu0
      %3985 = vmatprep.mubr.f32.mxu0 0.0
      %3986 = vmatmul.mubr.f32.gmra.mrb[0].mxu0 %v3846
      %v3987 = vpop.f32.mrb[0].mxu0
      %v3988 = vadd.f32 %v2884, %v3987
      %v3989 = vpop.f32.mrb[0].mxu0
      %3990 = vmatprep.mubr.f32.mxu0 0.0
      %3991 = vmatmul.mubr.f32.gmra.mrb[0].mxu0 %v3849
      %v3992 = vpop.f32.mrb[0].mxu0
      %v3993 = vadd.f32 %v2884, %v3992
      %v3994 = vpop.f32.mrb[0].mxu0
      %3995 = vdwg.mxu0
      %v3996 = vadd.f32 %v3918, %v330
      %v3997 = vadd.f32 %v3923, %v331
      %v3998 = vadd.f32 %v3928, %v332
      %v3999 = vadd.f32 %v3933, %v333
      %v4000 = vadd.f32 %v3938, %v334
      %v4001 = vadd.f32 %v3943, %v335
      %v4002 = vadd.f32 %v3948, %v336
      %v4003 = vadd.f32 %v3953, %v337
      %v4004 = vadd.f32 %v3958, %v338
      %v4005 = vadd.f32 %v3963, %v339
      %v4006 = vadd.f32 %v3968, %v340
      %v4007 = vadd.f32 %v3973, %v341
      %v4008 = vadd.f32 %v3978, %v342
      %v4009 = vadd.f32 %v3983, %v343
      %v4010 = vadd.f32 %v3988, %v344
      %v4011 = vadd.f32 %v3993, %v345
      %v4012 = vmax.f32 %v3996, 0.0
      %v4013 = vmax.f32 %v3997, 0.0
      %v4014 = vmax.f32 %v3998, 0.0
      %v4015 = vmax.f32 %v3999, 0.0
      %v4016 = vmax.f32 %v4000, 0.0
      %v4017 = vmax.f32 %v4001, 0.0
      %v4018 = vmax.f32 %v4002, 0.0
      %v4019 = vmax.f32 %v4003, 0.0
      %v4020 = vmax.f32 %v4004, 0.0
      %v4021 = vmax.f32 %v4005, 0.0
      %v4022 = vmax.f32 %v4006, 0.0
      %v4023 = vmax.f32 %v4007, 0.0
      %v4024 = vmax.f32 %v4008, 0.0
      %v4025 = vmax.f32 %v4009, 0.0
      %v4026 = vmax.f32 %v4010, 0.0
      %v4027 = vmax.f32 %v4011, 0.0
      %4028 = vst.msk [vmem:[%s224 + $0x80] sm:$0xff] %vm225, %v4012
      %4029 = vst.msk [vmem:[%s224 + $0x88] sm:$0xff] %vm225, %v4013
      %4030 = vst.msk [vmem:[%s224 + $0x90] sm:$0xff] %vm225, %v4014
      %4031 = vst.msk [vmem:[%s224 + $0x98] sm:$0xff] %vm225, %v4015
      %4032 = vst.msk [vmem:[%s224 + $0xa0] sm:$0xff] %vm225, %v4016
      %4033 = vst.msk [vmem:[%s224 + $0xa8] sm:$0xff] %vm225, %v4017
      %4034 = vst.msk [vmem:[%s224 + $0xb0] sm:$0xff] %vm225, %v4018
      %4035 = vst.msk [vmem:[%s224 + $0xb8] sm:$0xff] %vm225, %v4019
      %4036 = vst.msk [vmem:[%s224 + $0xc0] sm:$0xff] %vm225, %v4020
      %4037 = vst.msk [vmem:[%s224 + $0xc8] sm:$0xff] %vm225, %v4021
      %4038 = vst.msk [vmem:[%s224 + $0xd0] sm:$0xff] %vm225, %v4022
      %4039 = vst.msk [vmem:[%s224 + $0xd8] sm:$0xff] %vm225, %v4023
      %4040 = vst.msk [vmem:[%s224 + $0xe0] sm:$0xff] %vm225, %v4024
      %4041 = vst.msk [vmem:[%s224 + $0xe8] sm:$0xff] %vm225, %v4025
      %4042 = vst.msk [vmem:[%s224 + $0xf0] sm:$0xff] %vm225, %v4026
      %4043 = vst.msk [vmem:[%s224 + $0xf8] sm:$0xff] %vm225, %v4027
      %p4044 = scmp.lt.s32.totalorder %s16, 1
      %s4045 = scalar_select %p4044, %s16, 1
      %s4046 = smul.addr %s4045, 32
      %s4047 = smul.addr %s4046, 8
      %s4048 = scalar_lea.vmem %s5, %s4047
      // Predicated region
      $region41: #{tpu_custom_call.1} parent=39 // pred_check
        %p4049 = pneg %p144
      $region42: #{tpu_custom_call.1} parent=39 // pred_check_branch
        %4051 = sbr.rel (%p4049) target = $region44
      $region43: #{tpu_custom_call.1} parent=39 // pred_region
        _
      $region44: #{tpu_custom_call.1} parent=39 // pred_fallthru
        _
    $region40: #{tpu_custom_call.1} parent=5 // pred_fallthru
      _
    %p4052 = scmp.le.s32.totalorder 2, %s11
    // Predicated region
    $region45: #{tpu_custom_call.1} parent=5 // pred_check
      %p4053 = pneg %p4052
    $region46: #{tpu_custom_call.1} parent=5 // pred_check_branch
      %4055 = sbr.rel (%p4053) target = $region48
    $region47: #{tpu_custom_call.1} parent=5 // pred_region
      %s4056 = ssub.s32 %s11, 2
      // Predicated region
      $region49: #{tpu_custom_call.1} parent=47 // pred_check
        %p4057 = pneg %p150
      $region50: #{tpu_custom_call.1} parent=47 // pred_check_branch
        %4059 = sbr.rel (%p4057) target = $region52
      $region51: #{tpu_custom_call.1} parent=47 // pred_region
        %p4060 = scmp.lt.s32.totalorder %s17, 1
        %s4061 = scalar_select %p4060, %s17, 1
        %s4062 = smul.addr %s4061, 32
        %s4063 = smul.addr %s4062, 8
        %s4064 = scalar_lea.vmem %s5, %s4063
      $region52: #{tpu_custom_call.1} parent=47 // pred_fallthru
        _
    $region48: #{tpu_custom_call.1} parent=5 // pred_fallthru
      _
  $region6: #{tpu_custom_call.1} parent=0 // loop_footer
    %s15 = sadd.s32 1, %s11
  $region7: #{tpu_custom_call.1} parent=0 // loop_footer_branch
    %10 = sbr.rel target = $region3
  $region8: #{tpu_custom_call.1} parent=0 // loop_exit
    _

</llo_original>
